<compile_context>
chip_gen: v6e
topology: v6e:2x2x1
jax: 0.10.0
libtpu: 0.0.40
codegen_flags: <defaults>
</compile_context>

<pallas_src>
import functools

import jax
import jax.numpy as jnp
from jax.experimental import pallas as pl
from jax.experimental.pallas import tpu as pltpu


# ----------------------------------------------------------------------------
# Pallas kernels
# ----------------------------------------------------------------------------
def _encoder_trunk_kernel(x_ref, w0_ref, s0_ref, t0_ref,
                          wres_ref, sres_ref, tres_ref,
                          o_ref,
                          pad0_ref, pad_ref,
                          *, H, W, C, Hd, num_blocks):
    """Fused conv trunk: conv0 + BN + ReLU, then `num_blocks` residual blocks.

    x_ref    : (B, H, W, C)              input image (NHWC)
    w0_ref   : (9*C, Hd)                 conv0 weight, im2col layout
    s0/t0    : (1, Hd)                   folded eval-mode BN scale / shift
    wres_ref : (2*num_blocks, 9*Hd, Hd)  stacked residual conv weights
    sres/tres: (2*num_blocks, 1, Hd)     stacked folded BN scale / shift
    o_ref    : (B*H*W, Hd)               final trunk activation (NHWC row order)
    pad0_ref : (B, H+2, W+2, C)   VMEM   zero-halo scratch for conv0
    pad_ref  : (B, H+2, W+2, Hd)  VMEM   zero-halo scratch for residual convs
    """
    B = x_ref.shape[0]
    M = B * H * W

    # Zero the halo borders once; interiors are fully overwritten before use.
    pad0_ref[...] = jnp.zeros(pad0_ref.shape, pad0_ref.dtype)
    pad_ref[...] = jnp.zeros(pad_ref.shape, pad_ref.dtype)

    def im2col(src_ref, cin):
        # padded (B, H+2, W+2, cin) -> (B*H*W, 9*cin) patch matrix.
        xp = src_ref[...]
        cols = []
        for dy in range(3):
            for dx in range(3):
                cols.append(xp[:, dy:dy + H, dx:dx + W, :].reshape(M, cin))
        return jnp.concatenate(cols, axis=-1)

    def conv_bn_relu(src_ref, cin, w, scale, shift, residual=None):
        # One MXU matmul per conv: (M, 9*cin) @ (9*cin, Hd), f32 accumulation.
        y = jnp.dot(im2col(src_ref, cin), w, preferred_element_type=jnp.float32)
        y = y * scale + shift                       # folded eval-mode batchnorm
        if residual is not None:
            y = y + residual
        return jnp.maximum(y, 0.0)

    # Initial conv -> BN -> ReLU.
    pad0_ref[:, 1:H + 1, 1:W + 1, :] = x_ref[...]
    x = conv_bn_relu(pad0_ref, C, w0_ref[...], s0_ref[...], t0_ref[...])

    # Residual blocks; activations stay resident in VMEM / vregs.
    for i in range(num_blocks):
        pad_ref[:, 1:H + 1, 1:W + 1, :] = x.reshape(B, H, W, Hd)
        h = conv_bn_relu(pad_ref, Hd, wres_ref[2 * i],
                         sres_ref[2 * i], tres_ref[2 * i])
        pad_ref[:, 1:H + 1, 1:W + 1, :] = h.reshape(B, H, W, Hd)
        x = conv_bn_relu(pad_ref, Hd, wres_ref[2 * i + 1],
                         sres_ref[2 * i + 1], tres_ref[2 * i + 1],
                         residual=x)

    o_ref[...] = x.astype(o_ref.dtype)


def _linear_kernel(x_ref, w_ref, b_ref, o_ref):
    """o = x @ w + b   (x: (B, F), w: (F, D), b: (1, D))."""
    o_ref[...] = (jnp.dot(x_ref[...], w_ref[...],
                          preferred_element_type=jnp.float32)
                  + b_ref[...]).astype(o_ref.dtype)


# ----------------------------------------------------------------------------
# Forward pass
# ----------------------------------------------------------------------------
def conv_encoder_forward(obs_nchw, prep, *, observation_shape, hidden_dim,
                         num_blocks):
    C, H, W = observation_shape
    Hd = hidden_dim
    B = obs_nchw.shape[0]
    M = B * H * W

    # NCHW (torch) -> NHWC (kernel layout): single tiny boundary transpose.
    x = jnp.transpose(obs_nchw, (0, 2, 3, 1)).astype(jnp.float32)

    trunk_flops = 2 * M * 9 * Hd * (C + 2 * num_blocks * Hd)
    trunk_bytes = 4 * (M * C + 9 * C * Hd + 2 * num_blocks * 9 * Hd * Hd
                       + (1 + 2 * num_blocks) * 2 * Hd + M * Hd)
    trunk = pl.pallas_call(
        functools.partial(_encoder_trunk_kernel, H=H, W=W, C=C, Hd=Hd,
                          num_blocks=num_blocks),
        out_shape=jax.ShapeDtypeStruct((M, Hd), jnp.float32),
        scratch_shapes=[
            pltpu.VMEM((B, H + 2, W + 2, C), jnp.float32),
            pltpu.VMEM((B, H + 2, W + 2, Hd), jnp.float32),
        ],
        cost_estimate=pl.CostEstimate(flops=trunk_flops, transcendentals=0,
                                      bytes_accessed=trunk_bytes),
    )(x, prep["w0"], prep["s0"], prep["t0"],
      prep["wres"], prep["sres"], prep["tres"])

    # (B*H*W, Hd) -> (B, H*W*Hd) is a free row-major view change in XLA; the fc
    # weight rows were permuted at prep time so this matches torch's NCHW
    # x.view(B, -1) @ fc_w numerics exactly.
    flat = trunk.reshape(B, H * W * Hd)

    fc_flops = 2 * B * (H * W * Hd) * Hd
    fc_bytes = 4 * (B * H * W * Hd + H * W * Hd * Hd + Hd + B * Hd)
    return pl.pallas_call(
        _linear_kernel,
        out_shape=jax.ShapeDtypeStruct((B, Hd), jnp.float32),
        cost_estimate=pl.CostEstimate(flops=fc_flops, transcendentals=0,
                                      bytes_accessed=fc_bytes),
    )(flat, prep["fcw"], prep["fcb"])


# ----------------------------------------------------------------------------
# Parameters: torch-like init + one-time kernel-layout preparation
# ----------------------------------------------------------------------------
def init_conv_encoder_params(key, observation_shape, hidden_dim, num_blocks):
    C, H, W = observation_shape
    params = {}
    n_conv = 1 + 2 * num_blocks
    keys = iter(jax.random.split(key, 3 * n_conv + 2))

    def conv_block(cin, cout):
        w = 0.1 * jax.random.normal(next(keys), (3, 3, cin, cout), jnp.float32)
        # Eval-mode batchnorm folded into scale/shift (running_mean=0,
        # running_var=1 here, so scale=gamma, shift=beta).
        gamma = 1.0 + 0.1 * jax.random.normal(next(keys), (cout,), jnp.float32)
        beta = 0.1 * jax.random.normal(next(keys), (cout,), jnp.float32)
        return w, gamma, beta

    params["conv0"] = conv_block(C, hidden_dim)
    for i in range(num_blocks):
        params[f"res{i}_a"] = conv_block(hidden_dim, hidden_dim)
        params[f"res{i}_b"] = conv_block(hidden_dim, hidden_dim)

    feat = hidden_dim * H * W                       # NCHW flatten order (torch)
    params["fc_w"] = 0.05 * jax.random.normal(next(keys), (feat, hidden_dim),
                                              jnp.float32)
    params["fc_b"] = 0.05 * jax.random.normal(next(keys), (hidden_dim,),
                                              jnp.float32)
    return params


def prepare_encoder_params(params, observation_shape, hidden_dim, num_blocks):
    """One-time layout prep: im2col GEMM weights, stacked residual params, and
    fc weight rows permuted from NCHW to NHWC flatten order."""
    C, H, W = observation_shape
    Hd = hidden_dim

    w0, s0, t0 = params["conv0"]
    prep = {
        "w0": w0.reshape(9 * C, Hd),                # (ky,kx,cin) row-major
        "s0": s0.reshape(1, Hd),
        "t0": t0.reshape(1, Hd),
    }

    wres, sres, tres = [], [], []
    for i in range(num_blocks):
        for tag in ("a", "b"):
            w, s, t = params[f"res{i}_{tag}"]
            wres.append(w.reshape(9 * Hd, Hd))
            sres.append(s.reshape(1, Hd))
            tres.append(t.reshape(1, Hd))
    if num_blocks > 0:
        prep["wres"] = jnp.stack(wres)              # (2*nb, 9*Hd, Hd)
        prep["sres"] = jnp.stack(sres)              # (2*nb, 1, Hd)
        prep["tres"] = jnp.stack(tres)
    else:                                           # keep shapes valid
        prep["wres"] = jnp.zeros((1, 9 * Hd, Hd), jnp.float32)
        prep["sres"] = jnp.zeros((1, 1, Hd), jnp.float32)
        prep["tres"] = jnp.zeros((1, 1, Hd), jnp.float32)

    # fc_w rows are indexed by torch's NCHW flatten (c,h,w); permute to the
    # kernel's NHWC flatten (h,w,c).  Free one-time change, identical numerics.
    prep["fcw"] = (params["fc_w"]
                   .reshape(Hd, H, W, Hd)
                   .transpose(1, 2, 0, 3)
                   .reshape(H * W * Hd, Hd))
    prep["fcb"] = params["fc_b"].reshape(1, Hd)
    return prep


# ----------------------------------------------------------------------------
# Pure-JAX reference (for correctness check)
# ----------------------------------------------------------------------------
def _ref_conv3x3_bn(x, w, scale, shift, residual=None, apply_relu=True):
    y = jax.lax.conv_general_dilated(
        x, w, window_strides=(1, 1), padding="SAME",
        dimension_numbers=("NHWC", "HWIO", "NHWC"))
    y = y * scale + shift
    if residual is not None:
        y = y + residual
    if apply_relu:
        y = jnp.maximum(y, 0.0)
    return y


def _ref_forward(obs_nchw, params, num_blocks):
    x = jnp.transpose(obs_nchw, (0, 2, 3, 1)).astype(jnp.float32)
    w, s, t = params["conv0"]
    x = _ref_conv3x3_bn(x, w, s, t, apply_relu=True)
    for i in range(num_blocks):
        w1, s1, t1 = params[f"res{i}_a"]
        w2, s2, t2 = params[f"res{i}_b"]
        h = _ref_conv3x3_bn(x, w1, s1, t1, apply_relu=True)
        x = _ref_conv3x3_bn(h, w2, s2, t2, residual=x, apply_relu=True)
    x_nchw = jnp.transpose(x, (0, 3, 1, 2))
    flat = x_nchw.reshape(x_nchw.shape[0], -1)
    return flat @ params["fc_w"] + params["fc_b"]


# ----------------------------------------------------------------------------
if __name__ == "__main__":
    key = jax.random.PRNGKey(0)
    k_obs, k_params = jax.random.split(key)

    observation_shape = (4, 8, 8)      # (channels, height, width)
    hidden_dim = 32
    num_blocks = 2
    batch = 2

    obs = jax.random.normal(
        k_obs, (batch,) + observation_shape, dtype=jnp.float32)   # NCHW
    params = init_conv_encoder_params(
        k_params, observation_shape, hidden_dim, num_blocks)
    prep = prepare_encoder_params(
        params, observation_shape, hidden_dim, num_blocks)

    fwd = jax.jit(functools.partial(
        conv_encoder_forward, observation_shape=observation_shape,
        hidden_dim=hidden_dim, num_blocks=num_blocks))

    out = jax.block_until_ready(fwd(obs, prep))
    ref = jax.block_until_ready(_ref_forward(obs, params, num_blocks))

    assert out.shape == (batch, hidden_dim)
    assert jnp.allclose(out, ref, rtol=1e-4, atol=1e-4), \
        f"mismatch: max abs err {jnp.max(jnp.abs(out - ref))}"

    print("KERNEL_OK")
</pallas_src>

<mosaic_0001>
module attributes {stable_mosaic.version = 11 : i64} {
  func.func @_encoder_trunk_kernel(%arg0: memref<2x8x8x4xf32, #tpu.memory_space<vmem>>, %arg1: memref<36x32xf32, #tpu.memory_space<vmem>>, %arg2: memref<1x32xf32, #tpu.memory_space<vmem>>, %arg3: memref<1x32xf32, #tpu.memory_space<vmem>>, %arg4: memref<4x288x32xf32, #tpu.memory_space<vmem>>, %arg5: memref<4x1x32xf32, #tpu.memory_space<vmem>>, %arg6: memref<4x1x32xf32, #tpu.memory_space<vmem>>, %arg7: memref<128x32xf32, #tpu.memory_space<vmem>>, %arg8: memref<2x10x10x4xf32, #tpu.memory_space<vmem>>, %arg9: memref<2x10x10x32xf32, #tpu.memory_space<vmem>>) attributes {dimension_semantics = [], scalar_prefetch = 0 : i64, scratch_operands = 2 : i64, tpu.core_type = #tpu.core_type<tc>} {
    %cst = arith.constant 0.000000e+00 : f32
    %0 = vector.broadcast %cst : f32 to vector<2x10x10x4xf32>
    %c0 = arith.constant 0 : index
    %c0_0 = arith.constant 0 : index
    %c0_1 = arith.constant 0 : index
    %c0_2 = arith.constant 0 : index
    %1 = vector.load %arg8[%c0, %c0_0, %c0_1, %c0_2] : memref<2x10x10x4xf32, #tpu.memory_space<vmem>>, vector<2x10x10x4xf32>
    tpu.vector_store %arg8[%c0, %c0_0, %c0_1, %c0_2], %0 {strides = array<i32>} : memref<2x10x10x4xf32, #tpu.memory_space<vmem>>, vector<2x10x10x4xf32>,
    %cst_3 = arith.constant 0.000000e+00 : f32
    %2 = vector.broadcast %cst_3 : f32 to vector<2x10x10x32xf32>
    %c0_4 = arith.constant 0 : index
    %c0_5 = arith.constant 0 : index
    %c0_6 = arith.constant 0 : index
    %c0_7 = arith.constant 0 : index
    %3 = vector.load %arg9[%c0_4, %c0_5, %c0_6, %c0_7] : memref<2x10x10x32xf32, #tpu.memory_space<vmem>>, vector<2x10x10x32xf32>
    tpu.vector_store %arg9[%c0_4, %c0_5, %c0_6, %c0_7], %2 {strides = array<i32>} : memref<2x10x10x32xf32, #tpu.memory_space<vmem>>, vector<2x10x10x32xf32>,
    %c0_8 = arith.constant 0 : index
    %c0_9 = arith.constant 0 : index
    %c0_10 = arith.constant 0 : index
    %c0_11 = arith.constant 0 : index
    %4 = vector.load %arg0[%c0_8, %c0_9, %c0_10, %c0_11] : memref<2x8x8x4xf32, #tpu.memory_space<vmem>>, vector<2x8x8x4xf32>
    %c0_12 = arith.constant 0 : index
    %c1 = arith.constant 1 : index
    %c1_13 = arith.constant 1 : index
    %c0_14 = arith.constant 0 : index
    %5 = vector.load %arg8[%c0_12, %c1, %c1_13, %c0_14] : memref<2x10x10x4xf32, #tpu.memory_space<vmem>>, vector<2x8x8x4xf32>
    tpu.vector_store %arg8[%c0_12, %c1, %c1_13, %c0_14], %4 {strides = array<i32>} : memref<2x10x10x4xf32, #tpu.memory_space<vmem>>, vector<2x8x8x4xf32>,
    %c0_15 = arith.constant 0 : index
    %c0_16 = arith.constant 0 : index
    %6 = vector.load %arg1[%c0_15, %c0_16] : memref<36x32xf32, #tpu.memory_space<vmem>>, vector<36x32xf32>
    %c0_17 = arith.constant 0 : index
    %c0_18 = arith.constant 0 : index
    %7 = vector.load %arg2[%c0_17, %c0_18] : memref<1x32xf32, #tpu.memory_space<vmem>>, vector<1x32xf32>
    %c0_19 = arith.constant 0 : index
    %c0_20 = arith.constant 0 : index
    %8 = vector.load %arg3[%c0_19, %c0_20] : memref<1x32xf32, #tpu.memory_space<vmem>>, vector<1x32xf32>
    %c0_21 = arith.constant 0 : index
    %c0_22 = arith.constant 0 : index
    %c0_23 = arith.constant 0 : index
    %c0_24 = arith.constant 0 : index
    %9 = vector.load %arg8[%c0_21, %c0_22, %c0_23, %c0_24] : memref<2x10x10x4xf32, #tpu.memory_space<vmem>>, vector<2x10x10x4xf32>
    %10 = vector.extract_strided_slice %9 {offsets = [0, 0, 0, 0], sizes = [2, 8, 8, 4], strides = [1, 1, 1, 1]} : vector<2x10x10x4xf32> to vector<2x8x8x4xf32>
    %11 = vector.shape_cast %10 : vector<2x8x8x4xf32> to vector<128x4xf32>
    %12 = vector.extract_strided_slice %9 {offsets = [0, 0, 1, 0], sizes = [2, 8, 8, 4], strides = [1, 1, 1, 1]} : vector<2x10x10x4xf32> to vector<2x8x8x4xf32>
    %13 = vector.shape_cast %12 : vector<2x8x8x4xf32> to vector<128x4xf32>
    %14 = vector.extract_strided_slice %9 {offsets = [0, 0, 2, 0], sizes = [2, 8, 8, 4], strides = [1, 1, 1, 1]} : vector<2x10x10x4xf32> to vector<2x8x8x4xf32>
    %15 = vector.shape_cast %14 : vector<2x8x8x4xf32> to vector<128x4xf32>
    %16 = vector.extract_strided_slice %9 {offsets = [0, 1, 0, 0], sizes = [2, 8, 8, 4], strides = [1, 1, 1, 1]} : vector<2x10x10x4xf32> to vector<2x8x8x4xf32>
    %17 = vector.shape_cast %16 : vector<2x8x8x4xf32> to vector<128x4xf32>
    %18 = vector.extract_strided_slice %9 {offsets = [0, 1, 1, 0], sizes = [2, 8, 8, 4], strides = [1, 1, 1, 1]} : vector<2x10x10x4xf32> to vector<2x8x8x4xf32>
    %19 = vector.shape_cast %18 : vector<2x8x8x4xf32> to vector<128x4xf32>
    %20 = vector.extract_strided_slice %9 {offsets = [0, 1, 2, 0], sizes = [2, 8, 8, 4], strides = [1, 1, 1, 1]} : vector<2x10x10x4xf32> to vector<2x8x8x4xf32>
    %21 = vector.shape_cast %20 : vector<2x8x8x4xf32> to vector<128x4xf32>
    %22 = vector.extract_strided_slice %9 {offsets = [0, 2, 0, 0], sizes = [2, 8, 8, 4], strides = [1, 1, 1, 1]} : vector<2x10x10x4xf32> to vector<2x8x8x4xf32>
    %23 = vector.shape_cast %22 : vector<2x8x8x4xf32> to vector<128x4xf32>
    %24 = vector.extract_strided_slice %9 {offsets = [0, 2, 1, 0], sizes = [2, 8, 8, 4], strides = [1, 1, 1, 1]} : vector<2x10x10x4xf32> to vector<2x8x8x4xf32>
    %25 = vector.shape_cast %24 : vector<2x8x8x4xf32> to vector<128x4xf32>
    %26 = vector.extract_strided_slice %9 {offsets = [0, 2, 2, 0], sizes = [2, 8, 8, 4], strides = [1, 1, 1, 1]} : vector<2x10x10x4xf32> to vector<2x8x8x4xf32>
    %27 = vector.shape_cast %26 : vector<2x8x8x4xf32> to vector<128x4xf32>
    %28 = tpu.concatenate %11, %13, %15, %17, %19, %21, %23, %25, %27 in 1 : vector<128x4xf32>, vector<128x4xf32>, vector<128x4xf32>, vector<128x4xf32>, vector<128x4xf32>, vector<128x4xf32>, vector<128x4xf32>, vector<128x4xf32>, vector<128x4xf32> -> vector<128x36xf32>
    %cst_25 = arith.constant dense<0.000000e+00> : vector<128x32xf32>
    %29 = tpu.matmul %28, %6, %cst_25 {dimension_numbers = #tpu.dot_dimension_numbers<[1], [0], [0], [1], [0, 0, 1, 1], [], []>} : vector<128x36xf32>, vector<36x32xf32>, vector<128x32xf32> -> vector<128x32xf32>
    %30 = vector.broadcast %7 : vector<1x32xf32> to vector<128x32xf32>
    %31 = arith.mulf %29, %30 : vector<128x32xf32>
    %32 = vector.broadcast %8 : vector<1x32xf32> to vector<128x32xf32>
    %33 = arith.addf %31, %32 : vector<128x32xf32>
    %cst_26 = arith.constant 0.000000e+00 : f32
    %34 = vector.broadcast %cst_26 : f32 to vector<128x32xf32>
    %35 = arith.maximumf %33, %34 : vector<128x32xf32>
    %36 = vector.shape_cast %35 : vector<128x32xf32> to vector<2x8x8x32xf32>
    %c0_27 = arith.constant 0 : index
    %c1_28 = arith.constant 1 : index
    %c1_29 = arith.constant 1 : index
    %c0_30 = arith.constant 0 : index
    %37 = vector.load %arg9[%c0_27, %c1_28, %c1_29, %c0_30] : memref<2x10x10x32xf32, #tpu.memory_space<vmem>>, vector<2x8x8x32xf32>
    tpu.vector_store %arg9[%c0_27, %c1_28, %c1_29, %c0_30], %36 {strides = array<i32>} : memref<2x10x10x32xf32, #tpu.memory_space<vmem>>, vector<2x8x8x32xf32>,
    %c0_31 = arith.constant 0 : index
    %c0_32 = arith.constant 0 : index
    %c0_33 = arith.constant 0 : index
    %38 = vector.load %arg4[%c0_31, %c0_32, %c0_33] : memref<4x288x32xf32, #tpu.memory_space<vmem>>, vector<1x288x32xf32>
    %39 = vector.shape_cast %38 : vector<1x288x32xf32> to vector<288x32xf32>
    %c0_34 = arith.constant 0 : index
    %c0_35 = arith.constant 0 : index
    %c0_36 = arith.constant 0 : index
    %40 = vector.load %arg5[%c0_34, %c0_35, %c0_36] : memref<4x1x32xf32, #tpu.memory_space<vmem>>, vector<1x1x32xf32>
    %41 = vector.shape_cast %40 : vector<1x1x32xf32> to vector<1x32xf32>
    %c0_37 = arith.constant 0 : index
    %c0_38 = arith.constant 0 : index
    %c0_39 = arith.constant 0 : index
    %42 = vector.load %arg6[%c0_37, %c0_38, %c0_39] : memref<4x1x32xf32, #tpu.memory_space<vmem>>, vector<1x1x32xf32>
    %43 = vector.shape_cast %42 : vector<1x1x32xf32> to vector<1x32xf32>
    %c0_40 = arith.constant 0 : index
    %c0_41 = arith.constant 0 : index
    %c0_42 = arith.constant 0 : index
    %c0_43 = arith.constant 0 : index
    %44 = vector.load %arg9[%c0_40, %c0_41, %c0_42, %c0_43] : memref<2x10x10x32xf32, #tpu.memory_space<vmem>>, vector<2x10x10x32xf32>
    %45 = vector.extract_strided_slice %44 {offsets = [0, 0, 0, 0], sizes = [2, 8, 8, 32], strides = [1, 1, 1, 1]} : vector<2x10x10x32xf32> to vector<2x8x8x32xf32>
    %46 = vector.shape_cast %45 : vector<2x8x8x32xf32> to vector<128x32xf32>
    %47 = vector.extract_strided_slice %44 {offsets = [0, 0, 1, 0], sizes = [2, 8, 8, 32], strides = [1, 1, 1, 1]} : vector<2x10x10x32xf32> to vector<2x8x8x32xf32>
    %48 = vector.shape_cast %47 : vector<2x8x8x32xf32> to vector<128x32xf32>
    %49 = vector.extract_strided_slice %44 {offsets = [0, 0, 2, 0], sizes = [2, 8, 8, 32], strides = [1, 1, 1, 1]} : vector<2x10x10x32xf32> to vector<2x8x8x32xf32>
    %50 = vector.shape_cast %49 : vector<2x8x8x32xf32> to vector<128x32xf32>
    %51 = vector.extract_strided_slice %44 {offsets = [0, 1, 0, 0], sizes = [2, 8, 8, 32], strides = [1, 1, 1, 1]} : vector<2x10x10x32xf32> to vector<2x8x8x32xf32>
    %52 = vector.shape_cast %51 : vector<2x8x8x32xf32> to vector<128x32xf32>
    %53 = vector.extract_strided_slice %44 {offsets = [0, 1, 1, 0], sizes = [2, 8, 8, 32], strides = [1, 1, 1, 1]} : vector<2x10x10x32xf32> to vector<2x8x8x32xf32>
    %54 = vector.shape_cast %53 : vector<2x8x8x32xf32> to vector<128x32xf32>
    %55 = vector.extract_strided_slice %44 {offsets = [0, 1, 2, 0], sizes = [2, 8, 8, 32], strides = [1, 1, 1, 1]} : vector<2x10x10x32xf32> to vector<2x8x8x32xf32>
    %56 = vector.shape_cast %55 : vector<2x8x8x32xf32> to vector<128x32xf32>
    %57 = vector.extract_strided_slice %44 {offsets = [0, 2, 0, 0], sizes = [2, 8, 8, 32], strides = [1, 1, 1, 1]} : vector<2x10x10x32xf32> to vector<2x8x8x32xf32>
    %58 = vector.shape_cast %57 : vector<2x8x8x32xf32> to vector<128x32xf32>
    %59 = vector.extract_strided_slice %44 {offsets = [0, 2, 1, 0], sizes = [2, 8, 8, 32], strides = [1, 1, 1, 1]} : vector<2x10x10x32xf32> to vector<2x8x8x32xf32>
    %60 = vector.shape_cast %59 : vector<2x8x8x32xf32> to vector<128x32xf32>
    %61 = vector.extract_strided_slice %44 {offsets = [0, 2, 2, 0], sizes = [2, 8, 8, 32], strides = [1, 1, 1, 1]} : vector<2x10x10x32xf32> to vector<2x8x8x32xf32>
    %62 = vector.shape_cast %61 : vector<2x8x8x32xf32> to vector<128x32xf32>
    %63 = tpu.concatenate %46, %48, %50, %52, %54, %56, %58, %60, %62 in 1 : vector<128x32xf32>, vector<128x32xf32>, vector<128x32xf32>, vector<128x32xf32>, vector<128x32xf32>, vector<128x32xf32>, vector<128x32xf32>, vector<128x32xf32>, vector<128x32xf32> -> vector<128x288xf32>
    %cst_44 = arith.constant dense<0.000000e+00> : vector<128x32xf32>
    %64 = tpu.matmul %63, %39, %cst_44 {dimension_numbers = #tpu.dot_dimension_numbers<[1], [0], [0], [1], [0, 0, 1, 1], [], []>} : vector<128x288xf32>, vector<288x32xf32>, vector<128x32xf32> -> vector<128x32xf32>
    %65 = vector.broadcast %41 : vector<1x32xf32> to vector<128x32xf32>
    %66 = arith.mulf %64, %65 : vector<128x32xf32>
    %67 = vector.broadcast %43 : vector<1x32xf32> to vector<128x32xf32>
    %68 = arith.addf %66, %67 : vector<128x32xf32>
    %cst_45 = arith.constant 0.000000e+00 : f32
    %69 = vector.broadcast %cst_45 : f32 to vector<128x32xf32>
    %70 = arith.maximumf %68, %69 : vector<128x32xf32>
    %71 = vector.shape_cast %70 : vector<128x32xf32> to vector<2x8x8x32xf32>
    %c0_46 = arith.constant 0 : index
    %c1_47 = arith.constant 1 : index
    %c1_48 = arith.constant 1 : index
    %c0_49 = arith.constant 0 : index
    %72 = vector.load %arg9[%c0_46, %c1_47, %c1_48, %c0_49] : memref<2x10x10x32xf32, #tpu.memory_space<vmem>>, vector<2x8x8x32xf32>
    tpu.vector_store %arg9[%c0_46, %c1_47, %c1_48, %c0_49], %71 {strides = array<i32>} : memref<2x10x10x32xf32, #tpu.memory_space<vmem>>, vector<2x8x8x32xf32>,
    %c1_50 = arith.constant 1 : index
    %c0_51 = arith.constant 0 : index
    %c0_52 = arith.constant 0 : index
    %73 = vector.load %arg4[%c1_50, %c0_51, %c0_52] : memref<4x288x32xf32, #tpu.memory_space<vmem>>, vector<1x288x32xf32>
    %74 = vector.shape_cast %73 : vector<1x288x32xf32> to vector<288x32xf32>
    %c1_53 = arith.constant 1 : index
    %c0_54 = arith.constant 0 : index
    %c0_55 = arith.constant 0 : index
    %75 = vector.load %arg5[%c1_53, %c0_54, %c0_55] : memref<4x1x32xf32, #tpu.memory_space<vmem>>, vector<1x1x32xf32>
    %76 = vector.shape_cast %75 : vector<1x1x32xf32> to vector<1x32xf32>
    %c1_56 = arith.constant 1 : index
    %c0_57 = arith.constant 0 : index
    %c0_58 = arith.constant 0 : index
    %77 = vector.load %arg6[%c1_56, %c0_57, %c0_58] : memref<4x1x32xf32, #tpu.memory_space<vmem>>, vector<1x1x32xf32>
    %78 = vector.shape_cast %77 : vector<1x1x32xf32> to vector<1x32xf32>
    %c0_59 = arith.constant 0 : index
    %c0_60 = arith.constant 0 : index
    %c0_61 = arith.constant 0 : index
    %c0_62 = arith.constant 0 : index
    %79 = vector.load %arg9[%c0_59, %c0_60, %c0_61, %c0_62] : memref<2x10x10x32xf32, #tpu.memory_space<vmem>>, vector<2x10x10x32xf32>
    %80 = vector.extract_strided_slice %79 {offsets = [0, 0, 0, 0], sizes = [2, 8, 8, 32], strides = [1, 1, 1, 1]} : vector<2x10x10x32xf32> to vector<2x8x8x32xf32>
    %81 = vector.shape_cast %80 : vector<2x8x8x32xf32> to vector<128x32xf32>
    %82 = vector.extract_strided_slice %79 {offsets = [0, 0, 1, 0], sizes = [2, 8, 8, 32], strides = [1, 1, 1, 1]} : vector<2x10x10x32xf32> to vector<2x8x8x32xf32>
    %83 = vector.shape_cast %82 : vector<2x8x8x32xf32> to vector<128x32xf32>
    %84 = vector.extract_strided_slice %79 {offsets = [0, 0, 2, 0], sizes = [2, 8, 8, 32], strides = [1, 1, 1, 1]} : vector<2x10x10x32xf32> to vector<2x8x8x32xf32>
    %85 = vector.shape_cast %84 : vector<2x8x8x32xf32> to vector<128x32xf32>
    %86 = vector.extract_strided_slice %79 {offsets = [0, 1, 0, 0], sizes = [2, 8, 8, 32], strides = [1, 1, 1, 1]} : vector<2x10x10x32xf32> to vector<2x8x8x32xf32>
    %87 = vector.shape_cast %86 : vector<2x8x8x32xf32> to vector<128x32xf32>
    %88 = vector.extract_strided_slice %79 {offsets = [0, 1, 1, 0], sizes = [2, 8, 8, 32], strides = [1, 1, 1, 1]} : vector<2x10x10x32xf32> to vector<2x8x8x32xf32>
    %89 = vector.shape_cast %88 : vector<2x8x8x32xf32> to vector<128x32xf32>
    %90 = vector.extract_strided_slice %79 {offsets = [0, 1, 2, 0], sizes = [2, 8, 8, 32], strides = [1, 1, 1, 1]} : vector<2x10x10x32xf32> to vector<2x8x8x32xf32>
    %91 = vector.shape_cast %90 : vector<2x8x8x32xf32> to vector<128x32xf32>
    %92 = vector.extract_strided_slice %79 {offsets = [0, 2, 0, 0], sizes = [2, 8, 8, 32], strides = [1, 1, 1, 1]} : vector<2x10x10x32xf32> to vector<2x8x8x32xf32>
    %93 = vector.shape_cast %92 : vector<2x8x8x32xf32> to vector<128x32xf32>
    %94 = vector.extract_strided_slice %79 {offsets = [0, 2, 1, 0], sizes = [2, 8, 8, 32], strides = [1, 1, 1, 1]} : vector<2x10x10x32xf32> to vector<2x8x8x32xf32>
    %95 = vector.shape_cast %94 : vector<2x8x8x32xf32> to vector<128x32xf32>
    %96 = vector.extract_strided_slice %79 {offsets = [0, 2, 2, 0], sizes = [2, 8, 8, 32], strides = [1, 1, 1, 1]} : vector<2x10x10x32xf32> to vector<2x8x8x32xf32>
    %97 = vector.shape_cast %96 : vector<2x8x8x32xf32> to vector<128x32xf32>
    %98 = tpu.concatenate %81, %83, %85, %87, %89, %91, %93, %95, %97 in 1 : vector<128x32xf32>, vector<128x32xf32>, vector<128x32xf32>, vector<128x32xf32>, vector<128x32xf32>, vector<128x32xf32>, vector<128x32xf32>, vector<128x32xf32>, vector<128x32xf32> -> vector<128x288xf32>
    %cst_63 = arith.constant dense<0.000000e+00> : vector<128x32xf32>
    %99 = tpu.matmul %98, %74, %cst_63 {dimension_numbers = #tpu.dot_dimension_numbers<[1], [0], [0], [1], [0, 0, 1, 1], [], []>} : vector<128x288xf32>, vector<288x32xf32>, vector<128x32xf32> -> vector<128x32xf32>
    %100 = vector.broadcast %76 : vector<1x32xf32> to vector<128x32xf32>
    %101 = arith.mulf %99, %100 : vector<128x32xf32>
    %102 = vector.broadcast %78 : vector<1x32xf32> to vector<128x32xf32>
    %103 = arith.addf %101, %102 : vector<128x32xf32>
    %104 = arith.addf %103, %35 : vector<128x32xf32>
    %cst_64 = arith.constant 0.000000e+00 : f32
    %105 = vector.broadcast %cst_64 : f32 to vector<128x32xf32>
    %106 = arith.maximumf %104, %105 : vector<128x32xf32>
    %107 = vector.shape_cast %106 : vector<128x32xf32> to vector<2x8x8x32xf32>
    %c0_65 = arith.constant 0 : index
    %c1_66 = arith.constant 1 : index
    %c1_67 = arith.constant 1 : index
    %c0_68 = arith.constant 0 : index
    %108 = vector.load %arg9[%c0_65, %c1_66, %c1_67, %c0_68] : memref<2x10x10x32xf32, #tpu.memory_space<vmem>>, vector<2x8x8x32xf32>
    tpu.vector_store %arg9[%c0_65, %c1_66, %c1_67, %c0_68], %107 {strides = array<i32>} : memref<2x10x10x32xf32, #tpu.memory_space<vmem>>, vector<2x8x8x32xf32>,
    %c2 = arith.constant 2 : index
    %c0_69 = arith.constant 0 : index
    %c0_70 = arith.constant 0 : index
    %109 = vector.load %arg4[%c2, %c0_69, %c0_70] : memref<4x288x32xf32, #tpu.memory_space<vmem>>, vector<1x288x32xf32>
    %110 = vector.shape_cast %109 : vector<1x288x32xf32> to vector<288x32xf32>
    %c2_71 = arith.constant 2 : index
    %c0_72 = arith.constant 0 : index
    %c0_73 = arith.constant 0 : index
    %111 = vector.load %arg5[%c2_71, %c0_72, %c0_73] : memref<4x1x32xf32, #tpu.memory_space<vmem>>, vector<1x1x32xf32>
    %112 = vector.shape_cast %111 : vector<1x1x32xf32> to vector<1x32xf32>
    %c2_74 = arith.constant 2 : index
    %c0_75 = arith.constant 0 : index
    %c0_76 = arith.constant 0 : index
    %113 = vector.load %arg6[%c2_74, %c0_75, %c0_76] : memref<4x1x32xf32, #tpu.memory_space<vmem>>, vector<1x1x32xf32>
    %114 = vector.shape_cast %113 : vector<1x1x32xf32> to vector<1x32xf32>
    %c0_77 = arith.constant 0 : index
    %c0_78 = arith.constant 0 : index
    %c0_79 = arith.constant 0 : index
    %c0_80 = arith.constant 0 : index
    %115 = vector.load %arg9[%c0_77, %c0_78, %c0_79, %c0_80] : memref<2x10x10x32xf32, #tpu.memory_space<vmem>>, vector<2x10x10x32xf32>
    %116 = vector.extract_strided_slice %115 {offsets = [0, 0, 0, 0], sizes = [2, 8, 8, 32], strides = [1, 1, 1, 1]} : vector<2x10x10x32xf32> to vector<2x8x8x32xf32>
    %117 = vector.shape_cast %116 : vector<2x8x8x32xf32> to vector<128x32xf32>
    %118 = vector.extract_strided_slice %115 {offsets = [0, 0, 1, 0], sizes = [2, 8, 8, 32], strides = [1, 1, 1, 1]} : vector<2x10x10x32xf32> to vector<2x8x8x32xf32>
    %119 = vector.shape_cast %118 : vector<2x8x8x32xf32> to vector<128x32xf32>
    %120 = vector.extract_strided_slice %115 {offsets = [0, 0, 2, 0], sizes = [2, 8, 8, 32], strides = [1, 1, 1, 1]} : vector<2x10x10x32xf32> to vector<2x8x8x32xf32>
    %121 = vector.shape_cast %120 : vector<2x8x8x32xf32> to vector<128x32xf32>
    %122 = vector.extract_strided_slice %115 {offsets = [0, 1, 0, 0], sizes = [2, 8, 8, 32], strides = [1, 1, 1, 1]} : vector<2x10x10x32xf32> to vector<2x8x8x32xf32>
    %123 = vector.shape_cast %122 : vector<2x8x8x32xf32> to vector<128x32xf32>
    %124 = vector.extract_strided_slice %115 {offsets = [0, 1, 1, 0], sizes = [2, 8, 8, 32], strides = [1, 1, 1, 1]} : vector<2x10x10x32xf32> to vector<2x8x8x32xf32>
    %125 = vector.shape_cast %124 : vector<2x8x8x32xf32> to vector<128x32xf32>
    %126 = vector.extract_strided_slice %115 {offsets = [0, 1, 2, 0], sizes = [2, 8, 8, 32], strides = [1, 1, 1, 1]} : vector<2x10x10x32xf32> to vector<2x8x8x32xf32>
    %127 = vector.shape_cast %126 : vector<2x8x8x32xf32> to vector<128x32xf32>
    %128 = vector.extract_strided_slice %115 {offsets = [0, 2, 0, 0], sizes = [2, 8, 8, 32], strides = [1, 1, 1, 1]} : vector<2x10x10x32xf32> to vector<2x8x8x32xf32>
    %129 = vector.shape_cast %128 : vector<2x8x8x32xf32> to vector<128x32xf32>
    %130 = vector.extract_strided_slice %115 {offsets = [0, 2, 1, 0], sizes = [2, 8, 8, 32], strides = [1, 1, 1, 1]} : vector<2x10x10x32xf32> to vector<2x8x8x32xf32>
    %131 = vector.shape_cast %130 : vector<2x8x8x32xf32> to vector<128x32xf32>
    %132 = vector.extract_strided_slice %115 {offsets = [0, 2, 2, 0], sizes = [2, 8, 8, 32], strides = [1, 1, 1, 1]} : vector<2x10x10x32xf32> to vector<2x8x8x32xf32>
    %133 = vector.shape_cast %132 : vector<2x8x8x32xf32> to vector<128x32xf32>
    %134 = tpu.concatenate %117, %119, %121, %123, %125, %127, %129, %131, %133 in 1 : vector<128x32xf32>, vector<128x32xf32>, vector<128x32xf32>, vector<128x32xf32>, vector<128x32xf32>, vector<128x32xf32>, vector<128x32xf32>, vector<128x32xf32>, vector<128x32xf32> -> vector<128x288xf32>
    %cst_81 = arith.constant dense<0.000000e+00> : vector<128x32xf32>
    %135 = tpu.matmul %134, %110, %cst_81 {dimension_numbers = #tpu.dot_dimension_numbers<[1], [0], [0], [1], [0, 0, 1, 1], [], []>} : vector<128x288xf32>, vector<288x32xf32>, vector<128x32xf32> -> vector<128x32xf32>
    %136 = vector.broadcast %112 : vector<1x32xf32> to vector<128x32xf32>
    %137 = arith.mulf %135, %136 : vector<128x32xf32>
    %138 = vector.broadcast %114 : vector<1x32xf32> to vector<128x32xf32>
    %139 = arith.addf %137, %138 : vector<128x32xf32>
    %cst_82 = arith.constant 0.000000e+00 : f32
    %140 = vector.broadcast %cst_82 : f32 to vector<128x32xf32>
    %141 = arith.maximumf %139, %140 : vector<128x32xf32>
    %142 = vector.shape_cast %141 : vector<128x32xf32> to vector<2x8x8x32xf32>
    %c0_83 = arith.constant 0 : index
    %c1_84 = arith.constant 1 : index
    %c1_85 = arith.constant 1 : index
    %c0_86 = arith.constant 0 : index
    %143 = vector.load %arg9[%c0_83, %c1_84, %c1_85, %c0_86] : memref<2x10x10x32xf32, #tpu.memory_space<vmem>>, vector<2x8x8x32xf32>
    tpu.vector_store %arg9[%c0_83, %c1_84, %c1_85, %c0_86], %142 {strides = array<i32>} : memref<2x10x10x32xf32, #tpu.memory_space<vmem>>, vector<2x8x8x32xf32>,
    %c3 = arith.constant 3 : index
    %c0_87 = arith.constant 0 : index
    %c0_88 = arith.constant 0 : index
    %144 = vector.load %arg4[%c3, %c0_87, %c0_88] : memref<4x288x32xf32, #tpu.memory_space<vmem>>, vector<1x288x32xf32>
    %145 = vector.shape_cast %144 : vector<1x288x32xf32> to vector<288x32xf32>
    %c3_89 = arith.constant 3 : index
    %c0_90 = arith.constant 0 : index
    %c0_91 = arith.constant 0 : index
    %146 = vector.load %arg5[%c3_89, %c0_90, %c0_91] : memref<4x1x32xf32, #tpu.memory_space<vmem>>, vector<1x1x32xf32>
    %147 = vector.shape_cast %146 : vector<1x1x32xf32> to vector<1x32xf32>
    %c3_92 = arith.constant 3 : index
    %c0_93 = arith.constant 0 : index
    %c0_94 = arith.constant 0 : index
    %148 = vector.load %arg6[%c3_92, %c0_93, %c0_94] : memref<4x1x32xf32, #tpu.memory_space<vmem>>, vector<1x1x32xf32>
    %149 = vector.shape_cast %148 : vector<1x1x32xf32> to vector<1x32xf32>
    %c0_95 = arith.constant 0 : index
    %c0_96 = arith.constant 0 : index
    %c0_97 = arith.constant 0 : index
    %c0_98 = arith.constant 0 : index
    %150 = vector.load %arg9[%c0_95, %c0_96, %c0_97, %c0_98] : memref<2x10x10x32xf32, #tpu.memory_space<vmem>>, vector<2x10x10x32xf32>
    %151 = vector.extract_strided_slice %150 {offsets = [0, 0, 0, 0], sizes = [2, 8, 8, 32], strides = [1, 1, 1, 1]} : vector<2x10x10x32xf32> to vector<2x8x8x32xf32>
    %152 = vector.shape_cast %151 : vector<2x8x8x32xf32> to vector<128x32xf32>
    %153 = vector.extract_strided_slice %150 {offsets = [0, 0, 1, 0], sizes = [2, 8, 8, 32], strides = [1, 1, 1, 1]} : vector<2x10x10x32xf32> to vector<2x8x8x32xf32>
    %154 = vector.shape_cast %153 : vector<2x8x8x32xf32> to vector<128x32xf32>
    %155 = vector.extract_strided_slice %150 {offsets = [0, 0, 2, 0], sizes = [2, 8, 8, 32], strides = [1, 1, 1, 1]} : vector<2x10x10x32xf32> to vector<2x8x8x32xf32>
    %156 = vector.shape_cast %155 : vector<2x8x8x32xf32> to vector<128x32xf32>
    %157 = vector.extract_strided_slice %150 {offsets = [0, 1, 0, 0], sizes = [2, 8, 8, 32], strides = [1, 1, 1, 1]} : vector<2x10x10x32xf32> to vector<2x8x8x32xf32>
    %158 = vector.shape_cast %157 : vector<2x8x8x32xf32> to vector<128x32xf32>
    %159 = vector.extract_strided_slice %150 {offsets = [0, 1, 1, 0], sizes = [2, 8, 8, 32], strides = [1, 1, 1, 1]} : vector<2x10x10x32xf32> to vector<2x8x8x32xf32>
    %160 = vector.shape_cast %159 : vector<2x8x8x32xf32> to vector<128x32xf32>
    %161 = vector.extract_strided_slice %150 {offsets = [0, 1, 2, 0], sizes = [2, 8, 8, 32], strides = [1, 1, 1, 1]} : vector<2x10x10x32xf32> to vector<2x8x8x32xf32>
    %162 = vector.shape_cast %161 : vector<2x8x8x32xf32> to vector<128x32xf32>
    %163 = vector.extract_strided_slice %150 {offsets = [0, 2, 0, 0], sizes = [2, 8, 8, 32], strides = [1, 1, 1, 1]} : vector<2x10x10x32xf32> to vector<2x8x8x32xf32>
    %164 = vector.shape_cast %163 : vector<2x8x8x32xf32> to vector<128x32xf32>
    %165 = vector.extract_strided_slice %150 {offsets = [0, 2, 1, 0], sizes = [2, 8, 8, 32], strides = [1, 1, 1, 1]} : vector<2x10x10x32xf32> to vector<2x8x8x32xf32>
    %166 = vector.shape_cast %165 : vector<2x8x8x32xf32> to vector<128x32xf32>
    %167 = vector.extract_strided_slice %150 {offsets = [0, 2, 2, 0], sizes = [2, 8, 8, 32], strides = [1, 1, 1, 1]} : vector<2x10x10x32xf32> to vector<2x8x8x32xf32>
    %168 = vector.shape_cast %167 : vector<2x8x8x32xf32> to vector<128x32xf32>
    %169 = tpu.concatenate %152, %154, %156, %158, %160, %162, %164, %166, %168 in 1 : vector<128x32xf32>, vector<128x32xf32>, vector<128x32xf32>, vector<128x32xf32>, vector<128x32xf32>, vector<128x32xf32>, vector<128x32xf32>, vector<128x32xf32>, vector<128x32xf32> -> vector<128x288xf32>
    %cst_99 = arith.constant dense<0.000000e+00> : vector<128x32xf32>
    %170 = tpu.matmul %169, %145, %cst_99 {dimension_numbers = #tpu.dot_dimension_numbers<[1], [0], [0], [1], [0, 0, 1, 1], [], []>} : vector<128x288xf32>, vector<288x32xf32>, vector<128x32xf32> -> vector<128x32xf32>
    %171 = vector.broadcast %147 : vector<1x32xf32> to vector<128x32xf32>
    %172 = arith.mulf %170, %171 : vector<128x32xf32>
    %173 = vector.broadcast %149 : vector<1x32xf32> to vector<128x32xf32>
    %174 = arith.addf %172, %173 : vector<128x32xf32>
    %175 = arith.addf %174, %106 : vector<128x32xf32>
    %cst_100 = arith.constant 0.000000e+00 : f32
    %176 = vector.broadcast %cst_100 : f32 to vector<128x32xf32>
    %177 = arith.maximumf %175, %176 : vector<128x32xf32>
    %c0_101 = arith.constant 0 : index
    %c0_102 = arith.constant 0 : index
    %178 = vector.load %arg7[%c0_101, %c0_102] : memref<128x32xf32, #tpu.memory_space<vmem>>, vector<128x32xf32>
    tpu.vector_store %arg7[%c0_101, %c0_102], %177 {strides = array<i32>} : memref<128x32xf32, #tpu.memory_space<vmem>>, vector<128x32xf32>,
    return
  }
}

module attributes {stable_mosaic.version = 11 : i64} {
  func.func @_linear_kernel(%arg0: memref<2x2048xf32, #tpu.memory_space<vmem>>, %arg1: memref<2048x32xf32, #tpu.memory_space<vmem>>, %arg2: memref<1x32xf32, #tpu.memory_space<vmem>>, %arg3: memref<2x32xf32, #tpu.memory_space<vmem>>) attributes {dimension_semantics = [], scalar_prefetch = 0 : i64, scratch_operands = 0 : i64, tpu.core_type = #tpu.core_type<tc>} {
    %c0 = arith.constant 0 : index
    %c0_0 = arith.constant 0 : index
    %0 = vector.load %arg0[%c0, %c0_0] : memref<2x2048xf32, #tpu.memory_space<vmem>>, vector<2x2048xf32>
    %c0_1 = arith.constant 0 : index
    %c0_2 = arith.constant 0 : index
    %1 = vector.load %arg1[%c0_1, %c0_2] : memref<2048x32xf32, #tpu.memory_space<vmem>>, vector<2048x32xf32>
    %cst = arith.constant dense<0.000000e+00> : vector<2x32xf32>
    %2 = tpu.matmul %0, %1, %cst {dimension_numbers = #tpu.dot_dimension_numbers<[1], [0], [0], [1], [0, 0, 1, 1], [], []>} : vector<2x2048xf32>, vector<2048x32xf32>, vector<2x32xf32> -> vector<2x32xf32>
    %c0_3 = arith.constant 0 : index
    %c0_4 = arith.constant 0 : index
    %3 = vector.load %arg2[%c0_3, %c0_4] : memref<1x32xf32, #tpu.memory_space<vmem>>, vector<1x32xf32>
    %4 = vector.broadcast %3 : vector<1x32xf32> to vector<2x32xf32>
    %5 = arith.addf %2, %4 : vector<2x32xf32>
    %c0_5 = arith.constant 0 : index
    %c0_6 = arith.constant 0 : index
    %6 = vector.load %arg3[%c0_5, %c0_6] : memref<2x32xf32, #tpu.memory_space<vmem>>, vector<2x32xf32>
    tpu.vector_store %arg3[%c0_5, %c0_6], %5 {strides = array<i32>} : memref<2x32xf32, #tpu.memory_space<vmem>>, vector<2x32xf32>,
    return
  }
}

</mosaic_0001>

<llo_original>
// kernel: conv_encoder_forward.3
$region0: #{conv_encoder_forward.3}
  #allocation0 [shape = 'u32[]', space=smem, size = 0x4, offset = 0x4, fixed_abs, tag = 'smem constant byte address 0x4 - core index']
  #allocation1 [shape = 'u32[144,128]{1,0:T(1,128)}', space=vmem, size = 0x12000, scoped, tag = 'internal scratch']
  %s0 = inlined_call_operand.vmem [shape: f32[2,2048], index: 0, kind: input, shape index: {}]
  %s1 = inlined_call_operand.vmem [shape: f32[2048,32], index: 1, kind: input, shape index: {}]
  %s2 = inlined_call_operand.vmem [shape: f32[1,32], index: 2, kind: input, shape index: {}]
  %s3 = inlined_call_operand.hbm [shape: f32[2,32], index: 3, kind: output, shape index: {}]
  %s4 = sld [smem:[#allocation0]]
  $region22: #{conv_encoder_forward.3} parent=0
    _
  %s6 = ssub.s32 1, %s4
  %s7 = scalar_select 0, %s6, %s4
  $region1: #{conv_encoder_forward.3} parent=0
    #allocation2 [shape = 'u8[1024]{0}', space=vmem, size = 0x400, scoped, tag = 'output window, operand 0, single buffered']
    #allocation3 [shape = 's32[1]{0}', space=sflag, size = 0x4, scoped, tag = 'scoped memory for conv_encoder_forward.3']
    %8 = vsyncpa [#allocation3], 0
    // Predicated region
    $region2: #{conv_encoder_forward.3} parent=1 // pred_check
      _
    $region3: #{conv_encoder_forward.3} parent=1 // pred_check_branch
      %10 = sbr.rel (0) target = $region5
    $region4: #{conv_encoder_forward.3} parent=1 // pred_region
      _
    $region5: #{conv_encoder_forward.3} parent=1 // pred_fallthru
      _
    // Predicated region
    $region6: #{conv_encoder_forward.3} parent=1 // pred_check
      _
    $region7: #{conv_encoder_forward.3} parent=1 // pred_check_branch
      %12 = sbr.rel (0) target = $region9
    $region8: #{conv_encoder_forward.3} parent=1 // pred_region
      _
    $region9: #{conv_encoder_forward.3} parent=1 // pred_fallthru
      _
    // Predicated region
    $region10: #{conv_encoder_forward.3} parent=1 // pred_check
      _
    $region11: #{conv_encoder_forward.3} parent=1 // pred_check_branch
      %14 = sbr.rel (0) target = $region13
    $region12: #{conv_encoder_forward.3} parent=1 // pred_region
      _
    $region13: #{conv_encoder_forward.3} parent=1 // pred_fallthru
      _
    %v15 = vld [vmem:[%s0] sm:$0xff]
    %v16 = vld [vmem:[%s0 + $0x8] sm:$0xff]
    %v17 = vld [vmem:[%s0 + $0x10] sm:$0xff]
    %v18 = vld [vmem:[%s0 + $0x18] sm:$0xff]
    %v19 = vld [vmem:[%s1] sm:$0xff]
    %v20 = vld [vmem:[%s1 + $0x8] sm:$0xff]
    %v21 = vld [vmem:[%s1 + $0x10] sm:$0xff]
    %v22 = vld [vmem:[%s1 + $0x18] sm:$0xff]
    %v23 = vld [vmem:[%s1 + $0x20] sm:$0xff]
    %v24 = vld [vmem:[%s1 + $0x28] sm:$0xff]
    %v25 = vld [vmem:[%s1 + $0x30] sm:$0xff]
    %v26 = vld [vmem:[%s1 + $0x38] sm:$0xff]
    %v27 = vld [vmem:[%s1 + $0x40] sm:$0xff]
    %v28 = vld [vmem:[%s1 + $0x48] sm:$0xff]
    %v29 = vld [vmem:[%s1 + $0x50] sm:$0xff]
    %v30 = vld [vmem:[%s1 + $0x58] sm:$0xff]
    %v31 = vld [vmem:[%s1 + $0x60] sm:$0xff]
    %v32 = vld [vmem:[%s1 + $0x68] sm:$0xff]
    %v33 = vld [vmem:[%s1 + $0x70] sm:$0xff]
    %v34 = vld [vmem:[%s1 + $0x78] sm:$0xff]
    %v35 = vld [vmem:[%s1 + $0x80] sm:$0xff]
    %v36 = vld [vmem:[%s1 + $0x88] sm:$0xff]
    %v37 = vld [vmem:[%s1 + $0x90] sm:$0xff]
    %v38 = vld [vmem:[%s1 + $0x98] sm:$0xff]
    %v39 = vld [vmem:[%s1 + $0xa0] sm:$0xff]
    %v40 = vld [vmem:[%s1 + $0xa8] sm:$0xff]
    %v41 = vld [vmem:[%s1 + $0xb0] sm:$0xff]
    %v42 = vld [vmem:[%s1 + $0xb8] sm:$0xff]
    %v43 = vld [vmem:[%s1 + $0xc0] sm:$0xff]
    %v44 = vld [vmem:[%s1 + $0xc8] sm:$0xff]
    %v45 = vld [vmem:[%s1 + $0xd0] sm:$0xff]
    %v46 = vld [vmem:[%s1 + $0xd8] sm:$0xff]
    %v47 = vld [vmem:[%s1 + $0xe0] sm:$0xff]
    %v48 = vld [vmem:[%s1 + $0xe8] sm:$0xff]
    %v49 = vld [vmem:[%s1 + $0xf0] sm:$0xff]
    %v50 = vld [vmem:[%s1 + $0xf8] sm:$0xff]
    %v51 = vld [vmem:[%s1 + $0x100] sm:$0xff]
    %v52 = vld [vmem:[%s1 + $0x108] sm:$0xff]
    %v53 = vld [vmem:[%s1 + $0x110] sm:$0xff]
    %v54 = vld [vmem:[%s1 + $0x118] sm:$0xff]
    %v55 = vld [vmem:[%s1 + $0x120] sm:$0xff]
    %v56 = vld [vmem:[%s1 + $0x128] sm:$0xff]
    %v57 = vld [vmem:[%s1 + $0x130] sm:$0xff]
    %v58 = vld [vmem:[%s1 + $0x138] sm:$0xff]
    %v59 = vld [vmem:[%s1 + $0x140] sm:$0xff]
    %v60 = vld [vmem:[%s1 + $0x148] sm:$0xff]
    %v61 = vld [vmem:[%s1 + $0x150] sm:$0xff]
    %v62 = vld [vmem:[%s1 + $0x158] sm:$0xff]
    %v63 = vld [vmem:[%s1 + $0x160] sm:$0xff]
    %v64 = vld [vmem:[%s1 + $0x168] sm:$0xff]
    %v65 = vld [vmem:[%s1 + $0x170] sm:$0xff]
    %v66 = vld [vmem:[%s1 + $0x178] sm:$0xff]
    %v67 = vld [vmem:[%s1 + $0x180] sm:$0xff]
    %v68 = vld [vmem:[%s1 + $0x188] sm:$0xff]
    %v69 = vld [vmem:[%s1 + $0x190] sm:$0xff]
    %v70 = vld [vmem:[%s1 + $0x198] sm:$0xff]
    %v71 = vld [vmem:[%s1 + $0x1a0] sm:$0xff]
    %v72 = vld [vmem:[%s1 + $0x1a8] sm:$0xff]
    %v73 = vld [vmem:[%s1 + $0x1b0] sm:$0xff]
    %v74 = vld [vmem:[%s1 + $0x1b8] sm:$0xff]
    %v75 = vld [vmem:[%s1 + $0x1c0] sm:$0xff]
    %v76 = vld [vmem:[%s1 + $0x1c8] sm:$0xff]
    %v77 = vld [vmem:[%s1 + $0x1d0] sm:$0xff]
    %v78 = vld [vmem:[%s1 + $0x1d8] sm:$0xff]
    %v79 = vld [vmem:[%s1 + $0x1e0] sm:$0xff]
    %v80 = vld [vmem:[%s1 + $0x1e8] sm:$0xff]
    %v81 = vld [vmem:[%s1 + $0x1f0] sm:$0xff]
    %v82 = vld [vmem:[%s1 + $0x1f8] sm:$0xff]
    %v83 = vld [vmem:[%s1 + $0x200] sm:$0xff]
    %v84 = vld [vmem:[%s1 + $0x208] sm:$0xff]
    %v85 = vld [vmem:[%s1 + $0x210] sm:$0xff]
    %v86 = vld [vmem:[%s1 + $0x218] sm:$0xff]
    %v87 = vld [vmem:[%s1 + $0x220] sm:$0xff]
    %v88 = vld [vmem:[%s1 + $0x228] sm:$0xff]
    %v89 = vld [vmem:[%s1 + $0x230] sm:$0xff]
    %v90 = vld [vmem:[%s1 + $0x238] sm:$0xff]
    %v91 = vld [vmem:[%s1 + $0x240] sm:$0xff]
    %v92 = vld [vmem:[%s1 + $0x248] sm:$0xff]
    %v93 = vld [vmem:[%s1 + $0x250] sm:$0xff]
    %v94 = vld [vmem:[%s1 + $0x258] sm:$0xff]
    %v95 = vld [vmem:[%s1 + $0x260] sm:$0xff]
    %v96 = vld [vmem:[%s1 + $0x268] sm:$0xff]
    %v97 = vld [vmem:[%s1 + $0x270] sm:$0xff]
    %v98 = vld [vmem:[%s1 + $0x278] sm:$0xff]
    %v99 = vld [vmem:[%s1 + $0x280] sm:$0xff]
    %v100 = vld [vmem:[%s1 + $0x288] sm:$0xff]
    %v101 = vld [vmem:[%s1 + $0x290] sm:$0xff]
    %v102 = vld [vmem:[%s1 + $0x298] sm:$0xff]
    %v103 = vld [vmem:[%s1 + $0x2a0] sm:$0xff]
    %v104 = vld [vmem:[%s1 + $0x2a8] sm:$0xff]
    %v105 = vld [vmem:[%s1 + $0x2b0] sm:$0xff]
    %v106 = vld [vmem:[%s1 + $0x2b8] sm:$0xff]
    %v107 = vld [vmem:[%s1 + $0x2c0] sm:$0xff]
    %v108 = vld [vmem:[%s1 + $0x2c8] sm:$0xff]
    %v109 = vld [vmem:[%s1 + $0x2d0] sm:$0xff]
    %v110 = vld [vmem:[%s1 + $0x2d8] sm:$0xff]
    %v111 = vld [vmem:[%s1 + $0x2e0] sm:$0xff]
    %v112 = vld [vmem:[%s1 + $0x2e8] sm:$0xff]
    %v113 = vld [vmem:[%s1 + $0x2f0] sm:$0xff]
    %v114 = vld [vmem:[%s1 + $0x2f8] sm:$0xff]
    %v115 = vld [vmem:[%s1 + $0x300] sm:$0xff]
    %v116 = vld [vmem:[%s1 + $0x308] sm:$0xff]
    %v117 = vld [vmem:[%s1 + $0x310] sm:$0xff]
    %v118 = vld [vmem:[%s1 + $0x318] sm:$0xff]
    %v119 = vld [vmem:[%s1 + $0x320] sm:$0xff]
    %v120 = vld [vmem:[%s1 + $0x328] sm:$0xff]
    %v121 = vld [vmem:[%s1 + $0x330] sm:$0xff]
    %v122 = vld [vmem:[%s1 + $0x338] sm:$0xff]
    %v123 = vld [vmem:[%s1 + $0x340] sm:$0xff]
    %v124 = vld [vmem:[%s1 + $0x348] sm:$0xff]
    %v125 = vld [vmem:[%s1 + $0x350] sm:$0xff]
    %v126 = vld [vmem:[%s1 + $0x358] sm:$0xff]
    %v127 = vld [vmem:[%s1 + $0x360] sm:$0xff]
    %v128 = vld [vmem:[%s1 + $0x368] sm:$0xff]
    %v129 = vld [vmem:[%s1 + $0x370] sm:$0xff]
    %v130 = vld [vmem:[%s1 + $0x378] sm:$0xff]
    %v131 = vld [vmem:[%s1 + $0x380] sm:$0xff]
    %v132 = vld [vmem:[%s1 + $0x388] sm:$0xff]
    %v133 = vld [vmem:[%s1 + $0x390] sm:$0xff]
    %v134 = vld [vmem:[%s1 + $0x398] sm:$0xff]
    %v135 = vld [vmem:[%s1 + $0x3a0] sm:$0xff]
    %v136 = vld [vmem:[%s1 + $0x3a8] sm:$0xff]
    %v137 = vld [vmem:[%s1 + $0x3b0] sm:$0xff]
    %v138 = vld [vmem:[%s1 + $0x3b8] sm:$0xff]
    %v139 = vld [vmem:[%s1 + $0x3c0] sm:$0xff]
    %v140 = vld [vmem:[%s1 + $0x3c8] sm:$0xff]
    %v141 = vld [vmem:[%s1 + $0x3d0] sm:$0xff]
    %v142 = vld [vmem:[%s1 + $0x3d8] sm:$0xff]
    %v143 = vld [vmem:[%s1 + $0x3e0] sm:$0xff]
    %v144 = vld [vmem:[%s1 + $0x3e8] sm:$0xff]
    %v145 = vld [vmem:[%s1 + $0x3f0] sm:$0xff]
    %v146 = vld [vmem:[%s1 + $0x3f8] sm:$0xff]
    %v147 = vld [vmem:[%s1 + $0x400] sm:$0xff]
    %v148 = vld [vmem:[%s1 + $0x408] sm:$0xff]
    %v149 = vld [vmem:[%s1 + $0x410] sm:$0xff]
    %v150 = vld [vmem:[%s1 + $0x418] sm:$0xff]
    %v151 = vld [vmem:[%s1 + $0x420] sm:$0xff]
    %v152 = vld [vmem:[%s1 + $0x428] sm:$0xff]
    %v153 = vld [vmem:[%s1 + $0x430] sm:$0xff]
    %v154 = vld [vmem:[%s1 + $0x438] sm:$0xff]
    %v155 = vld [vmem:[%s1 + $0x440] sm:$0xff]
    %v156 = vld [vmem:[%s1 + $0x448] sm:$0xff]
    %v157 = vld [vmem:[%s1 + $0x450] sm:$0xff]
    %v158 = vld [vmem:[%s1 + $0x458] sm:$0xff]
    %v159 = vld [vmem:[%s1 + $0x460] sm:$0xff]
    %v160 = vld [vmem:[%s1 + $0x468] sm:$0xff]
    %v161 = vld [vmem:[%s1 + $0x470] sm:$0xff]
    %v162 = vld [vmem:[%s1 + $0x478] sm:$0xff]
    %v163 = vld [vmem:[%s1 + $0x480] sm:$0xff]
    %v164 = vld [vmem:[%s1 + $0x488] sm:$0xff]
    %v165 = vld [vmem:[%s1 + $0x490] sm:$0xff]
    %v166 = vld [vmem:[%s1 + $0x498] sm:$0xff]
    %v167 = vld [vmem:[%s1 + $0x4a0] sm:$0xff]
    %v168 = vld [vmem:[%s1 + $0x4a8] sm:$0xff]
    %v169 = vld [vmem:[%s1 + $0x4b0] sm:$0xff]
    %v170 = vld [vmem:[%s1 + $0x4b8] sm:$0xff]
    %v171 = vld [vmem:[%s1 + $0x4c0] sm:$0xff]
    %v172 = vld [vmem:[%s1 + $0x4c8] sm:$0xff]
    %v173 = vld [vmem:[%s1 + $0x4d0] sm:$0xff]
    %v174 = vld [vmem:[%s1 + $0x4d8] sm:$0xff]
    %v175 = vld [vmem:[%s1 + $0x4e0] sm:$0xff]
    %v176 = vld [vmem:[%s1 + $0x4e8] sm:$0xff]
    %v177 = vld [vmem:[%s1 + $0x4f0] sm:$0xff]
    %v178 = vld [vmem:[%s1 + $0x4f8] sm:$0xff]
    %v179 = vld [vmem:[%s1 + $0x500] sm:$0xff]
    %v180 = vld [vmem:[%s1 + $0x508] sm:$0xff]
    %v181 = vld [vmem:[%s1 + $0x510] sm:$0xff]
    %v182 = vld [vmem:[%s1 + $0x518] sm:$0xff]
    %v183 = vld [vmem:[%s1 + $0x520] sm:$0xff]
    %v184 = vld [vmem:[%s1 + $0x528] sm:$0xff]
    %v185 = vld [vmem:[%s1 + $0x530] sm:$0xff]
    %v186 = vld [vmem:[%s1 + $0x538] sm:$0xff]
    %v187 = vld [vmem:[%s1 + $0x540] sm:$0xff]
    %v188 = vld [vmem:[%s1 + $0x548] sm:$0xff]
    %v189 = vld [vmem:[%s1 + $0x550] sm:$0xff]
    %v190 = vld [vmem:[%s1 + $0x558] sm:$0xff]
    %v191 = vld [vmem:[%s1 + $0x560] sm:$0xff]
    %v192 = vld [vmem:[%s1 + $0x568] sm:$0xff]
    %v193 = vld [vmem:[%s1 + $0x570] sm:$0xff]
    %v194 = vld [vmem:[%s1 + $0x578] sm:$0xff]
    %v195 = vld [vmem:[%s1 + $0x580] sm:$0xff]
    %v196 = vld [vmem:[%s1 + $0x588] sm:$0xff]
    %v197 = vld [vmem:[%s1 + $0x590] sm:$0xff]
    %v198 = vld [vmem:[%s1 + $0x598] sm:$0xff]
    %v199 = vld [vmem:[%s1 + $0x5a0] sm:$0xff]
    %v200 = vld [vmem:[%s1 + $0x5a8] sm:$0xff]
    %v201 = vld [vmem:[%s1 + $0x5b0] sm:$0xff]
    %v202 = vld [vmem:[%s1 + $0x5b8] sm:$0xff]
    %v203 = vld [vmem:[%s1 + $0x5c0] sm:$0xff]
    %v204 = vld [vmem:[%s1 + $0x5c8] sm:$0xff]
    %v205 = vld [vmem:[%s1 + $0x5d0] sm:$0xff]
    %v206 = vld [vmem:[%s1 + $0x5d8] sm:$0xff]
    %v207 = vld [vmem:[%s1 + $0x5e0] sm:$0xff]
    %v208 = vld [vmem:[%s1 + $0x5e8] sm:$0xff]
    %v209 = vld [vmem:[%s1 + $0x5f0] sm:$0xff]
    %v210 = vld [vmem:[%s1 + $0x5f8] sm:$0xff]
    %v211 = vld [vmem:[%s1 + $0x600] sm:$0xff]
    %v212 = vld [vmem:[%s1 + $0x608] sm:$0xff]
    %v213 = vld [vmem:[%s1 + $0x610] sm:$0xff]
    %v214 = vld [vmem:[%s1 + $0x618] sm:$0xff]
    %v215 = vld [vmem:[%s1 + $0x620] sm:$0xff]
    %v216 = vld [vmem:[%s1 + $0x628] sm:$0xff]
    %v217 = vld [vmem:[%s1 + $0x630] sm:$0xff]
    %v218 = vld [vmem:[%s1 + $0x638] sm:$0xff]
    %v219 = vld [vmem:[%s1 + $0x640] sm:$0xff]
    %v220 = vld [vmem:[%s1 + $0x648] sm:$0xff]
    %v221 = vld [vmem:[%s1 + $0x650] sm:$0xff]
    %v222 = vld [vmem:[%s1 + $0x658] sm:$0xff]
    %v223 = vld [vmem:[%s1 + $0x660] sm:$0xff]
    %v224 = vld [vmem:[%s1 + $0x668] sm:$0xff]
    %v225 = vld [vmem:[%s1 + $0x670] sm:$0xff]
    %v226 = vld [vmem:[%s1 + $0x678] sm:$0xff]
    %v227 = vld [vmem:[%s1 + $0x680] sm:$0xff]
    %v228 = vld [vmem:[%s1 + $0x688] sm:$0xff]
    %v229 = vld [vmem:[%s1 + $0x690] sm:$0xff]
    %v230 = vld [vmem:[%s1 + $0x698] sm:$0xff]
    %v231 = vld [vmem:[%s1 + $0x6a0] sm:$0xff]
    %v232 = vld [vmem:[%s1 + $0x6a8] sm:$0xff]
    %v233 = vld [vmem:[%s1 + $0x6b0] sm:$0xff]
    %v234 = vld [vmem:[%s1 + $0x6b8] sm:$0xff]
    %v235 = vld [vmem:[%s1 + $0x6c0] sm:$0xff]
    %v236 = vld [vmem:[%s1 + $0x6c8] sm:$0xff]
    %v237 = vld [vmem:[%s1 + $0x6d0] sm:$0xff]
    %v238 = vld [vmem:[%s1 + $0x6d8] sm:$0xff]
    %v239 = vld [vmem:[%s1 + $0x6e0] sm:$0xff]
    %v240 = vld [vmem:[%s1 + $0x6e8] sm:$0xff]
    %v241 = vld [vmem:[%s1 + $0x6f0] sm:$0xff]
    %v242 = vld [vmem:[%s1 + $0x6f8] sm:$0xff]
    %v243 = vld [vmem:[%s1 + $0x700] sm:$0xff]
    %v244 = vld [vmem:[%s1 + $0x708] sm:$0xff]
    %v245 = vld [vmem:[%s1 + $0x710] sm:$0xff]
    %v246 = vld [vmem:[%s1 + $0x718] sm:$0xff]
    %v247 = vld [vmem:[%s1 + $0x720] sm:$0xff]
    %v248 = vld [vmem:[%s1 + $0x728] sm:$0xff]
    %v249 = vld [vmem:[%s1 + $0x730] sm:$0xff]
    %v250 = vld [vmem:[%s1 + $0x738] sm:$0xff]
    %v251 = vld [vmem:[%s1 + $0x740] sm:$0xff]
    %v252 = vld [vmem:[%s1 + $0x748] sm:$0xff]
    %v253 = vld [vmem:[%s1 + $0x750] sm:$0xff]
    %v254 = vld [vmem:[%s1 + $0x758] sm:$0xff]
    %v255 = vld [vmem:[%s1 + $0x760] sm:$0xff]
    %v256 = vld [vmem:[%s1 + $0x768] sm:$0xff]
    %v257 = vld [vmem:[%s1 + $0x770] sm:$0xff]
    %v258 = vld [vmem:[%s1 + $0x778] sm:$0xff]
    %v259 = vld [vmem:[%s1 + $0x780] sm:$0xff]
    %v260 = vld [vmem:[%s1 + $0x788] sm:$0xff]
    %v261 = vld [vmem:[%s1 + $0x790] sm:$0xff]
    %v262 = vld [vmem:[%s1 + $0x798] sm:$0xff]
    %v263 = vld [vmem:[%s1 + $0x7a0] sm:$0xff]
    %v264 = vld [vmem:[%s1 + $0x7a8] sm:$0xff]
    %v265 = vld [vmem:[%s1 + $0x7b0] sm:$0xff]
    %v266 = vld [vmem:[%s1 + $0x7b8] sm:$0xff]
    %v267 = vld [vmem:[%s1 + $0x7c0] sm:$0xff]
    %v268 = vld [vmem:[%s1 + $0x7c8] sm:$0xff]
    %v269 = vld [vmem:[%s1 + $0x7d0] sm:$0xff]
    %v270 = vld [vmem:[%s1 + $0x7d8] sm:$0xff]
    %v271 = vld [vmem:[%s1 + $0x7e0] sm:$0xff]
    %v272 = vld [vmem:[%s1 + $0x7e8] sm:$0xff]
    %v273 = vld [vmem:[%s1 + $0x7f0] sm:$0xff]
    %v274 = vld [vmem:[%s1 + $0x7f8] sm:$0xff]
    %v275 = vld [vmem:[%s2] sm:$0x1]
    %v277 = vlaneseq
    %v278 = vshrl.u32 %v277, 7
    %v279 = vsub.s32 0, %v278
    %v280 = vrot.slane %v275, %v279
    %v286 = vcombine.high %v15, %v15
    %v288 = vunpack.c.l.s4 1983009808
    %v289 = vunpack.c.0.s8 %v288
    %v290 = vlaneseq
    %v291 = vshrl.u32 %v290, 7
    %v292 = vsub.s32 %v289, %v291
    %v293 = vrot.slane %v15, %v292
    %v295 = vunpack.c.l.s4 1983009808
    %v296 = vunpack.c.0.s8 %v295
    %v297 = vlaneseq
    %v298 = vshrl.u32 %v297, 7
    %v299 = vsub.s32 %v296, %v298
    %v300 = vrot.slane %v286, %v299
    %v301 = vcombine.high %v293, %v293
    %v302 = vcombine.high %v300, %v300
    %v303 = vcombine.high %v16, %v16
    %v305 = vunpack.c.l.s4 1983009808
    %v306 = vunpack.c.0.s8 %v305
    %v307 = vlaneseq
    %v308 = vshrl.u32 %v307, 7
    %v309 = vsub.s32 %v306, %v308
    %v310 = vrot.slane %v16, %v309
    %v312 = vunpack.c.l.s4 1983009808
    %v313 = vunpack.c.0.s8 %v312
    %v314 = vlaneseq
    %v315 = vshrl.u32 %v314, 7
    %v316 = vsub.s32 %v313, %v315
    %v317 = vrot.slane %v303, %v316
    %v318 = vcombine.high %v310, %v310
    %v319 = vcombine.high %v317, %v317
    %v320 = vcombine.high %v17, %v17
    %v322 = vunpack.c.l.s4 1983009808
    %v323 = vunpack.c.0.s8 %v322
    %v324 = vlaneseq
    %v325 = vshrl.u32 %v324, 7
    %v326 = vsub.s32 %v323, %v325
    %v327 = vrot.slane %v17, %v326
    %v329 = vunpack.c.l.s4 1983009808
    %v330 = vunpack.c.0.s8 %v329
    %v331 = vlaneseq
    %v332 = vshrl.u32 %v331, 7
    %v333 = vsub.s32 %v330, %v332
    %v334 = vrot.slane %v320, %v333
    %v335 = vcombine.high %v327, %v327
    %v336 = vcombine.high %v334, %v334
    %v337 = vcombine.high %v18, %v18
    %v339 = vunpack.c.l.s4 1983009808
    %v340 = vunpack.c.0.s8 %v339
    %v341 = vlaneseq
    %v342 = vshrl.u32 %v341, 7
    %v343 = vsub.s32 %v340, %v342
    %v344 = vrot.slane %v18, %v343
    %v346 = vunpack.c.l.s4 1983009808
    %v347 = vunpack.c.0.s8 %v346
    %v348 = vlaneseq
    %v349 = vshrl.u32 %v348, 7
    %v350 = vsub.s32 %v347, %v349
    %v351 = vrot.slane %v337, %v350
    %v352 = vcombine.high %v344, %v344
    %v353 = vcombine.high %v351, %v351
    %370 = vmatprep.subr.mxu0 0.0
    %371 = vmatpush1.msra.mxu0 %v34
    %372 = vmatprep.subr.mxu0 0.0
    %373 = vmatpush1.msra.mxu0 %v33
    %374 = vmatprep.subr.mxu0 0.0
    %375 = vmatpush1.msra.mxu0 %v32
    %376 = vmatprep.subr.mxu0 0.0
    %377 = vmatpush1.msra.mxu0 %v31
    %378 = vmatprep.subr.mxu0 0.0
    %379 = vmatpush1.msra.mxu0 %v30
    %380 = vmatprep.subr.mxu0 0.0
    %381 = vmatpush1.msra.mxu0 %v29
    %382 = vmatprep.subr.mxu0 0.0
    %383 = vmatpush1.msra.mxu0 %v28
    %384 = vmatprep.subr.mxu0 0.0
    %385 = vmatpush1.msra.mxu0 %v27
    %386 = vmatprep.subr.mxu0 0.0
    %387 = vmatpush1.msra.mxu0 %v26
    %388 = vmatprep.subr.mxu0 0.0
    %389 = vmatpush1.msra.mxu0 %v25
    %390 = vmatprep.subr.mxu0 0.0
    %391 = vmatpush1.msra.mxu0 %v24
    %392 = vmatprep.subr.mxu0 0.0
    %393 = vmatpush1.msra.mxu0 %v23
    %394 = vmatprep.subr.mxu0 0.0
    %395 = vmatpush1.msra.mxu0 %v22
    %396 = vmatprep.subr.mxu0 0.0
    %397 = vmatpush1.msra.mxu0 %v21
    %398 = vmatprep.subr.mxu0 0.0
    %399 = vmatpush1.msra.mxu0 %v20
    %400 = vmatprep.subr.mxu0 0.0
    %401 = vmatpush1.msra.mxu0 %v19
    %402 = vmatprep.subr.mxu0 0.0
    %403 = vmatpush2.msra.mxu0 %v50
    %404 = vmatprep.subr.mxu0 0.0
    %405 = vmatpush2.msra.mxu0 %v49
    %406 = vmatprep.subr.mxu0 0.0
    %407 = vmatpush2.msra.mxu0 %v48
    %408 = vmatprep.subr.mxu0 0.0
    %409 = vmatpush2.msra.mxu0 %v47
    %410 = vmatprep.subr.mxu0 0.0
    %411 = vmatpush2.msra.mxu0 %v46
    %412 = vmatprep.subr.mxu0 0.0
    %413 = vmatpush2.msra.mxu0 %v45
    %414 = vmatprep.subr.mxu0 0.0
    %415 = vmatpush2.msra.mxu0 %v44
    %416 = vmatprep.subr.mxu0 0.0
    %417 = vmatpush2.msra.mxu0 %v43
    %418 = vmatprep.subr.mxu0 0.0
    %419 = vmatpush2.msra.mxu0 %v42
    %420 = vmatprep.subr.mxu0 0.0
    %421 = vmatpush2.msra.mxu0 %v41
    %422 = vmatprep.subr.mxu0 0.0
    %423 = vmatpush2.msra.mxu0 %v40
    %424 = vmatprep.subr.mxu0 0.0
    %425 = vmatpush2.msra.mxu0 %v39
    %426 = vmatprep.subr.mxu0 0.0
    %427 = vmatpush2.msra.mxu0 %v38
    %428 = vmatprep.subr.mxu0 0.0
    %429 = vmatpush2.msra.mxu0 %v37
    %430 = vmatprep.subr.mxu0 0.0
    %431 = vmatpush2.msra.mxu0 %v36
    %432 = vmatprep.subr.mxu0 0.0
    %433 = vmatpush2.msra.mxu0 %v35
    %434 = vmatprep.mubr.f32.mxu0 %v301
    %435 = vmatmul.mubr.f32.gmra.mxu0 %v293
    %v436 = vpop.f32.mrf.mxu0
    %v437 = vadd.f32 %v280, %v436
    %v438 = vpop.f32.mrf.mxu0
    %439 = vdwg.mxu0
    %440 = vmatprep.subr.mxu0 0.0
    %441 = vmatpush1.msra.mxu0 %v66
    %442 = vmatprep.subr.mxu0 0.0
    %443 = vmatpush1.msra.mxu0 %v65
    %444 = vmatprep.subr.mxu0 0.0
    %445 = vmatpush1.msra.mxu0 %v64
    %446 = vmatprep.subr.mxu0 0.0
    %447 = vmatpush1.msra.mxu0 %v63
    %448 = vmatprep.subr.mxu0 0.0
    %449 = vmatpush1.msra.mxu0 %v62
    %450 = vmatprep.subr.mxu0 0.0
    %451 = vmatpush1.msra.mxu0 %v61
    %452 = vmatprep.subr.mxu0 0.0
    %453 = vmatpush1.msra.mxu0 %v60
    %454 = vmatprep.subr.mxu0 0.0
    %455 = vmatpush1.msra.mxu0 %v59
    %456 = vmatprep.subr.mxu0 0.0
    %457 = vmatpush1.msra.mxu0 %v58
    %458 = vmatprep.subr.mxu0 0.0
    %459 = vmatpush1.msra.mxu0 %v57
    %460 = vmatprep.subr.mxu0 0.0
    %461 = vmatpush1.msra.mxu0 %v56
    %462 = vmatprep.subr.mxu0 0.0
    %463 = vmatpush1.msra.mxu0 %v55
    %464 = vmatprep.subr.mxu0 0.0
    %465 = vmatpush1.msra.mxu0 %v54
    %466 = vmatprep.subr.mxu0 0.0
    %467 = vmatpush1.msra.mxu0 %v53
    %468 = vmatprep.subr.mxu0 0.0
    %469 = vmatpush1.msra.mxu0 %v52
    %470 = vmatprep.subr.mxu0 0.0
    %471 = vmatpush1.msra.mxu0 %v51
    %472 = vmatprep.subr.mxu0 0.0
    %473 = vmatpush2.msra.mxu0 %v82
    %474 = vmatprep.subr.mxu0 0.0
    %475 = vmatpush2.msra.mxu0 %v81
    %476 = vmatprep.subr.mxu0 0.0
    %477 = vmatpush2.msra.mxu0 %v80
    %478 = vmatprep.subr.mxu0 0.0
    %479 = vmatpush2.msra.mxu0 %v79
    %480 = vmatprep.subr.mxu0 0.0
    %481 = vmatpush2.msra.mxu0 %v78
    %482 = vmatprep.subr.mxu0 0.0
    %483 = vmatpush2.msra.mxu0 %v77
    %484 = vmatprep.subr.mxu0 0.0
    %485 = vmatpush2.msra.mxu0 %v76
    %486 = vmatprep.subr.mxu0 0.0
    %487 = vmatpush2.msra.mxu0 %v75
    %488 = vmatprep.subr.mxu0 0.0
    %489 = vmatpush2.msra.mxu0 %v74
    %490 = vmatprep.subr.mxu0 0.0
    %491 = vmatpush2.msra.mxu0 %v73
    %492 = vmatprep.subr.mxu0 0.0
    %493 = vmatpush2.msra.mxu0 %v72
    %494 = vmatprep.subr.mxu0 0.0
    %495 = vmatpush2.msra.mxu0 %v71
    %496 = vmatprep.subr.mxu0 0.0
    %497 = vmatpush2.msra.mxu0 %v70
    %498 = vmatprep.subr.mxu0 0.0
    %499 = vmatpush2.msra.mxu0 %v69
    %500 = vmatprep.subr.mxu0 0.0
    %501 = vmatpush2.msra.mxu0 %v68
    %502 = vmatprep.subr.mxu0 0.0
    %503 = vmatpush2.msra.mxu0 %v67
    %504 = vmatprep.mubr.f32.mxu0 %v302
    %505 = vmatmul.mubr.f32.gmra.mxu0 %v300
    %v506 = vpop.f32.mrf.mxu0
    %v507 = vadd.f32 %v437, %v506
    %v508 = vpop.f32.mrf.mxu0
    %509 = vdwg.mxu0
    %510 = vmatprep.subr.mxu0 0.0
    %511 = vmatpush1.msra.mxu0 %v98
    %512 = vmatprep.subr.mxu0 0.0
    %513 = vmatpush1.msra.mxu0 %v97
    %514 = vmatprep.subr.mxu0 0.0
    %515 = vmatpush1.msra.mxu0 %v96
    %516 = vmatprep.subr.mxu0 0.0
    %517 = vmatpush1.msra.mxu0 %v95
    %518 = vmatprep.subr.mxu0 0.0
    %519 = vmatpush1.msra.mxu0 %v94
    %520 = vmatprep.subr.mxu0 0.0
    %521 = vmatpush1.msra.mxu0 %v93
    %522 = vmatprep.subr.mxu0 0.0
    %523 = vmatpush1.msra.mxu0 %v92
    %524 = vmatprep.subr.mxu0 0.0
    %525 = vmatpush1.msra.mxu0 %v91
    %526 = vmatprep.subr.mxu0 0.0
    %527 = vmatpush1.msra.mxu0 %v90
    %528 = vmatprep.subr.mxu0 0.0
    %529 = vmatpush1.msra.mxu0 %v89
    %530 = vmatprep.subr.mxu0 0.0
    %531 = vmatpush1.msra.mxu0 %v88
    %532 = vmatprep.subr.mxu0 0.0
    %533 = vmatpush1.msra.mxu0 %v87
    %534 = vmatprep.subr.mxu0 0.0
    %535 = vmatpush1.msra.mxu0 %v86
    %536 = vmatprep.subr.mxu0 0.0
    %537 = vmatpush1.msra.mxu0 %v85
    %538 = vmatprep.subr.mxu0 0.0
    %539 = vmatpush1.msra.mxu0 %v84
    %540 = vmatprep.subr.mxu0 0.0
    %541 = vmatpush1.msra.mxu0 %v83
    %542 = vmatprep.subr.mxu0 0.0
    %543 = vmatpush2.msra.mxu0 %v114
    %544 = vmatprep.subr.mxu0 0.0
    %545 = vmatpush2.msra.mxu0 %v113
    %546 = vmatprep.subr.mxu0 0.0
    %547 = vmatpush2.msra.mxu0 %v112
    %548 = vmatprep.subr.mxu0 0.0
    %549 = vmatpush2.msra.mxu0 %v111
    %550 = vmatprep.subr.mxu0 0.0
    %551 = vmatpush2.msra.mxu0 %v110
    %552 = vmatprep.subr.mxu0 0.0
    %553 = vmatpush2.msra.mxu0 %v109
    %554 = vmatprep.subr.mxu0 0.0
    %555 = vmatpush2.msra.mxu0 %v108
    %556 = vmatprep.subr.mxu0 0.0
    %557 = vmatpush2.msra.mxu0 %v107
    %558 = vmatprep.subr.mxu0 0.0
    %559 = vmatpush2.msra.mxu0 %v106
    %560 = vmatprep.subr.mxu0 0.0
    %561 = vmatpush2.msra.mxu0 %v105
    %562 = vmatprep.subr.mxu0 0.0
    %563 = vmatpush2.msra.mxu0 %v104
    %564 = vmatprep.subr.mxu0 0.0
    %565 = vmatpush2.msra.mxu0 %v103
    %566 = vmatprep.subr.mxu0 0.0
    %567 = vmatpush2.msra.mxu0 %v102
    %568 = vmatprep.subr.mxu0 0.0
    %569 = vmatpush2.msra.mxu0 %v101
    %570 = vmatprep.subr.mxu0 0.0
    %571 = vmatpush2.msra.mxu0 %v100
    %572 = vmatprep.subr.mxu0 0.0
    %573 = vmatpush2.msra.mxu0 %v99
    %574 = vmatprep.mubr.f32.mxu0 %v318
    %575 = vmatmul.mubr.f32.gmra.mxu0 %v310
    %v576 = vpop.f32.mrf.mxu0
    %v577 = vadd.f32 %v507, %v576
    %v578 = vpop.f32.mrf.mxu0
    %579 = vdwg.mxu0
    %580 = vmatprep.subr.mxu0 0.0
    %581 = vmatpush1.msra.mxu0 %v130
    %582 = vmatprep.subr.mxu0 0.0
    %583 = vmatpush1.msra.mxu0 %v129
    %584 = vmatprep.subr.mxu0 0.0
    %585 = vmatpush1.msra.mxu0 %v128
    %586 = vmatprep.subr.mxu0 0.0
    %587 = vmatpush1.msra.mxu0 %v127
    %588 = vmatprep.subr.mxu0 0.0
    %589 = vmatpush1.msra.mxu0 %v126
    %590 = vmatprep.subr.mxu0 0.0
    %591 = vmatpush1.msra.mxu0 %v125
    %592 = vmatprep.subr.mxu0 0.0
    %593 = vmatpush1.msra.mxu0 %v124
    %594 = vmatprep.subr.mxu0 0.0
    %595 = vmatpush1.msra.mxu0 %v123
    %596 = vmatprep.subr.mxu0 0.0
    %597 = vmatpush1.msra.mxu0 %v122
    %598 = vmatprep.subr.mxu0 0.0
    %599 = vmatpush1.msra.mxu0 %v121
    %600 = vmatprep.subr.mxu0 0.0
    %601 = vmatpush1.msra.mxu0 %v120
    %602 = vmatprep.subr.mxu0 0.0
    %603 = vmatpush1.msra.mxu0 %v119
    %604 = vmatprep.subr.mxu0 0.0
    %605 = vmatpush1.msra.mxu0 %v118
    %606 = vmatprep.subr.mxu0 0.0
    %607 = vmatpush1.msra.mxu0 %v117
    %608 = vmatprep.subr.mxu0 0.0
    %609 = vmatpush1.msra.mxu0 %v116
    %610 = vmatprep.subr.mxu0 0.0
    %611 = vmatpush1.msra.mxu0 %v115
    %612 = vmatprep.subr.mxu0 0.0
    %613 = vmatpush2.msra.mxu0 %v146
    %614 = vmatprep.subr.mxu0 0.0
    %615 = vmatpush2.msra.mxu0 %v145
    %616 = vmatprep.subr.mxu0 0.0
    %617 = vmatpush2.msra.mxu0 %v144
    %618 = vmatprep.subr.mxu0 0.0
    %619 = vmatpush2.msra.mxu0 %v143
    %620 = vmatprep.subr.mxu0 0.0
    %621 = vmatpush2.msra.mxu0 %v142
    %622 = vmatprep.subr.mxu0 0.0
    %623 = vmatpush2.msra.mxu0 %v141
    %624 = vmatprep.subr.mxu0 0.0
    %625 = vmatpush2.msra.mxu0 %v140
    %626 = vmatprep.subr.mxu0 0.0
    %627 = vmatpush2.msra.mxu0 %v139
    %628 = vmatprep.subr.mxu0 0.0
    %629 = vmatpush2.msra.mxu0 %v138
    %630 = vmatprep.subr.mxu0 0.0
    %631 = vmatpush2.msra.mxu0 %v137
    %632 = vmatprep.subr.mxu0 0.0
    %633 = vmatpush2.msra.mxu0 %v136
    %634 = vmatprep.subr.mxu0 0.0
    %635 = vmatpush2.msra.mxu0 %v135
    %636 = vmatprep.subr.mxu0 0.0
    %637 = vmatpush2.msra.mxu0 %v134
    %638 = vmatprep.subr.mxu0 0.0
    %639 = vmatpush2.msra.mxu0 %v133
    %640 = vmatprep.subr.mxu0 0.0
    %641 = vmatpush2.msra.mxu0 %v132
    %642 = vmatprep.subr.mxu0 0.0
    %643 = vmatpush2.msra.mxu0 %v131
    %644 = vmatprep.mubr.f32.mxu0 %v319
    %645 = vmatmul.mubr.f32.gmra.mxu0 %v317
    %v646 = vpop.f32.mrf.mxu0
    %v647 = vadd.f32 %v577, %v646
    %v648 = vpop.f32.mrf.mxu0
    %649 = vdwg.mxu0
    %650 = vmatprep.subr.mxu0 0.0
    %651 = vmatpush1.msra.mxu0 %v162
    %652 = vmatprep.subr.mxu0 0.0
    %653 = vmatpush1.msra.mxu0 %v161
    %654 = vmatprep.subr.mxu0 0.0
    %655 = vmatpush1.msra.mxu0 %v160
    %656 = vmatprep.subr.mxu0 0.0
    %657 = vmatpush1.msra.mxu0 %v159
    %658 = vmatprep.subr.mxu0 0.0
    %659 = vmatpush1.msra.mxu0 %v158
    %660 = vmatprep.subr.mxu0 0.0
    %661 = vmatpush1.msra.mxu0 %v157
    %662 = vmatprep.subr.mxu0 0.0
    %663 = vmatpush1.msra.mxu0 %v156
    %664 = vmatprep.subr.mxu0 0.0
    %665 = vmatpush1.msra.mxu0 %v155
    %666 = vmatprep.subr.mxu0 0.0
    %667 = vmatpush1.msra.mxu0 %v154
    %668 = vmatprep.subr.mxu0 0.0
    %669 = vmatpush1.msra.mxu0 %v153
    %670 = vmatprep.subr.mxu0 0.0
    %671 = vmatpush1.msra.mxu0 %v152
    %672 = vmatprep.subr.mxu0 0.0
    %673 = vmatpush1.msra.mxu0 %v151
    %674 = vmatprep.subr.mxu0 0.0
    %675 = vmatpush1.msra.mxu0 %v150
    %676 = vmatprep.subr.mxu0 0.0
    %677 = vmatpush1.msra.mxu0 %v149
    %678 = vmatprep.subr.mxu0 0.0
    %679 = vmatpush1.msra.mxu0 %v148
    %680 = vmatprep.subr.mxu0 0.0
    %681 = vmatpush1.msra.mxu0 %v147
    %682 = vmatprep.subr.mxu0 0.0
    %683 = vmatpush2.msra.mxu0 %v178
    %684 = vmatprep.subr.mxu0 0.0
    %685 = vmatpush2.msra.mxu0 %v177
    %686 = vmatprep.subr.mxu0 0.0
    %687 = vmatpush2.msra.mxu0 %v176
    %688 = vmatprep.subr.mxu0 0.0
    %689 = vmatpush2.msra.mxu0 %v175
    %690 = vmatprep.subr.mxu0 0.0
    %691 = vmatpush2.msra.mxu0 %v174
    %692 = vmatprep.subr.mxu0 0.0
    %693 = vmatpush2.msra.mxu0 %v173
    %694 = vmatprep.subr.mxu0 0.0
    %695 = vmatpush2.msra.mxu0 %v172
    %696 = vmatprep.subr.mxu0 0.0
    %697 = vmatpush2.msra.mxu0 %v171
    %698 = vmatprep.subr.mxu0 0.0
    %699 = vmatpush2.msra.mxu0 %v170
    %700 = vmatprep.subr.mxu0 0.0
    %701 = vmatpush2.msra.mxu0 %v169
    %702 = vmatprep.subr.mxu0 0.0
    %703 = vmatpush2.msra.mxu0 %v168
    %704 = vmatprep.subr.mxu0 0.0
    %705 = vmatpush2.msra.mxu0 %v167
    %706 = vmatprep.subr.mxu0 0.0
    %707 = vmatpush2.msra.mxu0 %v166
    %708 = vmatprep.subr.mxu0 0.0
    %709 = vmatpush2.msra.mxu0 %v165
    %710 = vmatprep.subr.mxu0 0.0
    %711 = vmatpush2.msra.mxu0 %v164
    %712 = vmatprep.subr.mxu0 0.0
    %713 = vmatpush2.msra.mxu0 %v163
    %714 = vmatprep.mubr.f32.mxu0 %v335
    %715 = vmatmul.mubr.f32.gmra.mxu0 %v327
    %v716 = vpop.f32.mrf.mxu0
    %v717 = vadd.f32 %v647, %v716
    %v718 = vpop.f32.mrf.mxu0
    %719 = vdwg.mxu0
    %720 = vmatprep.subr.mxu0 0.0
    %721 = vmatpush1.msra.mxu0 %v194
    %722 = vmatprep.subr.mxu0 0.0
    %723 = vmatpush1.msra.mxu0 %v193
    %724 = vmatprep.subr.mxu0 0.0
    %725 = vmatpush1.msra.mxu0 %v192
    %726 = vmatprep.subr.mxu0 0.0
    %727 = vmatpush1.msra.mxu0 %v191
    %728 = vmatprep.subr.mxu0 0.0
    %729 = vmatpush1.msra.mxu0 %v190
    %730 = vmatprep.subr.mxu0 0.0
    %731 = vmatpush1.msra.mxu0 %v189
    %732 = vmatprep.subr.mxu0 0.0
    %733 = vmatpush1.msra.mxu0 %v188
    %734 = vmatprep.subr.mxu0 0.0
    %735 = vmatpush1.msra.mxu0 %v187
    %736 = vmatprep.subr.mxu0 0.0
    %737 = vmatpush1.msra.mxu0 %v186
    %738 = vmatprep.subr.mxu0 0.0
    %739 = vmatpush1.msra.mxu0 %v185
    %740 = vmatprep.subr.mxu0 0.0
    %741 = vmatpush1.msra.mxu0 %v184
    %742 = vmatprep.subr.mxu0 0.0
    %743 = vmatpush1.msra.mxu0 %v183
    %744 = vmatprep.subr.mxu0 0.0
    %745 = vmatpush1.msra.mxu0 %v182
    %746 = vmatprep.subr.mxu0 0.0
    %747 = vmatpush1.msra.mxu0 %v181
    %748 = vmatprep.subr.mxu0 0.0
    %749 = vmatpush1.msra.mxu0 %v180
    %750 = vmatprep.subr.mxu0 0.0
    %751 = vmatpush1.msra.mxu0 %v179
    %752 = vmatprep.subr.mxu0 0.0
    %753 = vmatpush2.msra.mxu0 %v210
    %754 = vmatprep.subr.mxu0 0.0
    %755 = vmatpush2.msra.mxu0 %v209
    %756 = vmatprep.subr.mxu0 0.0
    %757 = vmatpush2.msra.mxu0 %v208
    %758 = vmatprep.subr.mxu0 0.0
    %759 = vmatpush2.msra.mxu0 %v207
    %760 = vmatprep.subr.mxu0 0.0
    %761 = vmatpush2.msra.mxu0 %v206
    %762 = vmatprep.subr.mxu0 0.0
    %763 = vmatpush2.msra.mxu0 %v205
    %764 = vmatprep.subr.mxu0 0.0
    %765 = vmatpush2.msra.mxu0 %v204
    %766 = vmatprep.subr.mxu0 0.0
    %767 = vmatpush2.msra.mxu0 %v203
    %768 = vmatprep.subr.mxu0 0.0
    %769 = vmatpush2.msra.mxu0 %v202
    %770 = vmatprep.subr.mxu0 0.0
    %771 = vmatpush2.msra.mxu0 %v201
    %772 = vmatprep.subr.mxu0 0.0
    %773 = vmatpush2.msra.mxu0 %v200
    %774 = vmatprep.subr.mxu0 0.0
    %775 = vmatpush2.msra.mxu0 %v199
    %776 = vmatprep.subr.mxu0 0.0
    %777 = vmatpush2.msra.mxu0 %v198
    %778 = vmatprep.subr.mxu0 0.0
    %779 = vmatpush2.msra.mxu0 %v197
    %780 = vmatprep.subr.mxu0 0.0
    %781 = vmatpush2.msra.mxu0 %v196
    %782 = vmatprep.subr.mxu0 0.0
    %783 = vmatpush2.msra.mxu0 %v195
    %784 = vmatprep.mubr.f32.mxu0 %v336
    %785 = vmatmul.mubr.f32.gmra.mxu0 %v334
    %v786 = vpop.f32.mrf.mxu0
    %v787 = vadd.f32 %v717, %v786
    %v788 = vpop.f32.mrf.mxu0
    %789 = vdwg.mxu0
    %790 = vmatprep.subr.mxu0 0.0
    %791 = vmatpush1.msra.mxu0 %v226
    %792 = vmatprep.subr.mxu0 0.0
    %793 = vmatpush1.msra.mxu0 %v225
    %794 = vmatprep.subr.mxu0 0.0
    %795 = vmatpush1.msra.mxu0 %v224
    %796 = vmatprep.subr.mxu0 0.0
    %797 = vmatpush1.msra.mxu0 %v223
    %798 = vmatprep.subr.mxu0 0.0
    %799 = vmatpush1.msra.mxu0 %v222
    %800 = vmatprep.subr.mxu0 0.0
    %801 = vmatpush1.msra.mxu0 %v221
    %802 = vmatprep.subr.mxu0 0.0
    %803 = vmatpush1.msra.mxu0 %v220
    %804 = vmatprep.subr.mxu0 0.0
    %805 = vmatpush1.msra.mxu0 %v219
    %806 = vmatprep.subr.mxu0 0.0
    %807 = vmatpush1.msra.mxu0 %v218
    %808 = vmatprep.subr.mxu0 0.0
    %809 = vmatpush1.msra.mxu0 %v217
    %810 = vmatprep.subr.mxu0 0.0
    %811 = vmatpush1.msra.mxu0 %v216
    %812 = vmatprep.subr.mxu0 0.0
    %813 = vmatpush1.msra.mxu0 %v215
    %814 = vmatprep.subr.mxu0 0.0
    %815 = vmatpush1.msra.mxu0 %v214
    %816 = vmatprep.subr.mxu0 0.0
    %817 = vmatpush1.msra.mxu0 %v213
    %818 = vmatprep.subr.mxu0 0.0
    %819 = vmatpush1.msra.mxu0 %v212
    %820 = vmatprep.subr.mxu0 0.0
    %821 = vmatpush1.msra.mxu0 %v211
    %822 = vmatprep.subr.mxu0 0.0
    %823 = vmatpush2.msra.mxu0 %v242
    %824 = vmatprep.subr.mxu0 0.0
    %825 = vmatpush2.msra.mxu0 %v241
    %826 = vmatprep.subr.mxu0 0.0
    %827 = vmatpush2.msra.mxu0 %v240
    %828 = vmatprep.subr.mxu0 0.0
    %829 = vmatpush2.msra.mxu0 %v239
    %830 = vmatprep.subr.mxu0 0.0
    %831 = vmatpush2.msra.mxu0 %v238
    %832 = vmatprep.subr.mxu0 0.0
    %833 = vmatpush2.msra.mxu0 %v237
    %834 = vmatprep.subr.mxu0 0.0
    %835 = vmatpush2.msra.mxu0 %v236
    %836 = vmatprep.subr.mxu0 0.0
    %837 = vmatpush2.msra.mxu0 %v235
    %838 = vmatprep.subr.mxu0 0.0
    %839 = vmatpush2.msra.mxu0 %v234
    %840 = vmatprep.subr.mxu0 0.0
    %841 = vmatpush2.msra.mxu0 %v233
    %842 = vmatprep.subr.mxu0 0.0
    %843 = vmatpush2.msra.mxu0 %v232
    %844 = vmatprep.subr.mxu0 0.0
    %845 = vmatpush2.msra.mxu0 %v231
    %846 = vmatprep.subr.mxu0 0.0
    %847 = vmatpush2.msra.mxu0 %v230
    %848 = vmatprep.subr.mxu0 0.0
    %849 = vmatpush2.msra.mxu0 %v229
    %850 = vmatprep.subr.mxu0 0.0
    %851 = vmatpush2.msra.mxu0 %v228
    %852 = vmatprep.subr.mxu0 0.0
    %853 = vmatpush2.msra.mxu0 %v227
    %854 = vmatprep.mubr.f32.mxu0 %v352
    %855 = vmatmul.mubr.f32.gmra.mxu0 %v344
    %v856 = vpop.f32.mrf.mxu0
    %v857 = vadd.f32 %v787, %v856
    %v858 = vpop.f32.mrf.mxu0
    %859 = vdwg.mxu0
    %860 = vmatprep.subr.mxu0 0.0
    %861 = vmatpush1.msra.mxu0 %v258
    %862 = vmatprep.subr.mxu0 0.0
    %863 = vmatpush1.msra.mxu0 %v257
    %864 = vmatprep.subr.mxu0 0.0
    %865 = vmatpush1.msra.mxu0 %v256
    %866 = vmatprep.subr.mxu0 0.0
    %867 = vmatpush1.msra.mxu0 %v255
    %868 = vmatprep.subr.mxu0 0.0
    %869 = vmatpush1.msra.mxu0 %v254
    %870 = vmatprep.subr.mxu0 0.0
    %871 = vmatpush1.msra.mxu0 %v253
    %872 = vmatprep.subr.mxu0 0.0
    %873 = vmatpush1.msra.mxu0 %v252
    %874 = vmatprep.subr.mxu0 0.0
    %875 = vmatpush1.msra.mxu0 %v251
    %876 = vmatprep.subr.mxu0 0.0
    %877 = vmatpush1.msra.mxu0 %v250
    %878 = vmatprep.subr.mxu0 0.0
    %879 = vmatpush1.msra.mxu0 %v249
    %880 = vmatprep.subr.mxu0 0.0
    %881 = vmatpush1.msra.mxu0 %v248
    %882 = vmatprep.subr.mxu0 0.0
    %883 = vmatpush1.msra.mxu0 %v247
    %884 = vmatprep.subr.mxu0 0.0
    %885 = vmatpush1.msra.mxu0 %v246
    %886 = vmatprep.subr.mxu0 0.0
    %887 = vmatpush1.msra.mxu0 %v245
    %888 = vmatprep.subr.mxu0 0.0
    %889 = vmatpush1.msra.mxu0 %v244
    %890 = vmatprep.subr.mxu0 0.0
    %891 = vmatpush1.msra.mxu0 %v243
    %892 = vmatprep.subr.mxu0 0.0
    %893 = vmatpush2.msra.mxu0 %v274
    %894 = vmatprep.subr.mxu0 0.0
    %895 = vmatpush2.msra.mxu0 %v273
    %896 = vmatprep.subr.mxu0 0.0
    %897 = vmatpush2.msra.mxu0 %v272
    %898 = vmatprep.subr.mxu0 0.0
    %899 = vmatpush2.msra.mxu0 %v271
    %900 = vmatprep.subr.mxu0 0.0
    %901 = vmatpush2.msra.mxu0 %v270
    %902 = vmatprep.subr.mxu0 0.0
    %903 = vmatpush2.msra.mxu0 %v269
    %904 = vmatprep.subr.mxu0 0.0
    %905 = vmatpush2.msra.mxu0 %v268
    %906 = vmatprep.subr.mxu0 0.0
    %907 = vmatpush2.msra.mxu0 %v267
    %908 = vmatprep.subr.mxu0 0.0
    %909 = vmatpush2.msra.mxu0 %v266
    %910 = vmatprep.subr.mxu0 0.0
    %911 = vmatpush2.msra.mxu0 %v265
    %912 = vmatprep.subr.mxu0 0.0
    %913 = vmatpush2.msra.mxu0 %v264
    %914 = vmatprep.subr.mxu0 0.0
    %915 = vmatpush2.msra.mxu0 %v263
    %916 = vmatprep.subr.mxu0 0.0
    %917 = vmatpush2.msra.mxu0 %v262
    %918 = vmatprep.subr.mxu0 0.0
    %919 = vmatpush2.msra.mxu0 %v261
    %920 = vmatprep.subr.mxu0 0.0
    %921 = vmatpush2.msra.mxu0 %v260
    %922 = vmatprep.subr.mxu0 0.0
    %923 = vmatpush2.msra.mxu0 %v259
    %924 = vmatprep.mubr.f32.mxu0 %v353
    %925 = vmatmul.mubr.f32.gmra.mxu0 %v351
    %v926 = vpop.f32.mrf.mxu0
    %v927 = vadd.f32 %v857, %v926
    %v928 = vpop.f32.mrf.mxu0
    %929 = vdwg.mxu0
    %vm930 = vcmask 254976
    %931 = vst.msk [vmem:[#allocation2] sm:$0x3] %vm930, %v927
    // Predicated region
    $region14: #{conv_encoder_forward.3} parent=1 // pred_check
      _
    $region15: #{conv_encoder_forward.3} parent=1 // pred_check_branch
      %933 = sbr.rel (0) target = $region17
    $region16: #{conv_encoder_forward.3} parent=1 // pred_region
      %s935 = ssub.s32 32, 32
      %936 = vsyncadd [#allocation3], %s935
      %s938 = sshll.u32 [#allocation2], 4
      %s939 = int_to_ptr.vmem [resolvable:$true] %s938
      %941 = dma.vmem_to_hbm [thread:$0]  %s939, 32, %s3, [#allocation3]
    $region17: #{conv_encoder_forward.3} parent=1 // pred_fallthru
      _
    // Predicated region
    $region18: #{conv_encoder_forward.3} parent=1 // pred_check
      _
    $region19: #{conv_encoder_forward.3} parent=1 // pred_check_branch
      %943 = sbr.rel (0) target = $region21
    $region20: #{conv_encoder_forward.3} parent=1 // pred_region
      %944 = dma.done [#allocation3], 32
    $region21: #{conv_encoder_forward.3} parent=1 // pred_fallthru
      _
    %945 = vsyncpa [#allocation3], 1

// kernel: conv_encoder_forward.2
$region0: #{conv_encoder_forward.2}
  #allocation0 [shape = 'u32[]', space=smem, size = 0x4, offset = 0x4, fixed_abs, tag = 'smem constant byte address 0x4 - core index']
  #allocation1 [shape = 'u32[144,128]{1,0:T(1,128)}', space=vmem, size = 0x12000, scoped, tag = 'internal scratch']
  #allocation2 [shape = 'f32[2,10,10,4]{3,2,1,0:T(8,128)}', space=vmem, size = 0x28000, scoped, tag = 'scratch operand']
  #allocation3 [shape = 'f32[2,10,10,32]{3,2,1,0:T(8,128)}', space=vmem, size = 0x28000, scoped, tag = 'scratch operand']
  %s0 = inlined_call_operand.vmem [shape: f32[2,8,8,4], index: 0, kind: input, shape index: {}]
  %s1 = inlined_call_operand.vmem [shape: f32[36,32], index: 1, kind: input, shape index: {}]
  %s2 = inlined_call_operand.vmem [shape: f32[1,32], index: 2, kind: input, shape index: {}]
  %s3 = inlined_call_operand.vmem [shape: f32[1,32], index: 3, kind: input, shape index: {}]
  %s4 = inlined_call_operand.vmem [shape: f32[4,288,32], index: 4, kind: input, shape index: {}]
  %s5 = inlined_call_operand.vmem [shape: f32[4,1,32], index: 5, kind: input, shape index: {}]
  %s6 = inlined_call_operand.vmem [shape: f32[4,1,32], index: 6, kind: input, shape index: {}]
  %s7 = inlined_call_operand.vmem [shape: f32[128,32], index: 7, kind: output, shape index: {}]
  %s8 = sld [smem:[#allocation0]]
  $region38: #{conv_encoder_forward.2} parent=0
    _
  %s10 = ssub.s32 1, %s8
  %s11 = scalar_select 0, %s10, %s8
  // Predicated region
  $region2: #{conv_encoder_forward.2} parent=0 // pred_check
    _
  $region3: #{conv_encoder_forward.2} parent=0 // pred_check_branch
    %13 = sbr.rel (0) target = $region5
  $region4: #{conv_encoder_forward.2} parent=0 // pred_region
    _
  $region5: #{conv_encoder_forward.2} parent=0 // pred_fallthru
    _
  // Predicated region
  $region6: #{conv_encoder_forward.2} parent=0 // pred_check
    _
  $region7: #{conv_encoder_forward.2} parent=0 // pred_check_branch
    %15 = sbr.rel (0) target = $region9
  $region8: #{conv_encoder_forward.2} parent=0 // pred_region
    _
  $region9: #{conv_encoder_forward.2} parent=0 // pred_fallthru
    _
  // Predicated region
  $region10: #{conv_encoder_forward.2} parent=0 // pred_check
    _
  $region11: #{conv_encoder_forward.2} parent=0 // pred_check_branch
    %17 = sbr.rel (0) target = $region13
  $region12: #{conv_encoder_forward.2} parent=0 // pred_region
    _
  $region13: #{conv_encoder_forward.2} parent=0 // pred_fallthru
    _
  // Predicated region
  $region14: #{conv_encoder_forward.2} parent=0 // pred_check
    _
  $region15: #{conv_encoder_forward.2} parent=0 // pred_check_branch
    %19 = sbr.rel (0) target = $region17
  $region16: #{conv_encoder_forward.2} parent=0 // pred_region
    _
  $region17: #{conv_encoder_forward.2} parent=0 // pred_fallthru
    _
  // Predicated region
  $region18: #{conv_encoder_forward.2} parent=0 // pred_check
    _
  $region19: #{conv_encoder_forward.2} parent=0 // pred_check_branch
    %21 = sbr.rel (0) target = $region21
  $region20: #{conv_encoder_forward.2} parent=0 // pred_region
    _
  $region21: #{conv_encoder_forward.2} parent=0 // pred_fallthru
    _
  // Predicated region
  $region22: #{conv_encoder_forward.2} parent=0 // pred_check
    _
  $region23: #{conv_encoder_forward.2} parent=0 // pred_check_branch
    %23 = sbr.rel (0) target = $region25
  $region24: #{conv_encoder_forward.2} parent=0 // pred_region
    _
  $region25: #{conv_encoder_forward.2} parent=0 // pred_fallthru
    _
  // Predicated region
  $region26: #{conv_encoder_forward.2} parent=0 // pred_check
    _
  $region27: #{conv_encoder_forward.2} parent=0 // pred_check_branch
    %25 = sbr.rel (0) target = $region29
  $region28: #{conv_encoder_forward.2} parent=0 // pred_region
    _
  $region29: #{conv_encoder_forward.2} parent=0 // pred_fallthru
    _
  %vm26 = vcmask 31744
  %27 = vst.msk [vmem:[#allocation2] sm:$0xff] %vm26, 0.0
  %vm28 = vcmask 25600
  %29 = vst.msk [vmem:[#allocation2 + $0x8] sm:$0x3] %vm28, 0.0
  %30 = vst.msk [vmem:[#allocation2 + $0x10] sm:$0xff] %vm26, 0.0
  %31 = vst.msk [vmem:[#allocation2 + $0x18] sm:$0x3] %vm28, 0.0
  %32 = vst.msk [vmem:[#allocation2 + $0x20] sm:$0xff] %vm26, 0.0
  %33 = vst.msk [vmem:[#allocation2 + $0x28] sm:$0x3] %vm28, 0.0
  %34 = vst.msk [vmem:[#allocation2 + $0x30] sm:$0xff] %vm26, 0.0
  %35 = vst.msk [vmem:[#allocation2 + $0x38] sm:$0x3] %vm28, 0.0
  %36 = vst.msk [vmem:[#allocation2 + $0x40] sm:$0xff] %vm26, 0.0
  %37 = vst.msk [vmem:[#allocation2 + $0x48] sm:$0x3] %vm28, 0.0
  %38 = vst.msk [vmem:[#allocation2 + $0x50] sm:$0xff] %vm26, 0.0
  %39 = vst.msk [vmem:[#allocation2 + $0x58] sm:$0x3] %vm28, 0.0
  %40 = vst.msk [vmem:[#allocation2 + $0x60] sm:$0xff] %vm26, 0.0
  %41 = vst.msk [vmem:[#allocation2 + $0x68] sm:$0x3] %vm28, 0.0
  %42 = vst.msk [vmem:[#allocation2 + $0x70] sm:$0xff] %vm26, 0.0
  %43 = vst.msk [vmem:[#allocation2 + $0x78] sm:$0x3] %vm28, 0.0
  %44 = vst.msk [vmem:[#allocation2 + $0x80] sm:$0xff] %vm26, 0.0
  %45 = vst.msk [vmem:[#allocation2 + $0x88] sm:$0x3] %vm28, 0.0
  %46 = vst.msk [vmem:[#allocation2 + $0x90] sm:$0xff] %vm26, 0.0
  %47 = vst.msk [vmem:[#allocation2 + $0x98] sm:$0x3] %vm28, 0.0
  %48 = vst.msk [vmem:[#allocation2 + $0xa0] sm:$0xff] %vm26, 0.0
  %49 = vst.msk [vmem:[#allocation2 + $0xa8] sm:$0x3] %vm28, 0.0
  %50 = vst.msk [vmem:[#allocation2 + $0xb0] sm:$0xff] %vm26, 0.0
  %51 = vst.msk [vmem:[#allocation2 + $0xb8] sm:$0x3] %vm28, 0.0
  %52 = vst.msk [vmem:[#allocation2 + $0xc0] sm:$0xff] %vm26, 0.0
  %53 = vst.msk [vmem:[#allocation2 + $0xc8] sm:$0x3] %vm28, 0.0
  %54 = vst.msk [vmem:[#allocation2 + $0xd0] sm:$0xff] %vm26, 0.0
  %55 = vst.msk [vmem:[#allocation2 + $0xd8] sm:$0x3] %vm28, 0.0
  %56 = vst.msk [vmem:[#allocation2 + $0xe0] sm:$0xff] %vm26, 0.0
  %57 = vst.msk [vmem:[#allocation2 + $0xe8] sm:$0x3] %vm28, 0.0
  %58 = vst.msk [vmem:[#allocation2 + $0xf0] sm:$0xff] %vm26, 0.0
  %59 = vst.msk [vmem:[#allocation2 + $0xf8] sm:$0x3] %vm28, 0.0
  %60 = vst.msk [vmem:[#allocation2 + $0x100] sm:$0xff] %vm26, 0.0
  %61 = vst.msk [vmem:[#allocation2 + $0x108] sm:$0x3] %vm28, 0.0
  %62 = vst.msk [vmem:[#allocation2 + $0x110] sm:$0xff] %vm26, 0.0
  %63 = vst.msk [vmem:[#allocation2 + $0x118] sm:$0x3] %vm28, 0.0
  %64 = vst.msk [vmem:[#allocation2 + $0x120] sm:$0xff] %vm26, 0.0
  %65 = vst.msk [vmem:[#allocation2 + $0x128] sm:$0x3] %vm28, 0.0
  %66 = vst.msk [vmem:[#allocation2 + $0x130] sm:$0xff] %vm26, 0.0
  %67 = vst.msk [vmem:[#allocation2 + $0x138] sm:$0x3] %vm28, 0.0
  %vm68 = vcmask 261120
  %69 = vst.msk [vmem:[#allocation3] sm:$0xff] %vm68, 0.0
  %vm70 = vcmask 254976
  %71 = vst.msk [vmem:[#allocation3 + $0x8] sm:$0x3] %vm70, 0.0
  %72 = vst.msk [vmem:[#allocation3 + $0x10] sm:$0xff] %vm68, 0.0
  %73 = vst.msk [vmem:[#allocation3 + $0x18] sm:$0x3] %vm70, 0.0
  %74 = vst.msk [vmem:[#allocation3 + $0x20] sm:$0xff] %vm68, 0.0
  %75 = vst.msk [vmem:[#allocation3 + $0x28] sm:$0x3] %vm70, 0.0
  %76 = vst.msk [vmem:[#allocation3 + $0x30] sm:$0xff] %vm68, 0.0
  %77 = vst.msk [vmem:[#allocation3 + $0x38] sm:$0x3] %vm70, 0.0
  %78 = vst.msk [vmem:[#allocation3 + $0x40] sm:$0xff] %vm68, 0.0
  %79 = vst.msk [vmem:[#allocation3 + $0x48] sm:$0x3] %vm70, 0.0
  %80 = vst.msk [vmem:[#allocation3 + $0x50] sm:$0xff] %vm68, 0.0
  %81 = vst.msk [vmem:[#allocation3 + $0x58] sm:$0x3] %vm70, 0.0
  %82 = vst.msk [vmem:[#allocation3 + $0x60] sm:$0xff] %vm68, 0.0
  %83 = vst.msk [vmem:[#allocation3 + $0x68] sm:$0x3] %vm70, 0.0
  %84 = vst.msk [vmem:[#allocation3 + $0x70] sm:$0xff] %vm68, 0.0
  %85 = vst.msk [vmem:[#allocation3 + $0x78] sm:$0x3] %vm70, 0.0
  %86 = vst.msk [vmem:[#allocation3 + $0x80] sm:$0xff] %vm68, 0.0
  %87 = vst.msk [vmem:[#allocation3 + $0x88] sm:$0x3] %vm70, 0.0
  %88 = vst.msk [vmem:[#allocation3 + $0x90] sm:$0xff] %vm68, 0.0
  %89 = vst.msk [vmem:[#allocation3 + $0x98] sm:$0x3] %vm70, 0.0
  %90 = vst.msk [vmem:[#allocation3 + $0xa0] sm:$0xff] %vm68, 0.0
  %91 = vst.msk [vmem:[#allocation3 + $0xa8] sm:$0x3] %vm70, 0.0
  %92 = vst.msk [vmem:[#allocation3 + $0xb0] sm:$0xff] %vm68, 0.0
  %93 = vst.msk [vmem:[#allocation3 + $0xb8] sm:$0x3] %vm70, 0.0
  %94 = vst.msk [vmem:[#allocation3 + $0xc0] sm:$0xff] %vm68, 0.0
  %95 = vst.msk [vmem:[#allocation3 + $0xc8] sm:$0x3] %vm70, 0.0
  %96 = vst.msk [vmem:[#allocation3 + $0xd0] sm:$0xff] %vm68, 0.0
  %97 = vst.msk [vmem:[#allocation3 + $0xd8] sm:$0x3] %vm70, 0.0
  %98 = vst.msk [vmem:[#allocation3 + $0xe0] sm:$0xff] %vm68, 0.0
  %99 = vst.msk [vmem:[#allocation3 + $0xe8] sm:$0x3] %vm70, 0.0
  %100 = vst.msk [vmem:[#allocation3 + $0xf0] sm:$0xff] %vm68, 0.0
  %101 = vst.msk [vmem:[#allocation3 + $0xf8] sm:$0x3] %vm70, 0.0
  %102 = vst.msk [vmem:[#allocation3 + $0x100] sm:$0xff] %vm68, 0.0
  %103 = vst.msk [vmem:[#allocation3 + $0x108] sm:$0x3] %vm70, 0.0
  %104 = vst.msk [vmem:[#allocation3 + $0x110] sm:$0xff] %vm68, 0.0
  %105 = vst.msk [vmem:[#allocation3 + $0x118] sm:$0x3] %vm70, 0.0
  %106 = vst.msk [vmem:[#allocation3 + $0x120] sm:$0xff] %vm68, 0.0
  %107 = vst.msk [vmem:[#allocation3 + $0x128] sm:$0x3] %vm70, 0.0
  %108 = vst.msk [vmem:[#allocation3 + $0x130] sm:$0xff] %vm68, 0.0
  %109 = vst.msk [vmem:[#allocation3 + $0x138] sm:$0x3] %vm70, 0.0
  %v110 = vld [vmem:[%s0] sm:$0xff]
  %v111 = vld [vmem:[%s0 + $0x8] sm:$0xff]
  %v112 = vld [vmem:[%s0 + $0x10] sm:$0xff]
  %v113 = vld [vmem:[%s0 + $0x18] sm:$0xff]
  %v114 = vld [vmem:[%s0 + $0x20] sm:$0xff]
  %v115 = vld [vmem:[%s0 + $0x28] sm:$0xff]
  %v116 = vld [vmem:[%s0 + $0x30] sm:$0xff]
  %v117 = vld [vmem:[%s0 + $0x38] sm:$0xff]
  %v118 = vld [vmem:[%s0 + $0x40] sm:$0xff]
  %v119 = vld [vmem:[%s0 + $0x48] sm:$0xff]
  %v120 = vld [vmem:[%s0 + $0x50] sm:$0xff]
  %v121 = vld [vmem:[%s0 + $0x58] sm:$0xff]
  %v122 = vld [vmem:[%s0 + $0x60] sm:$0xff]
  %v123 = vld [vmem:[%s0 + $0x68] sm:$0xff]
  %v124 = vld [vmem:[%s0 + $0x70] sm:$0xff]
  %v125 = vld [vmem:[%s0 + $0x78] sm:$0xff]
  %s126 = scalar_lea.vmem [#allocation2], 16
  %127 = vst.msk [vmem:[%s126 + $0x1] sm:$0xff] %vm26, %v110
  %128 = vst.msk [vmem:[%s126 + $0x11] sm:$0xff] %vm26, %v111
  %129 = vst.msk [vmem:[%s126 + $0x21] sm:$0xff] %vm26, %v112
  %130 = vst.msk [vmem:[%s126 + $0x31] sm:$0xff] %vm26, %v113
  %131 = vst.msk [vmem:[%s126 + $0x41] sm:$0xff] %vm26, %v114
  %132 = vst.msk [vmem:[%s126 + $0x51] sm:$0xff] %vm26, %v115
  %133 = vst.msk [vmem:[%s126 + $0x61] sm:$0xff] %vm26, %v116
  %134 = vst.msk [vmem:[%s126 + $0x71] sm:$0xff] %vm26, %v117
  %135 = vst.msk [vmem:[%s126 + $0xa1] sm:$0xff] %vm26, %v118
  %136 = vst.msk [vmem:[%s126 + $0xb1] sm:$0xff] %vm26, %v119
  %137 = vst.msk [vmem:[%s126 + $0xc1] sm:$0xff] %vm26, %v120
  %138 = vst.msk [vmem:[%s126 + $0xd1] sm:$0xff] %vm26, %v121
  %139 = vst.msk [vmem:[%s126 + $0xe1] sm:$0xff] %vm26, %v122
  %140 = vst.msk [vmem:[%s126 + $0xf1] sm:$0xff] %vm26, %v123
  %141 = vst.msk [vmem:[%s126 + $0x101] sm:$0xff] %vm26, %v124
  %142 = vst.msk [vmem:[%s126 + $0x111] sm:$0xff] %vm26, %v125
  %v143 = vld [vmem:[%s1] sm:$0xff]
  %v144 = vld [vmem:[%s1 + $0x8] sm:$0xff]
  %v145 = vld [vmem:[%s1 + $0x10] sm:$0xff]
  %v146 = vld [vmem:[%s1 + $0x18] sm:$0xff]
  %v147 = vld [vmem:[%s1 + $0x20] sm:$0xf]
  %v148 = vld [vmem:[%s2] sm:$0x1]
  %v149 = vld [vmem:[%s3] sm:$0x1]
  %v150 = vld [vmem:[#allocation2] sm:$0xff]
  %v151 = vld [vmem:[#allocation2 + $0x8] sm:$0x3]
  %v152 = vld [vmem:[#allocation2 + $0x10] sm:$0xff]
  %v153 = vld [vmem:[#allocation2 + $0x18] sm:$0x3]
  %v154 = vld [vmem:[#allocation2 + $0x20] sm:$0xff]
  %v155 = vld [vmem:[#allocation2 + $0x28] sm:$0x3]
  %v156 = vld [vmem:[#allocation2 + $0x30] sm:$0xff]
  %v157 = vld [vmem:[#allocation2 + $0x38] sm:$0x3]
  %v158 = vld [vmem:[#allocation2 + $0x40] sm:$0xff]
  %v159 = vld [vmem:[#allocation2 + $0x48] sm:$0x3]
  %v160 = vld [vmem:[#allocation2 + $0x50] sm:$0xff]
  %v161 = vld [vmem:[#allocation2 + $0x58] sm:$0x3]
  %v162 = vld [vmem:[#allocation2 + $0x60] sm:$0xff]
  %v163 = vld [vmem:[#allocation2 + $0x68] sm:$0x3]
  %v164 = vld [vmem:[#allocation2 + $0x70] sm:$0xff]
  %v165 = vld [vmem:[#allocation2 + $0x78] sm:$0x3]
  %v166 = vld [vmem:[#allocation2 + $0x80] sm:$0xff]
  %v167 = vld [vmem:[#allocation2 + $0x88] sm:$0x3]
  %v168 = vld [vmem:[#allocation2 + $0x90] sm:$0xff]
  %v169 = vld [vmem:[#allocation2 + $0x98] sm:$0x3]
  %v170 = vld [vmem:[#allocation2 + $0xa0] sm:$0xff]
  %v171 = vld [vmem:[#allocation2 + $0xa8] sm:$0x3]
  %v172 = vld [vmem:[#allocation2 + $0xb0] sm:$0xff]
  %v173 = vld [vmem:[#allocation2 + $0xb8] sm:$0x3]
  %v174 = vld [vmem:[#allocation2 + $0xc0] sm:$0xff]
  %v175 = vld [vmem:[#allocation2 + $0xc8] sm:$0x3]
  %v176 = vld [vmem:[#allocation2 + $0xd0] sm:$0xff]
  %v177 = vld [vmem:[#allocation2 + $0xd8] sm:$0x3]
  %v178 = vld [vmem:[#allocation2 + $0xe0] sm:$0xff]
  %v179 = vld [vmem:[#allocation2 + $0xe8] sm:$0x3]
  %v180 = vld [vmem:[#allocation2 + $0xf0] sm:$0xff]
  %v181 = vld [vmem:[#allocation2 + $0xf8] sm:$0x3]
  %v182 = vld [vmem:[#allocation2 + $0x100] sm:$0xff]
  %v183 = vld [vmem:[#allocation2 + $0x108] sm:$0x3]
  %v184 = vld [vmem:[#allocation2 + $0x110] sm:$0xff]
  %v185 = vld [vmem:[#allocation2 + $0x118] sm:$0x3]
  %v186 = vld [vmem:[#allocation2 + $0x120] sm:$0xff]
  %v187 = vld [vmem:[#allocation2 + $0x128] sm:$0x3]
  %v188 = vld [vmem:[#allocation2 + $0x130] sm:$0xff]
  %v189 = vld [vmem:[#allocation2 + $0x138] sm:$0x3]
  %vm222 = vcmask 1046528
  %v223 = vrot.slane %v150, 1
  %v224 = vrot.slane %v151, 1
  %v225 = vsel %vm222, %v223, %v224
  %v226 = vrot.slane %v152, 1
  %v227 = vrot.slane %v153, 1
  %v228 = vsel %vm222, %v226, %v227
  %v229 = vrot.slane %v154, 1
  %v230 = vrot.slane %v155, 1
  %v231 = vsel %vm222, %v229, %v230
  %v232 = vrot.slane %v156, 1
  %v233 = vrot.slane %v157, 1
  %v234 = vsel %vm222, %v232, %v233
  %v235 = vrot.slane %v158, 1
  %v236 = vrot.slane %v159, 1
  %v237 = vsel %vm222, %v235, %v236
  %v238 = vrot.slane %v160, 1
  %v239 = vrot.slane %v161, 1
  %v240 = vsel %vm222, %v238, %v239
  %v241 = vrot.slane %v162, 1
  %v242 = vrot.slane %v163, 1
  %v243 = vsel %vm222, %v241, %v242
  %v244 = vrot.slane %v164, 1
  %v245 = vrot.slane %v165, 1
  %v246 = vsel %vm222, %v244, %v245
  %v247 = vrot.slane %v170, 1
  %v248 = vrot.slane %v171, 1
  %v249 = vsel %vm222, %v247, %v248
  %v250 = vrot.slane %v172, 1
  %v251 = vrot.slane %v173, 1
  %v252 = vsel %vm222, %v250, %v251
  %v253 = vrot.slane %v174, 1
  %v254 = vrot.slane %v175, 1
  %v255 = vsel %vm222, %v253, %v254
  %v256 = vrot.slane %v176, 1
  %v257 = vrot.slane %v177, 1
  %v258 = vsel %vm222, %v256, %v257
  %v259 = vrot.slane %v178, 1
  %v260 = vrot.slane %v179, 1
  %v261 = vsel %vm222, %v259, %v260
  %v262 = vrot.slane %v180, 1
  %v263 = vrot.slane %v181, 1
  %v264 = vsel %vm222, %v262, %v263
  %v265 = vrot.slane %v182, 1
  %v266 = vrot.slane %v183, 1
  %v267 = vsel %vm222, %v265, %v266
  %v268 = vrot.slane %v184, 1
  %v269 = vrot.slane %v185, 1
  %v270 = vsel %vm222, %v268, %v269
  %vm271 = vcmask 1045504
  %v272 = vrot.slane %v150, 2
  %v273 = vrot.slane %v151, 2
  %v274 = vsel %vm271, %v272, %v273
  %v275 = vrot.slane %v152, 2
  %v276 = vrot.slane %v153, 2
  %v277 = vsel %vm271, %v275, %v276
  %v278 = vrot.slane %v154, 2
  %v279 = vrot.slane %v155, 2
  %v280 = vsel %vm271, %v278, %v279
  %v281 = vrot.slane %v156, 2
  %v282 = vrot.slane %v157, 2
  %v283 = vsel %vm271, %v281, %v282
  %v284 = vrot.slane %v158, 2
  %v285 = vrot.slane %v159, 2
  %v286 = vsel %vm271, %v284, %v285
  %v287 = vrot.slane %v160, 2
  %v288 = vrot.slane %v161, 2
  %v289 = vsel %vm271, %v287, %v288
  %v290 = vrot.slane %v162, 2
  %v291 = vrot.slane %v163, 2
  %v292 = vsel %vm271, %v290, %v291
  %v293 = vrot.slane %v164, 2
  %v294 = vrot.slane %v165, 2
  %v295 = vsel %vm271, %v293, %v294
  %v296 = vrot.slane %v170, 2
  %v297 = vrot.slane %v171, 2
  %v298 = vsel %vm271, %v296, %v297
  %v299 = vrot.slane %v172, 2
  %v300 = vrot.slane %v173, 2
  %v301 = vsel %vm271, %v299, %v300
  %v302 = vrot.slane %v174, 2
  %v303 = vrot.slane %v175, 2
  %v304 = vsel %vm271, %v302, %v303
  %v305 = vrot.slane %v176, 2
  %v306 = vrot.slane %v177, 2
  %v307 = vsel %vm271, %v305, %v306
  %v308 = vrot.slane %v178, 2
  %v309 = vrot.slane %v179, 2
  %v310 = vsel %vm271, %v308, %v309
  %v311 = vrot.slane %v180, 2
  %v312 = vrot.slane %v181, 2
  %v313 = vsel %vm271, %v311, %v312
  %v314 = vrot.slane %v182, 2
  %v315 = vrot.slane %v183, 2
  %v316 = vsel %vm271, %v314, %v315
  %v317 = vrot.slane %v184, 2
  %v318 = vrot.slane %v185, 2
  %v319 = vsel %vm271, %v317, %v318
  %v324 = vrot.slane %v166, 1
  %v325 = vrot.slane %v167, 1
  %v326 = vsel %vm222, %v324, %v325
  %v327 = vrot.slane %v186, 1
  %v328 = vrot.slane %v187, 1
  %v329 = vsel %vm222, %v327, %v328
  %v330 = vrot.slane %v166, 2
  %v331 = vrot.slane %v167, 2
  %v332 = vsel %vm271, %v330, %v331
  %v333 = vrot.slane %v186, 2
  %v334 = vrot.slane %v187, 2
  %v335 = vsel %vm271, %v333, %v334
  %v340 = vrot.slane %v168, 1
  %v341 = vrot.slane %v169, 1
  %v342 = vsel %vm222, %v340, %v341
  %v343 = vrot.slane %v188, 1
  %v344 = vrot.slane %v189, 1
  %v345 = vsel %vm222, %v343, %v344
  %v346 = vrot.slane %v168, 2
  %v347 = vrot.slane %v169, 2
  %v348 = vsel %vm271, %v346, %v347
  %v349 = vrot.slane %v188, 2
  %v350 = vrot.slane %v189, 2
  %v351 = vsel %vm271, %v349, %v350
  %352 = vrot.lane.b32.xlu0 %v225, 4
  %v353 = vpop.permute.xlu0 %352
  %354 = vrot.lane.b32.xlu0 %v228, 4
  %v355 = vpop.permute.xlu0 %354
  %356 = vrot.lane.b32.xlu0 %v231, 4
  %v357 = vpop.permute.xlu0 %356
  %358 = vrot.lane.b32.xlu0 %v234, 4
  %v359 = vpop.permute.xlu0 %358
  %360 = vrot.lane.b32.xlu0 %v237, 4
  %v361 = vpop.permute.xlu0 %360
  %362 = vrot.lane.b32.xlu0 %v240, 4
  %v363 = vpop.permute.xlu0 %362
  %364 = vrot.lane.b32.xlu0 %v243, 4
  %v365 = vpop.permute.xlu0 %364
  %366 = vrot.lane.b32.xlu0 %v246, 4
  %v367 = vpop.permute.xlu0 %366
  %368 = vrot.lane.b32.xlu0 %v249, 4
  %v369 = vpop.permute.xlu0 %368
  %370 = vrot.lane.b32.xlu0 %v252, 4
  %v371 = vpop.permute.xlu0 %370
  %372 = vrot.lane.b32.xlu0 %v255, 4
  %v373 = vpop.permute.xlu0 %372
  %374 = vrot.lane.b32.xlu0 %v258, 4
  %v375 = vpop.permute.xlu0 %374
  %376 = vrot.lane.b32.xlu0 %v261, 4
  %v377 = vpop.permute.xlu0 %376
  %378 = vrot.lane.b32.xlu0 %v264, 4
  %v379 = vpop.permute.xlu0 %378
  %380 = vrot.lane.b32.xlu0 %v267, 4
  %v381 = vpop.permute.xlu0 %380
  %382 = vrot.lane.b32.xlu0 %v270, 4
  %v383 = vpop.permute.xlu0 %382
  %400 = vrot.lane.b32.xlu0 %v274, 8
  %v401 = vpop.permute.xlu0 %400
  %402 = vrot.lane.b32.xlu0 %v277, 8
  %v403 = vpop.permute.xlu0 %402
  %404 = vrot.lane.b32.xlu0 %v280, 8
  %v405 = vpop.permute.xlu0 %404
  %406 = vrot.lane.b32.xlu0 %v283, 8
  %v407 = vpop.permute.xlu0 %406
  %408 = vrot.lane.b32.xlu0 %v286, 8
  %v409 = vpop.permute.xlu0 %408
  %410 = vrot.lane.b32.xlu0 %v289, 8
  %v411 = vpop.permute.xlu0 %410
  %412 = vrot.lane.b32.xlu0 %v292, 8
  %v413 = vpop.permute.xlu0 %412
  %414 = vrot.lane.b32.xlu0 %v295, 8
  %v415 = vpop.permute.xlu0 %414
  %416 = vrot.lane.b32.xlu0 %v298, 8
  %v417 = vpop.permute.xlu0 %416
  %418 = vrot.lane.b32.xlu0 %v301, 8
  %v419 = vpop.permute.xlu0 %418
  %420 = vrot.lane.b32.xlu0 %v304, 8
  %v421 = vpop.permute.xlu0 %420
  %422 = vrot.lane.b32.xlu0 %v307, 8
  %v423 = vpop.permute.xlu0 %422
  %424 = vrot.lane.b32.xlu0 %v310, 8
  %v425 = vpop.permute.xlu0 %424
  %426 = vrot.lane.b32.xlu0 %v313, 8
  %v427 = vpop.permute.xlu0 %426
  %428 = vrot.lane.b32.xlu0 %v316, 8
  %v429 = vpop.permute.xlu0 %428
  %430 = vrot.lane.b32.xlu0 %v319, 8
  %v431 = vpop.permute.xlu0 %430
  %448 = vrot.lane.b32.xlu0 %v152, 12
  %v449 = vpop.permute.xlu0 %448
  %450 = vrot.lane.b32.xlu0 %v154, 12
  %v451 = vpop.permute.xlu0 %450
  %452 = vrot.lane.b32.xlu0 %v156, 12
  %v453 = vpop.permute.xlu0 %452
  %454 = vrot.lane.b32.xlu0 %v158, 12
  %v455 = vpop.permute.xlu0 %454
  %456 = vrot.lane.b32.xlu0 %v160, 12
  %v457 = vpop.permute.xlu0 %456
  %458 = vrot.lane.b32.xlu0 %v162, 12
  %v459 = vpop.permute.xlu0 %458
  %460 = vrot.lane.b32.xlu0 %v164, 12
  %v461 = vpop.permute.xlu0 %460
  %462 = vrot.lane.b32.xlu0 %v166, 12
  %v463 = vpop.permute.xlu0 %462
  %464 = vrot.lane.b32.xlu0 %v172, 12
  %v465 = vpop.permute.xlu0 %464
  %466 = vrot.lane.b32.xlu0 %v174, 12
  %v467 = vpop.permute.xlu0 %466
  %468 = vrot.lane.b32.xlu0 %v176, 12
  %v469 = vpop.permute.xlu0 %468
  %470 = vrot.lane.b32.xlu0 %v178, 12
  %v471 = vpop.permute.xlu0 %470
  %472 = vrot.lane.b32.xlu0 %v180, 12
  %v473 = vpop.permute.xlu0 %472
  %474 = vrot.lane.b32.xlu0 %v182, 12
  %v475 = vpop.permute.xlu0 %474
  %476 = vrot.lane.b32.xlu0 %v184, 12
  %v477 = vpop.permute.xlu0 %476
  %478 = vrot.lane.b32.xlu0 %v186, 12
  %v479 = vpop.permute.xlu0 %478
  %496 = vrot.lane.b32.xlu0 %v228, 16
  %v497 = vpop.permute.xlu0 %496
  %498 = vrot.lane.b32.xlu0 %v231, 16
  %v499 = vpop.permute.xlu0 %498
  %500 = vrot.lane.b32.xlu0 %v234, 16
  %v501 = vpop.permute.xlu0 %500
  %502 = vrot.lane.b32.xlu0 %v237, 16
  %v503 = vpop.permute.xlu0 %502
  %504 = vrot.lane.b32.xlu0 %v240, 16
  %v505 = vpop.permute.xlu0 %504
  %506 = vrot.lane.b32.xlu0 %v243, 16
  %v507 = vpop.permute.xlu0 %506
  %508 = vrot.lane.b32.xlu0 %v246, 16
  %v509 = vpop.permute.xlu0 %508
  %510 = vrot.lane.b32.xlu0 %v326, 16
  %v511 = vpop.permute.xlu0 %510
  %512 = vrot.lane.b32.xlu0 %v252, 16
  %v513 = vpop.permute.xlu0 %512
  %514 = vrot.lane.b32.xlu0 %v255, 16
  %v515 = vpop.permute.xlu0 %514
  %516 = vrot.lane.b32.xlu0 %v258, 16
  %v517 = vpop.permute.xlu0 %516
  %518 = vrot.lane.b32.xlu0 %v261, 16
  %v519 = vpop.permute.xlu0 %518
  %520 = vrot.lane.b32.xlu0 %v264, 16
  %v521 = vpop.permute.xlu0 %520
  %522 = vrot.lane.b32.xlu0 %v267, 16
  %v523 = vpop.permute.xlu0 %522
  %524 = vrot.lane.b32.xlu0 %v270, 16
  %v525 = vpop.permute.xlu0 %524
  %526 = vrot.lane.b32.xlu0 %v329, 16
  %v527 = vpop.permute.xlu0 %526
  %544 = vrot.lane.b32.xlu0 %v277, 20
  %v545 = vpop.permute.xlu0 %544
  %546 = vrot.lane.b32.xlu0 %v280, 20
  %v547 = vpop.permute.xlu0 %546
  %548 = vrot.lane.b32.xlu0 %v283, 20
  %v549 = vpop.permute.xlu0 %548
  %550 = vrot.lane.b32.xlu0 %v286, 20
  %v551 = vpop.permute.xlu0 %550
  %552 = vrot.lane.b32.xlu0 %v289, 20
  %v553 = vpop.permute.xlu0 %552
  %554 = vrot.lane.b32.xlu0 %v292, 20
  %v555 = vpop.permute.xlu0 %554
  %556 = vrot.lane.b32.xlu0 %v295, 20
  %v557 = vpop.permute.xlu0 %556
  %558 = vrot.lane.b32.xlu0 %v332, 20
  %v559 = vpop.permute.xlu0 %558
  %560 = vrot.lane.b32.xlu0 %v301, 20
  %v561 = vpop.permute.xlu0 %560
  %562 = vrot.lane.b32.xlu0 %v304, 20
  %v563 = vpop.permute.xlu0 %562
  %564 = vrot.lane.b32.xlu0 %v307, 20
  %v565 = vpop.permute.xlu0 %564
  %566 = vrot.lane.b32.xlu0 %v310, 20
  %v567 = vpop.permute.xlu0 %566
  %568 = vrot.lane.b32.xlu0 %v313, 20
  %v569 = vpop.permute.xlu0 %568
  %570 = vrot.lane.b32.xlu0 %v316, 20
  %v571 = vpop.permute.xlu0 %570
  %572 = vrot.lane.b32.xlu0 %v319, 20
  %v573 = vpop.permute.xlu0 %572
  %574 = vrot.lane.b32.xlu0 %v335, 20
  %v575 = vpop.permute.xlu0 %574
  %592 = vrot.lane.b32.xlu0 %v154, 24
  %v593 = vpop.permute.xlu0 %592
  %594 = vrot.lane.b32.xlu0 %v156, 24
  %v595 = vpop.permute.xlu0 %594
  %596 = vrot.lane.b32.xlu0 %v158, 24
  %v597 = vpop.permute.xlu0 %596
  %598 = vrot.lane.b32.xlu0 %v160, 24
  %v599 = vpop.permute.xlu0 %598
  %600 = vrot.lane.b32.xlu0 %v162, 24
  %v601 = vpop.permute.xlu0 %600
  %602 = vrot.lane.b32.xlu0 %v164, 24
  %v603 = vpop.permute.xlu0 %602
  %604 = vrot.lane.b32.xlu0 %v166, 24
  %v605 = vpop.permute.xlu0 %604
  %606 = vrot.lane.b32.xlu0 %v168, 24
  %v607 = vpop.permute.xlu0 %606
  %608 = vrot.lane.b32.xlu0 %v174, 24
  %v609 = vpop.permute.xlu0 %608
  %610 = vrot.lane.b32.xlu0 %v176, 24
  %v611 = vpop.permute.xlu0 %610
  %612 = vrot.lane.b32.xlu0 %v178, 24
  %v613 = vpop.permute.xlu0 %612
  %614 = vrot.lane.b32.xlu0 %v180, 24
  %v615 = vpop.permute.xlu0 %614
  %616 = vrot.lane.b32.xlu0 %v182, 24
  %v617 = vpop.permute.xlu0 %616
  %618 = vrot.lane.b32.xlu0 %v184, 24
  %v619 = vpop.permute.xlu0 %618
  %620 = vrot.lane.b32.xlu0 %v186, 24
  %v621 = vpop.permute.xlu0 %620
  %622 = vrot.lane.b32.xlu0 %v188, 24
  %v623 = vpop.permute.xlu0 %622
  %640 = vrot.lane.b32.xlu0 %v231, 28
  %v641 = vpop.permute.xlu0 %640
  %642 = vrot.lane.b32.xlu0 %v234, 28
  %v643 = vpop.permute.xlu0 %642
  %644 = vrot.lane.b32.xlu0 %v237, 28
  %v645 = vpop.permute.xlu0 %644
  %646 = vrot.lane.b32.xlu0 %v240, 28
  %v647 = vpop.permute.xlu0 %646
  %648 = vrot.lane.b32.xlu0 %v243, 28
  %v649 = vpop.permute.xlu0 %648
  %650 = vrot.lane.b32.xlu0 %v246, 28
  %v651 = vpop.permute.xlu0 %650
  %652 = vrot.lane.b32.xlu0 %v326, 28
  %v653 = vpop.permute.xlu0 %652
  %654 = vrot.lane.b32.xlu0 %v342, 28
  %v655 = vpop.permute.xlu0 %654
  %656 = vrot.lane.b32.xlu0 %v255, 28
  %v657 = vpop.permute.xlu0 %656
  %658 = vrot.lane.b32.xlu0 %v258, 28
  %v659 = vpop.permute.xlu0 %658
  %660 = vrot.lane.b32.xlu0 %v261, 28
  %v661 = vpop.permute.xlu0 %660
  %662 = vrot.lane.b32.xlu0 %v264, 28
  %v663 = vpop.permute.xlu0 %662
  %664 = vrot.lane.b32.xlu0 %v267, 28
  %v665 = vpop.permute.xlu0 %664
  %666 = vrot.lane.b32.xlu0 %v270, 28
  %v667 = vpop.permute.xlu0 %666
  %668 = vrot.lane.b32.xlu0 %v329, 28
  %v669 = vpop.permute.xlu0 %668
  %670 = vrot.lane.b32.xlu0 %v345, 28
  %v671 = vpop.permute.xlu0 %670
  %688 = vrot.lane.b32.xlu0 %v280, 32
  %v689 = vpop.permute.xlu0 %688
  %690 = vrot.lane.b32.xlu0 %v283, 32
  %v691 = vpop.permute.xlu0 %690
  %692 = vrot.lane.b32.xlu0 %v286, 32
  %v693 = vpop.permute.xlu0 %692
  %694 = vrot.lane.b32.xlu0 %v289, 32
  %v695 = vpop.permute.xlu0 %694
  %696 = vrot.lane.b32.xlu0 %v292, 32
  %v697 = vpop.permute.xlu0 %696
  %698 = vrot.lane.b32.xlu0 %v295, 32
  %v699 = vpop.permute.xlu0 %698
  %700 = vrot.lane.b32.xlu0 %v332, 32
  %v701 = vpop.permute.xlu0 %700
  %702 = vrot.lane.b32.xlu0 %v348, 32
  %v703 = vpop.permute.xlu0 %702
  %704 = vrot.lane.b32.xlu0 %v304, 32
  %v705 = vpop.permute.xlu0 %704
  %706 = vrot.lane.b32.xlu0 %v307, 32
  %v707 = vpop.permute.xlu0 %706
  %708 = vrot.lane.b32.xlu0 %v310, 32
  %v709 = vpop.permute.xlu0 %708
  %710 = vrot.lane.b32.xlu0 %v313, 32
  %v711 = vpop.permute.xlu0 %710
  %712 = vrot.lane.b32.xlu0 %v316, 32
  %v713 = vpop.permute.xlu0 %712
  %714 = vrot.lane.b32.xlu0 %v319, 32
  %v715 = vpop.permute.xlu0 %714
  %716 = vrot.lane.b32.xlu0 %v335, 32
  %v717 = vpop.permute.xlu0 %716
  %718 = vrot.lane.b32.xlu0 %v351, 32
  %v719 = vpop.permute.xlu0 %718
  %v736 = vsel %vm26, %v150, %v353
  %v737 = vsel %vm26, %v152, %v355
  %v738 = vsel %vm26, %v154, %v357
  %v739 = vsel %vm26, %v156, %v359
  %v740 = vsel %vm26, %v158, %v361
  %v741 = vsel %vm26, %v160, %v363
  %v742 = vsel %vm26, %v162, %v365
  %v743 = vsel %vm26, %v164, %v367
  %v744 = vsel %vm26, %v170, %v369
  %v745 = vsel %vm26, %v172, %v371
  %v746 = vsel %vm26, %v174, %v373
  %v747 = vsel %vm26, %v176, %v375
  %v748 = vsel %vm26, %v178, %v377
  %v749 = vsel %vm26, %v180, %v379
  %v750 = vsel %vm26, %v182, %v381
  %v751 = vsel %vm26, %v184, %v383
  %vm752 = vcmask 64512
  %v753 = vsel %vm752, %v736, %v401
  %v754 = vsel %vm752, %v737, %v403
  %v755 = vsel %vm752, %v738, %v405
  %v756 = vsel %vm752, %v739, %v407
  %v757 = vsel %vm752, %v740, %v409
  %v758 = vsel %vm752, %v741, %v411
  %v759 = vsel %vm752, %v742, %v413
  %v760 = vsel %vm752, %v743, %v415
  %v761 = vsel %vm752, %v744, %v417
  %v762 = vsel %vm752, %v745, %v419
  %v763 = vsel %vm752, %v746, %v421
  %v764 = vsel %vm752, %v747, %v423
  %v765 = vsel %vm752, %v748, %v425
  %v766 = vsel %vm752, %v749, %v427
  %v767 = vsel %vm752, %v750, %v429
  %v768 = vsel %vm752, %v751, %v431
  %vm769 = vcmask 97280
  %v770 = vsel %vm769, %v753, %v449
  %v771 = vsel %vm769, %v754, %v451
  %v772 = vsel %vm769, %v755, %v453
  %v773 = vsel %vm769, %v756, %v455
  %v774 = vsel %vm769, %v757, %v457
  %v775 = vsel %vm769, %v758, %v459
  %v776 = vsel %vm769, %v759, %v461
  %v777 = vsel %vm769, %v760, %v463
  %v778 = vsel %vm769, %v761, %v465
  %v779 = vsel %vm769, %v762, %v467
  %v780 = vsel %vm769, %v763, %v469
  %v781 = vsel %vm769, %v764, %v471
  %v782 = vsel %vm769, %v765, %v473
  %v783 = vsel %vm769, %v766, %v475
  %v784 = vsel %vm769, %v767, %v477
  %v785 = vsel %vm769, %v768, %v479
  %vm786 = vcmask 130048
  %v787 = vsel %vm786, %v770, %v497
  %v788 = vsel %vm786, %v771, %v499
  %v789 = vsel %vm786, %v772, %v501
  %v790 = vsel %vm786, %v773, %v503
  %v791 = vsel %vm786, %v774, %v505
  %v792 = vsel %vm786, %v775, %v507
  %v793 = vsel %vm786, %v776, %v509
  %v794 = vsel %vm786, %v777, %v511
  %v795 = vsel %vm786, %v778, %v513
  %v796 = vsel %vm786, %v779, %v515
  %v797 = vsel %vm786, %v780, %v517
  %v798 = vsel %vm786, %v781, %v519
  %v799 = vsel %vm786, %v782, %v521
  %v800 = vsel %vm786, %v783, %v523
  %v801 = vsel %vm786, %v784, %v525
  %v802 = vsel %vm786, %v785, %v527
  %vm803 = vcmask 162816
  %v804 = vsel %vm803, %v787, %v545
  %v805 = vsel %vm803, %v788, %v547
  %v806 = vsel %vm803, %v789, %v549
  %v807 = vsel %vm803, %v790, %v551
  %v808 = vsel %vm803, %v791, %v553
  %v809 = vsel %vm803, %v792, %v555
  %v810 = vsel %vm803, %v793, %v557
  %v811 = vsel %vm803, %v794, %v559
  %v812 = vsel %vm803, %v795, %v561
  %v813 = vsel %vm803, %v796, %v563
  %v814 = vsel %vm803, %v797, %v565
  %v815 = vsel %vm803, %v798, %v567
  %v816 = vsel %vm803, %v799, %v569
  %v817 = vsel %vm803, %v800, %v571
  %v818 = vsel %vm803, %v801, %v573
  %v819 = vsel %vm803, %v802, %v575
  %vm820 = vcmask 195584
  %v821 = vsel %vm820, %v804, %v593
  %v822 = vsel %vm820, %v805, %v595
  %v823 = vsel %vm820, %v806, %v597
  %v824 = vsel %vm820, %v807, %v599
  %v825 = vsel %vm820, %v808, %v601
  %v826 = vsel %vm820, %v809, %v603
  %v827 = vsel %vm820, %v810, %v605
  %v828 = vsel %vm820, %v811, %v607
  %v829 = vsel %vm820, %v812, %v609
  %v830 = vsel %vm820, %v813, %v611
  %v831 = vsel %vm820, %v814, %v613
  %v832 = vsel %vm820, %v815, %v615
  %v833 = vsel %vm820, %v816, %v617
  %v834 = vsel %vm820, %v817, %v619
  %v835 = vsel %vm820, %v818, %v621
  %v836 = vsel %vm820, %v819, %v623
  %vm837 = vcmask 228352
  %v838 = vsel %vm837, %v821, %v641
  %v839 = vsel %vm837, %v822, %v643
  %v840 = vsel %vm837, %v823, %v645
  %v841 = vsel %vm837, %v824, %v647
  %v842 = vsel %vm837, %v825, %v649
  %v843 = vsel %vm837, %v826, %v651
  %v844 = vsel %vm837, %v827, %v653
  %v845 = vsel %vm837, %v828, %v655
  %v846 = vsel %vm837, %v829, %v657
  %v847 = vsel %vm837, %v830, %v659
  %v848 = vsel %vm837, %v831, %v661
  %v849 = vsel %vm837, %v832, %v663
  %v850 = vsel %vm837, %v833, %v665
  %v851 = vsel %vm837, %v834, %v667
  %v852 = vsel %vm837, %v835, %v669
  %v853 = vsel %vm837, %v836, %v671
  %v854 = vsel %vm68, %v838, %v689
  %v855 = vsel %vm68, %v839, %v691
  %v856 = vsel %vm68, %v840, %v693
  %v857 = vsel %vm68, %v841, %v695
  %v858 = vsel %vm68, %v842, %v697
  %v859 = vsel %vm68, %v843, %v699
  %v860 = vsel %vm68, %v844, %v701
  %v861 = vsel %vm68, %v845, %v703
  %v862 = vsel %vm68, %v846, %v705
  %v863 = vsel %vm68, %v847, %v707
  %v864 = vsel %vm68, %v848, %v709
  %v865 = vsel %vm68, %v849, %v711
  %v866 = vsel %vm68, %v850, %v713
  %v867 = vsel %vm68, %v851, %v715
  %v868 = vsel %vm68, %v852, %v717
  %v869 = vsel %vm68, %v853, %v719
  %vm870 = vcmask 293888
  %v872 = vsel %vm870, %v854, 0
  %v875 = vsel %vm870, %v855, 0
  %v878 = vsel %vm870, %v856, 0
  %v881 = vsel %vm870, %v857, 0
  %v884 = vsel %vm870, %v858, 0
  %v887 = vsel %vm870, %v859, 0
  %v890 = vsel %vm870, %v860, 0
  %v893 = vsel %vm870, %v861, 0
  %v896 = vsel %vm870, %v862, 0
  %v899 = vsel %vm870, %v863, 0
  %v902 = vsel %vm870, %v864, 0
  %v905 = vsel %vm870, %v865, 0
  %v908 = vsel %vm870, %v866, 0
  %v911 = vsel %vm870, %v867, 0
  %v914 = vsel %vm870, %v868, 0
  %v917 = vsel %vm870, %v869, 0
  %vm919 = vcmask 1043456
  %v921 = vsel %vm919, %v147, 0
  %923 = vmatprep.subr.mxu0 0.0
  %924 = vmatpush1.msra.mxu0 0.0
  %925 = vmatprep.subr.mxu0 0.0
  %926 = vmatpush1.msra.mxu0 0.0
  %927 = vmatprep.subr.mxu0 0.0
  %928 = vmatpush1.msra.mxu0 0.0
  %929 = vmatprep.subr.mxu0 0.0
  %930 = vmatpush1.msra.mxu0 0.0
  %931 = vmatprep.subr.mxu0 0.0
  %932 = vmatpush1.msra.mxu0 0.0
  %933 = vmatprep.subr.mxu0 0.0
  %934 = vmatpush1.msra.mxu0 0.0
  %935 = vmatprep.subr.mxu0 0.0
  %936 = vmatpush1.msra.mxu0 0.0
  %937 = vmatprep.subr.mxu0 0.0
  %938 = vmatpush1.msra.mxu0 0.0
  %939 = vmatprep.subr.mxu0 0.0
  %940 = vmatpush1.msra.mxu0 0.0
  %941 = vmatprep.subr.mxu0 0.0
  %942 = vmatpush1.msra.mxu0 0.0
  %943 = vmatprep.subr.mxu0 0.0
  %944 = vmatpush1.msra.mxu0 0.0
  %945 = vmatprep.subr.mxu0 0.0
  %946 = vmatpush1.msra.mxu0 %v921
  %947 = vmatprep.subr.mxu0 0.0
  %948 = vmatpush1.msra.mxu0 %v146
  %949 = vmatprep.subr.mxu0 0.0
  %950 = vmatpush1.msra.mxu0 %v145
  %951 = vmatprep.subr.mxu0 0.0
  %952 = vmatpush1.msra.mxu0 %v144
  %953 = vmatprep.subr.mxu0 0.0
  %954 = vmatpush1.msra.mxu0 %v143
  %955 = vmatprep.subr.mxu0 0.0
  %956 = vmatpush2.msra.mxu0 0.0
  %957 = vmatprep.subr.mxu0 0.0
  %958 = vmatpush2.msra.mxu0 0.0
  %959 = vmatprep.subr.mxu0 0.0
  %960 = vmatpush2.msra.mxu0 0.0
  %961 = vmatprep.subr.mxu0 0.0
  %962 = vmatpush2.msra.mxu0 0.0
  %963 = vmatprep.subr.mxu0 0.0
  %964 = vmatpush2.msra.mxu0 0.0
  %965 = vmatprep.subr.mxu0 0.0
  %966 = vmatpush2.msra.mxu0 0.0
  %967 = vmatprep.subr.mxu0 0.0
  %968 = vmatpush2.msra.mxu0 0.0
  %969 = vmatprep.subr.mxu0 0.0
  %970 = vmatpush2.msra.mxu0 0.0
  %971 = vmatprep.subr.mxu0 0.0
  %972 = vmatpush2.msra.mxu0 0.0
  %973 = vmatprep.subr.mxu0 0.0
  %974 = vmatpush2.msra.mxu0 0.0
  %975 = vmatprep.subr.mxu0 0.0
  %976 = vmatpush2.msra.mxu0 0.0
  %977 = vmatprep.subr.mxu0 0.0
  %978 = vmatpush2.msra.mxu0 0.0
  %979 = vmatprep.subr.mxu0 0.0
  %980 = vmatpush2.msra.mxu0 0.0
  %981 = vmatprep.subr.mxu0 0.0
  %982 = vmatpush2.msra.mxu0 0.0
  %983 = vmatprep.subr.mxu0 0.0
  %984 = vmatpush2.msra.mxu0 0.0
  %985 = vmatprep.subr.mxu0 0.0
  %986 = vmatpush2.msra.mxu0 0.0
  %987 = vmatprep.mubr.f32.mxu0 0.0
  %988 = vmatmul.mubr.f32.gmra.mxu0 %v872
  %v989 = vpop.f32.mrf.mxu0
  %v990 = vadd.f32 0.0, %v989
  %v991 = vpop.f32.mrf.mxu0
  %992 = vmatprep.mubr.f32.mxu0 0.0
  %993 = vmatmul.mubr.f32.gmra.mxu0 %v875
  %v994 = vpop.f32.mrf.mxu0
  %v995 = vadd.f32 0.0, %v994
  %v996 = vpop.f32.mrf.mxu0
  %997 = vmatprep.mubr.f32.mxu0 0.0
  %998 = vmatmul.mubr.f32.gmra.mxu0 %v878
  %v999 = vpop.f32.mrf.mxu0
  %v1000 = vadd.f32 0.0, %v999
  %v1001 = vpop.f32.mrf.mxu0
  %1002 = vmatprep.mubr.f32.mxu0 0.0
  %1003 = vmatmul.mubr.f32.gmra.mxu0 %v881
  %v1004 = vpop.f32.mrf.mxu0
  %v1005 = vadd.f32 0.0, %v1004
  %v1006 = vpop.f32.mrf.mxu0
  %1007 = vmatprep.mubr.f32.mxu0 0.0
  %1008 = vmatmul.mubr.f32.gmra.mxu0 %v884
  %v1009 = vpop.f32.mrf.mxu0
  %v1010 = vadd.f32 0.0, %v1009
  %v1011 = vpop.f32.mrf.mxu0
  %1012 = vmatprep.mubr.f32.mxu0 0.0
  %1013 = vmatmul.mubr.f32.gmra.mxu0 %v887
  %v1014 = vpop.f32.mrf.mxu0
  %v1015 = vadd.f32 0.0, %v1014
  %v1016 = vpop.f32.mrf.mxu0
  %1017 = vmatprep.mubr.f32.mxu0 0.0
  %1018 = vmatmul.mubr.f32.gmra.mxu0 %v890
  %v1019 = vpop.f32.mrf.mxu0
  %v1020 = vadd.f32 0.0, %v1019
  %v1021 = vpop.f32.mrf.mxu0
  %1022 = vmatprep.mubr.f32.mxu0 0.0
  %1023 = vmatmul.mubr.f32.gmra.mxu0 %v893
  %v1024 = vpop.f32.mrf.mxu0
  %v1025 = vadd.f32 0.0, %v1024
  %v1026 = vpop.f32.mrf.mxu0
  %1027 = vmatprep.mubr.f32.mxu0 0.0
  %1028 = vmatmul.mubr.f32.gmra.mxu0 %v896
  %v1029 = vpop.f32.mrf.mxu0
  %v1030 = vadd.f32 0.0, %v1029
  %v1031 = vpop.f32.mrf.mxu0
  %1032 = vmatprep.mubr.f32.mxu0 0.0
  %1033 = vmatmul.mubr.f32.gmra.mxu0 %v899
  %v1034 = vpop.f32.mrf.mxu0
  %v1035 = vadd.f32 0.0, %v1034
  %v1036 = vpop.f32.mrf.mxu0
  %1037 = vmatprep.mubr.f32.mxu0 0.0
  %1038 = vmatmul.mubr.f32.gmra.mxu0 %v902
  %v1039 = vpop.f32.mrf.mxu0
  %v1040 = vadd.f32 0.0, %v1039
  %v1041 = vpop.f32.mrf.mxu0
  %1042 = vmatprep.mubr.f32.mxu0 0.0
  %1043 = vmatmul.mubr.f32.gmra.mxu0 %v905
  %v1044 = vpop.f32.mrf.mxu0
  %v1045 = vadd.f32 0.0, %v1044
  %v1046 = vpop.f32.mrf.mxu0
  %1047 = vmatprep.mubr.f32.mxu0 0.0
  %1048 = vmatmul.mubr.f32.gmra.mxu0 %v908
  %v1049 = vpop.f32.mrf.mxu0
  %v1050 = vadd.f32 0.0, %v1049
  %v1051 = vpop.f32.mrf.mxu0
  %1052 = vmatprep.mubr.f32.mxu0 0.0
  %1053 = vmatmul.mubr.f32.gmra.mxu0 %v911
  %v1054 = vpop.f32.mrf.mxu0
  %v1055 = vadd.f32 0.0, %v1054
  %v1056 = vpop.f32.mrf.mxu0
  %1057 = vmatprep.mubr.f32.mxu0 0.0
  %1058 = vmatmul.mubr.f32.gmra.mxu0 %v914
  %v1059 = vpop.f32.mrf.mxu0
  %v1060 = vadd.f32 0.0, %v1059
  %v1061 = vpop.f32.mrf.mxu0
  %1062 = vmatprep.mubr.f32.mxu0 0.0
  %1063 = vmatmul.mubr.f32.gmra.mxu0 %v917
  %v1064 = vpop.f32.mrf.mxu0
  %v1065 = vadd.f32 0.0, %v1064
  %v1066 = vpop.f32.mrf.mxu0
  %1067 = vdwg.mxu0
  %v1069 = vlaneseq
  %v1070 = vshrl.u32 %v1069, 7
  %v1071 = vsub.s32 0, %v1070
  %v1072 = vrot.slane %v148, %v1071
  %v1074 = vmul.f32 %v990, %v1072
  %v1075 = vmul.f32 %v995, %v1072
  %v1076 = vmul.f32 %v1000, %v1072
  %v1077 = vmul.f32 %v1005, %v1072
  %v1078 = vmul.f32 %v1010, %v1072
  %v1079 = vmul.f32 %v1015, %v1072
  %v1080 = vmul.f32 %v1020, %v1072
  %v1081 = vmul.f32 %v1025, %v1072
  %v1082 = vmul.f32 %v1030, %v1072
  %v1083 = vmul.f32 %v1035, %v1072
  %v1084 = vmul.f32 %v1040, %v1072
  %v1085 = vmul.f32 %v1045, %v1072
  %v1086 = vmul.f32 %v1050, %v1072
  %v1087 = vmul.f32 %v1055, %v1072
  %v1088 = vmul.f32 %v1060, %v1072
  %v1089 = vmul.f32 %v1065, %v1072
  %v1091 = vlaneseq
  %v1092 = vshrl.u32 %v1091, 7
  %v1093 = vsub.s32 0, %v1092
  %v1094 = vrot.slane %v149, %v1093
  %v1096 = vadd.f32 %v1074, %v1094
  %v1097 = vadd.f32 %v1075, %v1094
  %v1098 = vadd.f32 %v1076, %v1094
  %v1099 = vadd.f32 %v1077, %v1094
  %v1100 = vadd.f32 %v1078, %v1094
  %v1101 = vadd.f32 %v1079, %v1094
  %v1102 = vadd.f32 %v1080, %v1094
  %v1103 = vadd.f32 %v1081, %v1094
  %v1104 = vadd.f32 %v1082, %v1094
  %v1105 = vadd.f32 %v1083, %v1094
  %v1106 = vadd.f32 %v1084, %v1094
  %v1107 = vadd.f32 %v1085, %v1094
  %v1108 = vadd.f32 %v1086, %v1094
  %v1109 = vadd.f32 %v1087, %v1094
  %v1110 = vadd.f32 %v1088, %v1094
  %v1111 = vadd.f32 %v1089, %v1094
  %v1112 = vmax.f32 %v1096, 0.0
  %v1113 = vmax.f32 %v1097, 0.0
  %v1114 = vmax.f32 %v1098, 0.0
  %v1115 = vmax.f32 %v1099, 0.0
  %v1116 = vmax.f32 %v1100, 0.0
  %v1117 = vmax.f32 %v1101, 0.0
  %v1118 = vmax.f32 %v1102, 0.0
  %v1119 = vmax.f32 %v1103, 0.0
  %v1120 = vmax.f32 %v1104, 0.0
  %v1121 = vmax.f32 %v1105, 0.0
  %v1122 = vmax.f32 %v1106, 0.0
  %v1123 = vmax.f32 %v1107, 0.0
  %v1124 = vmax.f32 %v1108, 0.0
  %v1125 = vmax.f32 %v1109, 0.0
  %v1126 = vmax.f32 %v1110, 0.0
  %v1127 = vmax.f32 %v1111, 0.0
  %s1128 = scalar_lea.vmem [#allocation3], 16
  %1129 = vst.msk [vmem:[%s1128 + $0x1] sm:$0xff] %vm68, %v1112
  %1130 = vst.msk [vmem:[%s1128 + $0x11] sm:$0xff] %vm68, %v1113
  %1131 = vst.msk [vmem:[%s1128 + $0x21] sm:$0xff] %vm68, %v1114
  %1132 = vst.msk [vmem:[%s1128 + $0x31] sm:$0xff] %vm68, %v1115
  %1133 = vst.msk [vmem:[%s1128 + $0x41] sm:$0xff] %vm68, %v1116
  %1134 = vst.msk [vmem:[%s1128 + $0x51] sm:$0xff] %vm68, %v1117
  %1135 = vst.msk [vmem:[%s1128 + $0x61] sm:$0xff] %vm68, %v1118
  %1136 = vst.msk [vmem:[%s1128 + $0x71] sm:$0xff] %vm68, %v1119
  %1137 = vst.msk [vmem:[%s1128 + $0xa1] sm:$0xff] %vm68, %v1120
  %1138 = vst.msk [vmem:[%s1128 + $0xb1] sm:$0xff] %vm68, %v1121
  %1139 = vst.msk [vmem:[%s1128 + $0xc1] sm:$0xff] %vm68, %v1122
  %1140 = vst.msk [vmem:[%s1128 + $0xd1] sm:$0xff] %vm68, %v1123
  %1141 = vst.msk [vmem:[%s1128 + $0xe1] sm:$0xff] %vm68, %v1124
  %1142 = vst.msk [vmem:[%s1128 + $0xf1] sm:$0xff] %vm68, %v1125
  %1143 = vst.msk [vmem:[%s1128 + $0x101] sm:$0xff] %vm68, %v1126
  %1144 = vst.msk [vmem:[%s1128 + $0x111] sm:$0xff] %vm68, %v1127
  %v1145 = vld [vmem:[%s4] sm:$0xff]
  %v1146 = vld [vmem:[%s4 + $0x8] sm:$0xff]
  %v1147 = vld [vmem:[%s4 + $0x10] sm:$0xff]
  %v1148 = vld [vmem:[%s4 + $0x18] sm:$0xff]
  %v1149 = vld [vmem:[%s4 + $0x20] sm:$0xff]
  %v1150 = vld [vmem:[%s4 + $0x28] sm:$0xff]
  %v1151 = vld [vmem:[%s4 + $0x30] sm:$0xff]
  %v1152 = vld [vmem:[%s4 + $0x38] sm:$0xff]
  %v1153 = vld [vmem:[%s4 + $0x40] sm:$0xff]
  %v1154 = vld [vmem:[%s4 + $0x48] sm:$0xff]
  %v1155 = vld [vmem:[%s4 + $0x50] sm:$0xff]
  %v1156 = vld [vmem:[%s4 + $0x58] sm:$0xff]
  %v1157 = vld [vmem:[%s4 + $0x60] sm:$0xff]
  %v1158 = vld [vmem:[%s4 + $0x68] sm:$0xff]
  %v1159 = vld [vmem:[%s4 + $0x70] sm:$0xff]
  %v1160 = vld [vmem:[%s4 + $0x78] sm:$0xff]
  %v1161 = vld [vmem:[%s4 + $0x80] sm:$0xff]
  %v1162 = vld [vmem:[%s4 + $0x88] sm:$0xff]
  %v1163 = vld [vmem:[%s4 + $0x90] sm:$0xff]
  %v1164 = vld [vmem:[%s4 + $0x98] sm:$0xff]
  %v1165 = vld [vmem:[%s4 + $0xa0] sm:$0xff]
  %v1166 = vld [vmem:[%s4 + $0xa8] sm:$0xff]
  %v1167 = vld [vmem:[%s4 + $0xb0] sm:$0xff]
  %v1168 = vld [vmem:[%s4 + $0xb8] sm:$0xff]
  %v1169 = vld [vmem:[%s4 + $0xc0] sm:$0xff]
  %v1170 = vld [vmem:[%s4 + $0xc8] sm:$0xff]
  %v1171 = vld [vmem:[%s4 + $0xd0] sm:$0xff]
  %v1172 = vld [vmem:[%s4 + $0xd8] sm:$0xff]
  %v1173 = vld [vmem:[%s4 + $0xe0] sm:$0xff]
  %v1174 = vld [vmem:[%s4 + $0xe8] sm:$0xff]
  %v1175 = vld [vmem:[%s4 + $0xf0] sm:$0xff]
  %v1176 = vld [vmem:[%s4 + $0xf8] sm:$0xff]
  %v1177 = vld [vmem:[%s4 + $0x100] sm:$0xff]
  %v1178 = vld [vmem:[%s4 + $0x108] sm:$0xff]
  %v1179 = vld [vmem:[%s4 + $0x110] sm:$0xff]
  %v1180 = vld [vmem:[%s4 + $0x118] sm:$0xff]
  %v1181 = vld [vmem:[%s5] sm:$0x1]
  %v1182 = vld [vmem:[%s6] sm:$0x1]
  %v1183 = vld [vmem:[#allocation3] sm:$0xff]
  %v1184 = vld [vmem:[#allocation3 + $0x8] sm:$0x3]
  %v1185 = vld [vmem:[#allocation3 + $0x10] sm:$0xff]
  %v1186 = vld [vmem:[#allocation3 + $0x18] sm:$0x3]
  %v1187 = vld [vmem:[#allocation3 + $0x20] sm:$0xff]
  %v1188 = vld [vmem:[#allocation3 + $0x28] sm:$0x3]
  %v1189 = vld [vmem:[#allocation3 + $0x30] sm:$0xff]
  %v1190 = vld [vmem:[#allocation3 + $0x38] sm:$0x3]
  %v1191 = vld [vmem:[#allocation3 + $0x40] sm:$0xff]
  %v1192 = vld [vmem:[#allocation3 + $0x48] sm:$0x3]
  %v1193 = vld [vmem:[#allocation3 + $0x50] sm:$0xff]
  %v1194 = vld [vmem:[#allocation3 + $0x58] sm:$0x3]
  %v1195 = vld [vmem:[#allocation3 + $0x60] sm:$0xff]
  %v1196 = vld [vmem:[#allocation3 + $0x68] sm:$0x3]
  %v1197 = vld [vmem:[#allocation3 + $0x70] sm:$0xff]
  %v1198 = vld [vmem:[#allocation3 + $0x78] sm:$0x3]
  %v1199 = vld [vmem:[#allocation3 + $0x80] sm:$0xff]
  %v1200 = vld [vmem:[#allocation3 + $0x88] sm:$0x3]
  %v1201 = vld [vmem:[#allocation3 + $0x90] sm:$0xff]
  %v1202 = vld [vmem:[#allocation3 + $0x98] sm:$0x3]
  %v1203 = vld [vmem:[#allocation3 + $0xa0] sm:$0xff]
  %v1204 = vld [vmem:[#allocation3 + $0xa8] sm:$0x3]
  %v1205 = vld [vmem:[#allocation3 + $0xb0] sm:$0xff]
  %v1206 = vld [vmem:[#allocation3 + $0xb8] sm:$0x3]
  %v1207 = vld [vmem:[#allocation3 + $0xc0] sm:$0xff]
  %v1208 = vld [vmem:[#allocation3 + $0xc8] sm:$0x3]
  %v1209 = vld [vmem:[#allocation3 + $0xd0] sm:$0xff]
  %v1210 = vld [vmem:[#allocation3 + $0xd8] sm:$0x3]
  %v1211 = vld [vmem:[#allocation3 + $0xe0] sm:$0xff]
  %v1212 = vld [vmem:[#allocation3 + $0xe8] sm:$0x3]
  %v1213 = vld [vmem:[#allocation3 + $0xf0] sm:$0xff]
  %v1214 = vld [vmem:[#allocation3 + $0xf8] sm:$0x3]
  %v1215 = vld [vmem:[#allocation3 + $0x100] sm:$0xff]
  %v1216 = vld [vmem:[#allocation3 + $0x108] sm:$0x3]
  %v1217 = vld [vmem:[#allocation3 + $0x110] sm:$0xff]
  %v1218 = vld [vmem:[#allocation3 + $0x118] sm:$0x3]
  %v1219 = vld [vmem:[#allocation3 + $0x120] sm:$0xff]
  %v1220 = vld [vmem:[#allocation3 + $0x128] sm:$0x3]
  %v1221 = vld [vmem:[#allocation3 + $0x130] sm:$0xff]
  %v1222 = vld [vmem:[#allocation3 + $0x138] sm:$0x3]
  %v1255 = vrot.slane %v1183, 1
  %v1256 = vrot.slane %v1184, 1
  %v1257 = vsel %vm222, %v1255, %v1256
  %v1258 = vrot.slane %v1185, 1
  %v1259 = vrot.slane %v1186, 1
  %v1260 = vsel %vm222, %v1258, %v1259
  %v1261 = vrot.slane %v1187, 1
  %v1262 = vrot.slane %v1188, 1
  %v1263 = vsel %vm222, %v1261, %v1262
  %v1264 = vrot.slane %v1189, 1
  %v1265 = vrot.slane %v1190, 1
  %v1266 = vsel %vm222, %v1264, %v1265
  %v1267 = vrot.slane %v1191, 1
  %v1268 = vrot.slane %v1192, 1
  %v1269 = vsel %vm222, %v1267, %v1268
  %v1270 = vrot.slane %v1193, 1
  %v1271 = vrot.slane %v1194, 1
  %v1272 = vsel %vm222, %v1270, %v1271
  %v1273 = vrot.slane %v1195, 1
  %v1274 = vrot.slane %v1196, 1
  %v1275 = vsel %vm222, %v1273, %v1274
  %v1276 = vrot.slane %v1197, 1
  %v1277 = vrot.slane %v1198, 1
  %v1278 = vsel %vm222, %v1276, %v1277
  %v1279 = vrot.slane %v1203, 1
  %v1280 = vrot.slane %v1204, 1
  %v1281 = vsel %vm222, %v1279, %v1280
  %v1282 = vrot.slane %v1205, 1
  %v1283 = vrot.slane %v1206, 1
  %v1284 = vsel %vm222, %v1282, %v1283
  %v1285 = vrot.slane %v1207, 1
  %v1286 = vrot.slane %v1208, 1
  %v1287 = vsel %vm222, %v1285, %v1286
  %v1288 = vrot.slane %v1209, 1
  %v1289 = vrot.slane %v1210, 1
  %v1290 = vsel %vm222, %v1288, %v1289
  %v1291 = vrot.slane %v1211, 1
  %v1292 = vrot.slane %v1212, 1
  %v1293 = vsel %vm222, %v1291, %v1292
  %v1294 = vrot.slane %v1213, 1
  %v1295 = vrot.slane %v1214, 1
  %v1296 = vsel %vm222, %v1294, %v1295
  %v1297 = vrot.slane %v1215, 1
  %v1298 = vrot.slane %v1216, 1
  %v1299 = vsel %vm222, %v1297, %v1298
  %v1300 = vrot.slane %v1217, 1
  %v1301 = vrot.slane %v1218, 1
  %v1302 = vsel %vm222, %v1300, %v1301
  %v1303 = vrot.slane %v1183, 2
  %v1304 = vrot.slane %v1184, 2
  %v1305 = vsel %vm271, %v1303, %v1304
  %v1306 = vrot.slane %v1185, 2
  %v1307 = vrot.slane %v1186, 2
  %v1308 = vsel %vm271, %v1306, %v1307
  %v1309 = vrot.slane %v1187, 2
  %v1310 = vrot.slane %v1188, 2
  %v1311 = vsel %vm271, %v1309, %v1310
  %v1312 = vrot.slane %v1189, 2
  %v1313 = vrot.slane %v1190, 2
  %v1314 = vsel %vm271, %v1312, %v1313
  %v1315 = vrot.slane %v1191, 2
  %v1316 = vrot.slane %v1192, 2
  %v1317 = vsel %vm271, %v1315, %v1316
  %v1318 = vrot.slane %v1193, 2
  %v1319 = vrot.slane %v1194, 2
  %v1320 = vsel %vm271, %v1318, %v1319
  %v1321 = vrot.slane %v1195, 2
  %v1322 = vrot.slane %v1196, 2
  %v1323 = vsel %vm271, %v1321, %v1322
  %v1324 = vrot.slane %v1197, 2
  %v1325 = vrot.slane %v1198, 2
  %v1326 = vsel %vm271, %v1324, %v1325
  %v1327 = vrot.slane %v1203, 2
  %v1328 = vrot.slane %v1204, 2
  %v1329 = vsel %vm271, %v1327, %v1328
  %v1330 = vrot.slane %v1205, 2
  %v1331 = vrot.slane %v1206, 2
  %v1332 = vsel %vm271, %v1330, %v1331
  %v1333 = vrot.slane %v1207, 2
  %v1334 = vrot.slane %v1208, 2
  %v1335 = vsel %vm271, %v1333, %v1334
  %v1336 = vrot.slane %v1209, 2
  %v1337 = vrot.slane %v1210, 2
  %v1338 = vsel %vm271, %v1336, %v1337
  %v1339 = vrot.slane %v1211, 2
  %v1340 = vrot.slane %v1212, 2
  %v1341 = vsel %vm271, %v1339, %v1340
  %v1342 = vrot.slane %v1213, 2
  %v1343 = vrot.slane %v1214, 2
  %v1344 = vsel %vm271, %v1342, %v1343
  %v1345 = vrot.slane %v1215, 2
  %v1346 = vrot.slane %v1216, 2
  %v1347 = vsel %vm271, %v1345, %v1346
  %v1348 = vrot.slane %v1217, 2
  %v1349 = vrot.slane %v1218, 2
  %v1350 = vsel %vm271, %v1348, %v1349
  %v1355 = vrot.slane %v1199, 1
  %v1356 = vrot.slane %v1200, 1
  %v1357 = vsel %vm222, %v1355, %v1356
  %v1358 = vrot.slane %v1219, 1
  %v1359 = vrot.slane %v1220, 1
  %v1360 = vsel %vm222, %v1358, %v1359
  %v1377 = vrot.slane %v1199, 2
  %v1378 = vrot.slane %v1200, 2
  %v1379 = vsel %vm271, %v1377, %v1378
  %v1380 = vrot.slane %v1219, 2
  %v1381 = vrot.slane %v1220, 2
  %v1382 = vsel %vm271, %v1380, %v1381
  %v1387 = vrot.slane %v1201, 1
  %v1388 = vrot.slane %v1202, 1
  %v1389 = vsel %vm222, %v1387, %v1388
  %v1390 = vrot.slane %v1221, 1
  %v1391 = vrot.slane %v1222, 1
  %v1392 = vsel %vm222, %v1390, %v1391
  %v1393 = vrot.slane %v1201, 2
  %v1394 = vrot.slane %v1202, 2
  %v1395 = vsel %vm271, %v1393, %v1394
  %v1396 = vrot.slane %v1221, 2
  %v1397 = vrot.slane %v1222, 2
  %v1398 = vsel %vm271, %v1396, %v1397
  %1399 = vrot.lane.b32.xlu0 %v1257, 32
  %v1400 = vpop.permute.xlu0 %1399
  %1401 = vrot.lane.b32.xlu0 %v1260, 32
  %v1402 = vpop.permute.xlu0 %1401
  %1403 = vrot.lane.b32.xlu0 %v1263, 32
  %v1404 = vpop.permute.xlu0 %1403
  %1405 = vrot.lane.b32.xlu0 %v1266, 32
  %v1406 = vpop.permute.xlu0 %1405
  %1407 = vrot.lane.b32.xlu0 %v1269, 32
  %v1408 = vpop.permute.xlu0 %1407
  %1409 = vrot.lane.b32.xlu0 %v1272, 32
  %v1410 = vpop.permute.xlu0 %1409
  %1411 = vrot.lane.b32.xlu0 %v1275, 32
  %v1412 = vpop.permute.xlu0 %1411
  %1413 = vrot.lane.b32.xlu0 %v1278, 32
  %v1414 = vpop.permute.xlu0 %1413
  %1415 = vrot.lane.b32.xlu0 %v1281, 32
  %v1416 = vpop.permute.xlu0 %1415
  %1417 = vrot.lane.b32.xlu0 %v1284, 32
  %v1418 = vpop.permute.xlu0 %1417
  %1419 = vrot.lane.b32.xlu0 %v1287, 32
  %v1420 = vpop.permute.xlu0 %1419
  %1421 = vrot.lane.b32.xlu0 %v1290, 32
  %v1422 = vpop.permute.xlu0 %1421
  %1423 = vrot.lane.b32.xlu0 %v1293, 32
  %v1424 = vpop.permute.xlu0 %1423
  %1425 = vrot.lane.b32.xlu0 %v1296, 32
  %v1426 = vpop.permute.xlu0 %1425
  %1427 = vrot.lane.b32.xlu0 %v1299, 32
  %v1428 = vpop.permute.xlu0 %1427
  %1429 = vrot.lane.b32.xlu0 %v1302, 32
  %v1430 = vpop.permute.xlu0 %1429
  %1447 = vrot.lane.b32.xlu0 %v1305, 64
  %v1448 = vpop.permute.xlu0 %1447
  %1449 = vrot.lane.b32.xlu0 %v1308, 64
  %v1450 = vpop.permute.xlu0 %1449
  %1451 = vrot.lane.b32.xlu0 %v1311, 64
  %v1452 = vpop.permute.xlu0 %1451
  %1453 = vrot.lane.b32.xlu0 %v1314, 64
  %v1454 = vpop.permute.xlu0 %1453
  %1455 = vrot.lane.b32.xlu0 %v1317, 64
  %v1456 = vpop.permute.xlu0 %1455
  %1457 = vrot.lane.b32.xlu0 %v1320, 64
  %v1458 = vpop.permute.xlu0 %1457
  %1459 = vrot.lane.b32.xlu0 %v1323, 64
  %v1460 = vpop.permute.xlu0 %1459
  %1461 = vrot.lane.b32.xlu0 %v1326, 64
  %v1462 = vpop.permute.xlu0 %1461
  %1463 = vrot.lane.b32.xlu0 %v1329, 64
  %v1464 = vpop.permute.xlu0 %1463
  %1465 = vrot.lane.b32.xlu0 %v1332, 64
  %v1466 = vpop.permute.xlu0 %1465
  %1467 = vrot.lane.b32.xlu0 %v1335, 64
  %v1468 = vpop.permute.xlu0 %1467
  %1469 = vrot.lane.b32.xlu0 %v1338, 64
  %v1470 = vpop.permute.xlu0 %1469
  %1471 = vrot.lane.b32.xlu0 %v1341, 64
  %v1472 = vpop.permute.xlu0 %1471
  %1473 = vrot.lane.b32.xlu0 %v1344, 64
  %v1474 = vpop.permute.xlu0 %1473
  %1475 = vrot.lane.b32.xlu0 %v1347, 64
  %v1476 = vpop.permute.xlu0 %1475
  %1477 = vrot.lane.b32.xlu0 %v1350, 64
  %v1478 = vpop.permute.xlu0 %1477
  %1495 = vrot.lane.b32.xlu0 %v1185, 96
  %v1496 = vpop.permute.xlu0 %1495
  %1497 = vrot.lane.b32.xlu0 %v1187, 96
  %v1498 = vpop.permute.xlu0 %1497
  %1499 = vrot.lane.b32.xlu0 %v1189, 96
  %v1500 = vpop.permute.xlu0 %1499
  %1501 = vrot.lane.b32.xlu0 %v1191, 96
  %v1502 = vpop.permute.xlu0 %1501
  %1503 = vrot.lane.b32.xlu0 %v1193, 96
  %v1504 = vpop.permute.xlu0 %1503
  %1505 = vrot.lane.b32.xlu0 %v1195, 96
  %v1506 = vpop.permute.xlu0 %1505
  %1507 = vrot.lane.b32.xlu0 %v1197, 96
  %v1508 = vpop.permute.xlu0 %1507
  %1509 = vrot.lane.b32.xlu0 %v1199, 96
  %v1510 = vpop.permute.xlu0 %1509
  %1511 = vrot.lane.b32.xlu0 %v1205, 96
  %v1512 = vpop.permute.xlu0 %1511
  %1513 = vrot.lane.b32.xlu0 %v1207, 96
  %v1514 = vpop.permute.xlu0 %1513
  %1515 = vrot.lane.b32.xlu0 %v1209, 96
  %v1516 = vpop.permute.xlu0 %1515
  %1517 = vrot.lane.b32.xlu0 %v1211, 96
  %v1518 = vpop.permute.xlu0 %1517
  %1519 = vrot.lane.b32.xlu0 %v1213, 96
  %v1520 = vpop.permute.xlu0 %1519
  %1521 = vrot.lane.b32.xlu0 %v1215, 96
  %v1522 = vpop.permute.xlu0 %1521
  %1523 = vrot.lane.b32.xlu0 %v1217, 96
  %v1524 = vpop.permute.xlu0 %1523
  %1525 = vrot.lane.b32.xlu0 %v1219, 96
  %v1526 = vpop.permute.xlu0 %1525
  %1543 = vrot.lane.b32.xlu0 %v1308, 32
  %v1544 = vpop.permute.xlu0 %1543
  %1545 = vrot.lane.b32.xlu0 %v1311, 32
  %v1546 = vpop.permute.xlu0 %1545
  %1547 = vrot.lane.b32.xlu0 %v1314, 32
  %v1548 = vpop.permute.xlu0 %1547
  %1549 = vrot.lane.b32.xlu0 %v1317, 32
  %v1550 = vpop.permute.xlu0 %1549
  %1551 = vrot.lane.b32.xlu0 %v1320, 32
  %v1552 = vpop.permute.xlu0 %1551
  %1553 = vrot.lane.b32.xlu0 %v1323, 32
  %v1554 = vpop.permute.xlu0 %1553
  %1555 = vrot.lane.b32.xlu0 %v1326, 32
  %v1556 = vpop.permute.xlu0 %1555
  %1557 = vrot.lane.b32.xlu0 %v1379, 32
  %v1558 = vpop.permute.xlu0 %1557
  %1559 = vrot.lane.b32.xlu0 %v1332, 32
  %v1560 = vpop.permute.xlu0 %1559
  %1561 = vrot.lane.b32.xlu0 %v1335, 32
  %v1562 = vpop.permute.xlu0 %1561
  %1563 = vrot.lane.b32.xlu0 %v1338, 32
  %v1564 = vpop.permute.xlu0 %1563
  %1565 = vrot.lane.b32.xlu0 %v1341, 32
  %v1566 = vpop.permute.xlu0 %1565
  %1567 = vrot.lane.b32.xlu0 %v1344, 32
  %v1568 = vpop.permute.xlu0 %1567
  %1569 = vrot.lane.b32.xlu0 %v1347, 32
  %v1570 = vpop.permute.xlu0 %1569
  %1571 = vrot.lane.b32.xlu0 %v1350, 32
  %v1572 = vpop.permute.xlu0 %1571
  %1573 = vrot.lane.b32.xlu0 %v1382, 32
  %v1574 = vpop.permute.xlu0 %1573
  %1591 = vrot.lane.b32.xlu0 %v1187, 64
  %v1592 = vpop.permute.xlu0 %1591
  %1593 = vrot.lane.b32.xlu0 %v1189, 64
  %v1594 = vpop.permute.xlu0 %1593
  %1595 = vrot.lane.b32.xlu0 %v1191, 64
  %v1596 = vpop.permute.xlu0 %1595
  %1597 = vrot.lane.b32.xlu0 %v1193, 64
  %v1598 = vpop.permute.xlu0 %1597
  %1599 = vrot.lane.b32.xlu0 %v1195, 64
  %v1600 = vpop.permute.xlu0 %1599
  %1601 = vrot.lane.b32.xlu0 %v1197, 64
  %v1602 = vpop.permute.xlu0 %1601
  %1603 = vrot.lane.b32.xlu0 %v1199, 64
  %v1604 = vpop.permute.xlu0 %1603
  %1605 = vrot.lane.b32.xlu0 %v1201, 64
  %v1606 = vpop.permute.xlu0 %1605
  %1607 = vrot.lane.b32.xlu0 %v1207, 64
  %v1608 = vpop.permute.xlu0 %1607
  %1609 = vrot.lane.b32.xlu0 %v1209, 64
  %v1610 = vpop.permute.xlu0 %1609
  %1611 = vrot.lane.b32.xlu0 %v1211, 64
  %v1612 = vpop.permute.xlu0 %1611
  %1613 = vrot.lane.b32.xlu0 %v1213, 64
  %v1614 = vpop.permute.xlu0 %1613
  %1615 = vrot.lane.b32.xlu0 %v1215, 64
  %v1616 = vpop.permute.xlu0 %1615
  %1617 = vrot.lane.b32.xlu0 %v1217, 64
  %v1618 = vpop.permute.xlu0 %1617
  %1619 = vrot.lane.b32.xlu0 %v1219, 64
  %v1620 = vpop.permute.xlu0 %1619
  %1621 = vrot.lane.b32.xlu0 %v1221, 64
  %v1622 = vpop.permute.xlu0 %1621
  %1639 = vrot.lane.b32.xlu0 %v1263, 96
  %v1640 = vpop.permute.xlu0 %1639
  %1641 = vrot.lane.b32.xlu0 %v1266, 96
  %v1642 = vpop.permute.xlu0 %1641
  %1643 = vrot.lane.b32.xlu0 %v1269, 96
  %v1644 = vpop.permute.xlu0 %1643
  %1645 = vrot.lane.b32.xlu0 %v1272, 96
  %v1646 = vpop.permute.xlu0 %1645
  %1647 = vrot.lane.b32.xlu0 %v1275, 96
  %v1648 = vpop.permute.xlu0 %1647
  %1649 = vrot.lane.b32.xlu0 %v1278, 96
  %v1650 = vpop.permute.xlu0 %1649
  %1651 = vrot.lane.b32.xlu0 %v1357, 96
  %v1652 = vpop.permute.xlu0 %1651
  %1653 = vrot.lane.b32.xlu0 %v1389, 96
  %v1654 = vpop.permute.xlu0 %1653
  %1655 = vrot.lane.b32.xlu0 %v1287, 96
  %v1656 = vpop.permute.xlu0 %1655
  %1657 = vrot.lane.b32.xlu0 %v1290, 96
  %v1658 = vpop.permute.xlu0 %1657
  %1659 = vrot.lane.b32.xlu0 %v1293, 96
  %v1660 = vpop.permute.xlu0 %1659
  %1661 = vrot.lane.b32.xlu0 %v1296, 96
  %v1662 = vpop.permute.xlu0 %1661
  %1663 = vrot.lane.b32.xlu0 %v1299, 96
  %v1664 = vpop.permute.xlu0 %1663
  %1665 = vrot.lane.b32.xlu0 %v1302, 96
  %v1666 = vpop.permute.xlu0 %1665
  %1667 = vrot.lane.b32.xlu0 %v1360, 96
  %v1668 = vpop.permute.xlu0 %1667
  %1669 = vrot.lane.b32.xlu0 %v1392, 96
  %v1670 = vpop.permute.xlu0 %1669
  %v1687 = vsel %vm68, %v1183, %v1400
  %v1688 = vsel %vm68, %v1185, %v1402
  %v1689 = vsel %vm68, %v1187, %v1404
  %v1690 = vsel %vm68, %v1189, %v1406
  %v1691 = vsel %vm68, %v1191, %v1408
  %v1692 = vsel %vm68, %v1193, %v1410
  %v1693 = vsel %vm68, %v1195, %v1412
  %v1694 = vsel %vm68, %v1197, %v1414
  %v1695 = vsel %vm68, %v1203, %v1416
  %v1696 = vsel %vm68, %v1205, %v1418
  %v1697 = vsel %vm68, %v1207, %v1420
  %v1698 = vsel %vm68, %v1209, %v1422
  %v1699 = vsel %vm68, %v1211, %v1424
  %v1700 = vsel %vm68, %v1213, %v1426
  %v1701 = vsel %vm68, %v1215, %v1428
  %v1702 = vsel %vm68, %v1217, %v1430
  %vm1703 = vcmask 523264
  %v1704 = vsel %vm1703, %v1687, %v1448
  %v1705 = vsel %vm1703, %v1688, %v1450
  %v1706 = vsel %vm1703, %v1689, %v1452
  %v1707 = vsel %vm1703, %v1690, %v1454
  %v1708 = vsel %vm1703, %v1691, %v1456
  %v1709 = vsel %vm1703, %v1692, %v1458
  %v1710 = vsel %vm1703, %v1693, %v1460
  %v1711 = vsel %vm1703, %v1694, %v1462
  %v1712 = vsel %vm1703, %v1695, %v1464
  %v1713 = vsel %vm1703, %v1696, %v1466
  %v1714 = vsel %vm1703, %v1697, %v1468
  %v1715 = vsel %vm1703, %v1698, %v1470
  %v1716 = vsel %vm1703, %v1699, %v1472
  %v1717 = vsel %vm1703, %v1700, %v1474
  %v1718 = vsel %vm1703, %v1701, %v1476
  %v1719 = vsel %vm1703, %v1702, %v1478
  %vm1720 = vcmask 785408
  %v1721 = vsel %vm1720, %v1704, %v1496
  %v1722 = vsel %vm1720, %v1705, %v1498
  %v1723 = vsel %vm1720, %v1706, %v1500
  %v1724 = vsel %vm1720, %v1707, %v1502
  %v1725 = vsel %vm1720, %v1708, %v1504
  %v1726 = vsel %vm1720, %v1709, %v1506
  %v1727 = vsel %vm1720, %v1710, %v1508
  %v1728 = vsel %vm1720, %v1711, %v1510
  %v1729 = vsel %vm1720, %v1712, %v1512
  %v1730 = vsel %vm1720, %v1713, %v1514
  %v1731 = vsel %vm1720, %v1714, %v1516
  %v1732 = vsel %vm1720, %v1715, %v1518
  %v1733 = vsel %vm1720, %v1716, %v1520
  %v1734 = vsel %vm1720, %v1717, %v1522
  %v1735 = vsel %vm1720, %v1718, %v1524
  %v1736 = vsel %vm1720, %v1719, %v1526
  %v1737 = vsel %vm68, %v1260, %v1544
  %v1738 = vsel %vm68, %v1263, %v1546
  %v1739 = vsel %vm68, %v1266, %v1548
  %v1740 = vsel %vm68, %v1269, %v1550
  %v1741 = vsel %vm68, %v1272, %v1552
  %v1742 = vsel %vm68, %v1275, %v1554
  %v1743 = vsel %vm68, %v1278, %v1556
  %v1744 = vsel %vm68, %v1357, %v1558
  %v1745 = vsel %vm68, %v1284, %v1560
  %v1746 = vsel %vm68, %v1287, %v1562
  %v1747 = vsel %vm68, %v1290, %v1564
  %v1748 = vsel %vm68, %v1293, %v1566
  %v1749 = vsel %vm68, %v1296, %v1568
  %v1750 = vsel %vm68, %v1299, %v1570
  %v1751 = vsel %vm68, %v1302, %v1572
  %v1752 = vsel %vm68, %v1360, %v1574
  %v1753 = vsel %vm1703, %v1737, %v1592
  %v1754 = vsel %vm1703, %v1738, %v1594
  %v1755 = vsel %vm1703, %v1739, %v1596
  %v1756 = vsel %vm1703, %v1740, %v1598
  %v1757 = vsel %vm1703, %v1741, %v1600
  %v1758 = vsel %vm1703, %v1742, %v1602
  %v1759 = vsel %vm1703, %v1743, %v1604
  %v1760 = vsel %vm1703, %v1744, %v1606
  %v1761 = vsel %vm1703, %v1745, %v1608
  %v1762 = vsel %vm1703, %v1746, %v1610
  %v1763 = vsel %vm1703, %v1747, %v1612
  %v1764 = vsel %vm1703, %v1748, %v1614
  %v1765 = vsel %vm1703, %v1749, %v1616
  %v1766 = vsel %vm1703, %v1750, %v1618
  %v1767 = vsel %vm1703, %v1751, %v1620
  %v1768 = vsel %vm1703, %v1752, %v1622
  %v1769 = vsel %vm1720, %v1753, %v1640
  %v1770 = vsel %vm1720, %v1754, %v1642
  %v1771 = vsel %vm1720, %v1755, %v1644
  %v1772 = vsel %vm1720, %v1756, %v1646
  %v1773 = vsel %vm1720, %v1757, %v1648
  %v1774 = vsel %vm1720, %v1758, %v1650
  %v1775 = vsel %vm1720, %v1759, %v1652
  %v1776 = vsel %vm1720, %v1760, %v1654
  %v1777 = vsel %vm1720, %v1761, %v1656
  %v1778 = vsel %vm1720, %v1762, %v1658
  %v1779 = vsel %vm1720, %v1763, %v1660
  %v1780 = vsel %vm1720, %v1764, %v1662
  %v1781 = vsel %vm1720, %v1765, %v1664
  %v1782 = vsel %vm1720, %v1766, %v1666
  %v1783 = vsel %vm1720, %v1767, %v1668
  %v1784 = vsel %vm1720, %v1768, %v1670
  %v1785 = vsel %vm68, %v1311, 0
  %v1787 = vsel %vm68, %v1314, 0
  %v1789 = vsel %vm68, %v1317, 0
  %v1791 = vsel %vm68, %v1320, 0
  %v1793 = vsel %vm68, %v1323, 0
  %v1795 = vsel %vm68, %v1326, 0
  %v1797 = vsel %vm68, %v1379, 0
  %v1799 = vsel %vm68, %v1395, 0
  %v1801 = vsel %vm68, %v1335, 0
  %v1803 = vsel %vm68, %v1338, 0
  %v1805 = vsel %vm68, %v1341, 0
  %v1807 = vsel %vm68, %v1344, 0
  %v1809 = vsel %vm68, %v1347, 0
  %v1811 = vsel %vm68, %v1350, 0
  %v1813 = vsel %vm68, %v1382, 0
  %v1815 = vsel %vm68, %v1398, 0
  %1817 = vmatprep.subr.mxu0 0.0
  %1818 = vmatpush1.msra.mxu0 %v1160
  %1819 = vmatprep.subr.mxu0 0.0
  %1820 = vmatpush1.msra.mxu0 %v1159
  %1821 = vmatprep.subr.mxu0 0.0
  %1822 = vmatpush1.msra.mxu0 %v1158
  %1823 = vmatprep.subr.mxu0 0.0
  %1824 = vmatpush1.msra.mxu0 %v1157
  %1825 = vmatprep.subr.mxu0 0.0
  %1826 = vmatpush1.msra.mxu0 %v1156
  %1827 = vmatprep.subr.mxu0 0.0
  %1828 = vmatpush1.msra.mxu0 %v1155
  %1829 = vmatprep.subr.mxu0 0.0
  %1830 = vmatpush1.msra.mxu0 %v1154
  %1831 = vmatprep.subr.mxu0 0.0
  %1832 = vmatpush1.msra.mxu0 %v1153
  %1833 = vmatprep.subr.mxu0 0.0
  %1834 = vmatpush1.msra.mxu0 %v1152
  %1835 = vmatprep.subr.mxu0 0.0
  %1836 = vmatpush1.msra.mxu0 %v1151
  %1837 = vmatprep.subr.mxu0 0.0
  %1838 = vmatpush1.msra.mxu0 %v1150
  %1839 = vmatprep.subr.mxu0 0.0
  %1840 = vmatpush1.msra.mxu0 %v1149
  %1841 = vmatprep.subr.mxu0 0.0
  %1842 = vmatpush1.msra.mxu0 %v1148
  %1843 = vmatprep.subr.mxu0 0.0
  %1844 = vmatpush1.msra.mxu0 %v1147
  %1845 = vmatprep.subr.mxu0 0.0
  %1846 = vmatpush1.msra.mxu0 %v1146
  %1847 = vmatprep.subr.mxu0 0.0
  %1848 = vmatpush1.msra.mxu0 %v1145
  %1849 = vmatprep.subr.mxu0 0.0
  %1850 = vmatpush2.msra.mxu0 %v1176
  %1851 = vmatprep.subr.mxu0 0.0
  %1852 = vmatpush2.msra.mxu0 %v1175
  %1853 = vmatprep.subr.mxu0 0.0
  %1854 = vmatpush2.msra.mxu0 %v1174
  %1855 = vmatprep.subr.mxu0 0.0
  %1856 = vmatpush2.msra.mxu0 %v1173
  %1857 = vmatprep.subr.mxu0 0.0
  %1858 = vmatpush2.msra.mxu0 %v1172
  %1859 = vmatprep.subr.mxu0 0.0
  %1860 = vmatpush2.msra.mxu0 %v1171
  %1861 = vmatprep.subr.mxu0 0.0
  %1862 = vmatpush2.msra.mxu0 %v1170
  %1863 = vmatprep.subr.mxu0 0.0
  %1864 = vmatpush2.msra.mxu0 %v1169
  %1865 = vmatprep.subr.mxu0 0.0
  %1866 = vmatpush2.msra.mxu0 %v1168
  %1867 = vmatprep.subr.mxu0 0.0
  %1868 = vmatpush2.msra.mxu0 %v1167
  %1869 = vmatprep.subr.mxu0 0.0
  %1870 = vmatpush2.msra.mxu0 %v1166
  %1871 = vmatprep.subr.mxu0 0.0
  %1872 = vmatpush2.msra.mxu0 %v1165
  %1873 = vmatprep.subr.mxu0 0.0
  %1874 = vmatpush2.msra.mxu0 %v1164
  %1875 = vmatprep.subr.mxu0 0.0
  %1876 = vmatpush2.msra.mxu0 %v1163
  %1877 = vmatprep.subr.mxu0 0.0
  %1878 = vmatpush2.msra.mxu0 %v1162
  %1879 = vmatprep.subr.mxu0 0.0
  %1880 = vmatpush2.msra.mxu0 %v1161
  %1881 = vmatprep.mubr.f32.mxu0 %v1769
  %1882 = vmatmul.mubr.f32.gmra.mxu0 %v1721
  %v1883 = vpop.f32.mrf.mxu0
  %v1884 = vadd.f32 0.0, %v1883
  %v1885 = vpop.f32.mrf.mxu0
  %1886 = vmatprep.mubr.f32.mxu0 %v1770
  %1887 = vmatmul.mubr.f32.gmra.mxu0 %v1722
  %v1888 = vpop.f32.mrf.mxu0
  %v1889 = vadd.f32 0.0, %v1888
  %v1890 = vpop.f32.mrf.mxu0
  %1891 = vmatprep.mubr.f32.mxu0 %v1771
  %1892 = vmatmul.mubr.f32.gmra.mxu0 %v1723
  %v1893 = vpop.f32.mrf.mxu0
  %v1894 = vadd.f32 0.0, %v1893
  %v1895 = vpop.f32.mrf.mxu0
  %1896 = vmatprep.mubr.f32.mxu0 %v1772
  %1897 = vmatmul.mubr.f32.gmra.mxu0 %v1724
  %v1898 = vpop.f32.mrf.mxu0
  %v1899 = vadd.f32 0.0, %v1898
  %v1900 = vpop.f32.mrf.mxu0
  %1901 = vmatprep.mubr.f32.mxu0 %v1773
  %1902 = vmatmul.mubr.f32.gmra.mxu0 %v1725
  %v1903 = vpop.f32.mrf.mxu0
  %v1904 = vadd.f32 0.0, %v1903
  %v1905 = vpop.f32.mrf.mxu0
  %1906 = vmatprep.mubr.f32.mxu0 %v1774
  %1907 = vmatmul.mubr.f32.gmra.mxu0 %v1726
  %v1908 = vpop.f32.mrf.mxu0
  %v1909 = vadd.f32 0.0, %v1908
  %v1910 = vpop.f32.mrf.mxu0
  %1911 = vmatprep.mubr.f32.mxu0 %v1775
  %1912 = vmatmul.mubr.f32.gmra.mxu0 %v1727
  %v1913 = vpop.f32.mrf.mxu0
  %v1914 = vadd.f32 0.0, %v1913
  %v1915 = vpop.f32.mrf.mxu0
  %1916 = vmatprep.mubr.f32.mxu0 %v1776
  %1917 = vmatmul.mubr.f32.gmra.mxu0 %v1728
  %v1918 = vpop.f32.mrf.mxu0
  %v1919 = vadd.f32 0.0, %v1918
  %v1920 = vpop.f32.mrf.mxu0
  %1921 = vmatprep.mubr.f32.mxu0 %v1777
  %1922 = vmatmul.mubr.f32.gmra.mxu0 %v1729
  %v1923 = vpop.f32.mrf.mxu0
  %v1924 = vadd.f32 0.0, %v1923
  %v1925 = vpop.f32.mrf.mxu0
  %1926 = vmatprep.mubr.f32.mxu0 %v1778
  %1927 = vmatmul.mubr.f32.gmra.mxu0 %v1730
  %v1928 = vpop.f32.mrf.mxu0
  %v1929 = vadd.f32 0.0, %v1928
  %v1930 = vpop.f32.mrf.mxu0
  %1931 = vmatprep.mubr.f32.mxu0 %v1779
  %1932 = vmatmul.mubr.f32.gmra.mxu0 %v1731
  %v1933 = vpop.f32.mrf.mxu0
  %v1934 = vadd.f32 0.0, %v1933
  %v1935 = vpop.f32.mrf.mxu0
  %1936 = vmatprep.mubr.f32.mxu0 %v1780
  %1937 = vmatmul.mubr.f32.gmra.mxu0 %v1732
  %v1938 = vpop.f32.mrf.mxu0
  %v1939 = vadd.f32 0.0, %v1938
  %v1940 = vpop.f32.mrf.mxu0
  %1941 = vmatprep.mubr.f32.mxu0 %v1781
  %1942 = vmatmul.mubr.f32.gmra.mxu0 %v1733
  %v1943 = vpop.f32.mrf.mxu0
  %v1944 = vadd.f32 0.0, %v1943
  %v1945 = vpop.f32.mrf.mxu0
  %1946 = vmatprep.mubr.f32.mxu0 %v1782
  %1947 = vmatmul.mubr.f32.gmra.mxu0 %v1734
  %v1948 = vpop.f32.mrf.mxu0
  %v1949 = vadd.f32 0.0, %v1948
  %v1950 = vpop.f32.mrf.mxu0
  %1951 = vmatprep.mubr.f32.mxu0 %v1783
  %1952 = vmatmul.mubr.f32.gmra.mxu0 %v1735
  %v1953 = vpop.f32.mrf.mxu0
  %v1954 = vadd.f32 0.0, %v1953
  %v1955 = vpop.f32.mrf.mxu0
  %1956 = vmatprep.mubr.f32.mxu0 %v1784
  %1957 = vmatmul.mubr.f32.gmra.mxu0 %v1736
  %v1958 = vpop.f32.mrf.mxu0
  %v1959 = vadd.f32 0.0, %v1958
  %v1960 = vpop.f32.mrf.mxu0
  %1961 = vdwg.mxu0
  %1962 = vmatprep.subr.mxu0 0.0
  %1963 = vmatpush1.msra.mxu0 0.0
  %1964 = vmatprep.subr.mxu0 0.0
  %1965 = vmatpush1.msra.mxu0 0.0
  %1966 = vmatprep.subr.mxu0 0.0
  %1967 = vmatpush1.msra.mxu0 0.0
  %1968 = vmatprep.subr.mxu0 0.0
  %1969 = vmatpush1.msra.mxu0 0.0
  %1970 = vmatprep.subr.mxu0 0.0
  %1971 = vmatpush1.msra.mxu0 0.0
  %1972 = vmatprep.subr.mxu0 0.0
  %1973 = vmatpush1.msra.mxu0 0.0
  %1974 = vmatprep.subr.mxu0 0.0
  %1975 = vmatpush1.msra.mxu0 0.0
  %1976 = vmatprep.subr.mxu0 0.0
  %1977 = vmatpush1.msra.mxu0 0.0
  %1978 = vmatprep.subr.mxu0 0.0
  %1979 = vmatpush1.msra.mxu0 0.0
  %1980 = vmatprep.subr.mxu0 0.0
  %1981 = vmatpush1.msra.mxu0 0.0
  %1982 = vmatprep.subr.mxu0 0.0
  %1983 = vmatpush1.msra.mxu0 0.0
  %1984 = vmatprep.subr.mxu0 0.0
  %1985 = vmatpush1.msra.mxu0 0.0
  %1986 = vmatprep.subr.mxu0 0.0
  %1987 = vmatpush1.msra.mxu0 %v1180
  %1988 = vmatprep.subr.mxu0 0.0
  %1989 = vmatpush1.msra.mxu0 %v1179
  %1990 = vmatprep.subr.mxu0 0.0
  %1991 = vmatpush1.msra.mxu0 %v1178
  %1992 = vmatprep.subr.mxu0 0.0
  %1993 = vmatpush1.msra.mxu0 %v1177
  %1994 = vmatprep.subr.mxu0 0.0
  %1995 = vmatpush2.msra.mxu0 0.0
  %1996 = vmatprep.subr.mxu0 0.0
  %1997 = vmatpush2.msra.mxu0 0.0
  %1998 = vmatprep.subr.mxu0 0.0
  %1999 = vmatpush2.msra.mxu0 0.0
  %2000 = vmatprep.subr.mxu0 0.0
  %2001 = vmatpush2.msra.mxu0 0.0
  %2002 = vmatprep.subr.mxu0 0.0
  %2003 = vmatpush2.msra.mxu0 0.0
  %2004 = vmatprep.subr.mxu0 0.0
  %2005 = vmatpush2.msra.mxu0 0.0
  %2006 = vmatprep.subr.mxu0 0.0
  %2007 = vmatpush2.msra.mxu0 0.0
  %2008 = vmatprep.subr.mxu0 0.0
  %2009 = vmatpush2.msra.mxu0 0.0
  %2010 = vmatprep.subr.mxu0 0.0
  %2011 = vmatpush2.msra.mxu0 0.0
  %2012 = vmatprep.subr.mxu0 0.0
  %2013 = vmatpush2.msra.mxu0 0.0
  %2014 = vmatprep.subr.mxu0 0.0
  %2015 = vmatpush2.msra.mxu0 0.0
  %2016 = vmatprep.subr.mxu0 0.0
  %2017 = vmatpush2.msra.mxu0 0.0
  %2018 = vmatprep.subr.mxu0 0.0
  %2019 = vmatpush2.msra.mxu0 0.0
  %2020 = vmatprep.subr.mxu0 0.0
  %2021 = vmatpush2.msra.mxu0 0.0
  %2022 = vmatprep.subr.mxu0 0.0
  %2023 = vmatpush2.msra.mxu0 0.0
  %2024 = vmatprep.subr.mxu0 0.0
  %2025 = vmatpush2.msra.mxu0 0.0
  %2026 = vmatprep.mubr.f32.mxu0 0.0
  %2027 = vmatmul.mubr.f32.gmra.mxu0 %v1785
  %v2028 = vpop.f32.mrf.mxu0
  %v2029 = vadd.f32 %v1884, %v2028
  %v2030 = vpop.f32.mrf.mxu0
  %2031 = vmatprep.mubr.f32.mxu0 0.0
  %2032 = vmatmul.mubr.f32.gmra.mxu0 %v1787
  %v2033 = vpop.f32.mrf.mxu0
  %v2034 = vadd.f32 %v1889, %v2033
  %v2035 = vpop.f32.mrf.mxu0
  %2036 = vmatprep.mubr.f32.mxu0 0.0
  %2037 = vmatmul.mubr.f32.gmra.mxu0 %v1789
  %v2038 = vpop.f32.mrf.mxu0
  %v2039 = vadd.f32 %v1894, %v2038
  %v2040 = vpop.f32.mrf.mxu0
  %2041 = vmatprep.mubr.f32.mxu0 0.0
  %2042 = vmatmul.mubr.f32.gmra.mxu0 %v1791
  %v2043 = vpop.f32.mrf.mxu0
  %v2044 = vadd.f32 %v1899, %v2043
  %v2045 = vpop.f32.mrf.mxu0
  %2046 = vmatprep.mubr.f32.mxu0 0.0
  %2047 = vmatmul.mubr.f32.gmra.mxu0 %v1793
  %v2048 = vpop.f32.mrf.mxu0
  %v2049 = vadd.f32 %v1904, %v2048
  %v2050 = vpop.f32.mrf.mxu0
  %2051 = vmatprep.mubr.f32.mxu0 0.0
  %2052 = vmatmul.mubr.f32.gmra.mxu0 %v1795
  %v2053 = vpop.f32.mrf.mxu0
  %v2054 = vadd.f32 %v1909, %v2053
  %v2055 = vpop.f32.mrf.mxu0
  %2056 = vmatprep.mubr.f32.mxu0 0.0
  %2057 = vmatmul.mubr.f32.gmra.mxu0 %v1797
  %v2058 = vpop.f32.mrf.mxu0
  %v2059 = vadd.f32 %v1914, %v2058
  %v2060 = vpop.f32.mrf.mxu0
  %2061 = vmatprep.mubr.f32.mxu0 0.0
  %2062 = vmatmul.mubr.f32.gmra.mxu0 %v1799
  %v2063 = vpop.f32.mrf.mxu0
  %v2064 = vadd.f32 %v1919, %v2063
  %v2065 = vpop.f32.mrf.mxu0
  %2066 = vmatprep.mubr.f32.mxu0 0.0
  %2067 = vmatmul.mubr.f32.gmra.mxu0 %v1801
  %v2068 = vpop.f32.mrf.mxu0
  %v2069 = vadd.f32 %v1924, %v2068
  %v2070 = vpop.f32.mrf.mxu0
  %2071 = vmatprep.mubr.f32.mxu0 0.0
  %2072 = vmatmul.mubr.f32.gmra.mxu0 %v1803
  %v2073 = vpop.f32.mrf.mxu0
  %v2074 = vadd.f32 %v1929, %v2073
  %v2075 = vpop.f32.mrf.mxu0
  %2076 = vmatprep.mubr.f32.mxu0 0.0
  %2077 = vmatmul.mubr.f32.gmra.mxu0 %v1805
  %v2078 = vpop.f32.mrf.mxu0
  %v2079 = vadd.f32 %v1934, %v2078
  %v2080 = vpop.f32.mrf.mxu0
  %2081 = vmatprep.mubr.f32.mxu0 0.0
  %2082 = vmatmul.mubr.f32.gmra.mxu0 %v1807
  %v2083 = vpop.f32.mrf.mxu0
  %v2084 = vadd.f32 %v1939, %v2083
  %v2085 = vpop.f32.mrf.mxu0
  %2086 = vmatprep.mubr.f32.mxu0 0.0
  %2087 = vmatmul.mubr.f32.gmra.mxu0 %v1809
  %v2088 = vpop.f32.mrf.mxu0
  %v2089 = vadd.f32 %v1944, %v2088
  %v2090 = vpop.f32.mrf.mxu0
  %2091 = vmatprep.mubr.f32.mxu0 0.0
  %2092 = vmatmul.mubr.f32.gmra.mxu0 %v1811
  %v2093 = vpop.f32.mrf.mxu0
  %v2094 = vadd.f32 %v1949, %v2093
  %v2095 = vpop.f32.mrf.mxu0
  %2096 = vmatprep.mubr.f32.mxu0 0.0
  %2097 = vmatmul.mubr.f32.gmra.mxu0 %v1813
  %v2098 = vpop.f32.mrf.mxu0
  %v2099 = vadd.f32 %v1954, %v2098
  %v2100 = vpop.f32.mrf.mxu0
  %2101 = vmatprep.mubr.f32.mxu0 0.0
  %2102 = vmatmul.mubr.f32.gmra.mxu0 %v1815
  %v2103 = vpop.f32.mrf.mxu0
  %v2104 = vadd.f32 %v1959, %v2103
  %v2105 = vpop.f32.mrf.mxu0
  %2106 = vdwg.mxu0
  %v2108 = vlaneseq
  %v2109 = vshrl.u32 %v2108, 7
  %v2110 = vsub.s32 0, %v2109
  %v2111 = vrot.slane %v1181, %v2110
  %v2113 = vmul.f32 %v2029, %v2111
  %v2114 = vmul.f32 %v2034, %v2111
  %v2115 = vmul.f32 %v2039, %v2111
  %v2116 = vmul.f32 %v2044, %v2111
  %v2117 = vmul.f32 %v2049, %v2111
  %v2118 = vmul.f32 %v2054, %v2111
  %v2119 = vmul.f32 %v2059, %v2111
  %v2120 = vmul.f32 %v2064, %v2111
  %v2121 = vmul.f32 %v2069, %v2111
  %v2122 = vmul.f32 %v2074, %v2111
  %v2123 = vmul.f32 %v2079, %v2111
  %v2124 = vmul.f32 %v2084, %v2111
  %v2125 = vmul.f32 %v2089, %v2111
  %v2126 = vmul.f32 %v2094, %v2111
  %v2127 = vmul.f32 %v2099, %v2111
  %v2128 = vmul.f32 %v2104, %v2111
  %v2130 = vlaneseq
  %v2131 = vshrl.u32 %v2130, 7
  %v2132 = vsub.s32 0, %v2131
  %v2133 = vrot.slane %v1182, %v2132
  %v2135 = vadd.f32 %v2113, %v2133
  %v2136 = vadd.f32 %v2114, %v2133
  %v2137 = vadd.f32 %v2115, %v2133
  %v2138 = vadd.f32 %v2116, %v2133
  %v2139 = vadd.f32 %v2117, %v2133
  %v2140 = vadd.f32 %v2118, %v2133
  %v2141 = vadd.f32 %v2119, %v2133
  %v2142 = vadd.f32 %v2120, %v2133
  %v2143 = vadd.f32 %v2121, %v2133
  %v2144 = vadd.f32 %v2122, %v2133
  %v2145 = vadd.f32 %v2123, %v2133
  %v2146 = vadd.f32 %v2124, %v2133
  %v2147 = vadd.f32 %v2125, %v2133
  %v2148 = vadd.f32 %v2126, %v2133
  %v2149 = vadd.f32 %v2127, %v2133
  %v2150 = vadd.f32 %v2128, %v2133
  %v2151 = vmax.f32 %v2135, 0.0
  %v2152 = vmax.f32 %v2136, 0.0
  %v2153 = vmax.f32 %v2137, 0.0
  %v2154 = vmax.f32 %v2138, 0.0
  %v2155 = vmax.f32 %v2139, 0.0
  %v2156 = vmax.f32 %v2140, 0.0
  %v2157 = vmax.f32 %v2141, 0.0
  %v2158 = vmax.f32 %v2142, 0.0
  %v2159 = vmax.f32 %v2143, 0.0
  %v2160 = vmax.f32 %v2144, 0.0
  %v2161 = vmax.f32 %v2145, 0.0
  %v2162 = vmax.f32 %v2146, 0.0
  %v2163 = vmax.f32 %v2147, 0.0
  %v2164 = vmax.f32 %v2148, 0.0
  %v2165 = vmax.f32 %v2149, 0.0
  %v2166 = vmax.f32 %v2150, 0.0
  %2167 = vst.msk [vmem:[%s1128 + $0x1] sm:$0xff] %vm68, %v2151
  %2168 = vst.msk [vmem:[%s1128 + $0x11] sm:$0xff] %vm68, %v2152
  %2169 = vst.msk [vmem:[%s1128 + $0x21] sm:$0xff] %vm68, %v2153
  %2170 = vst.msk [vmem:[%s1128 + $0x31] sm:$0xff] %vm68, %v2154
  %2171 = vst.msk [vmem:[%s1128 + $0x41] sm:$0xff] %vm68, %v2155
  %2172 = vst.msk [vmem:[%s1128 + $0x51] sm:$0xff] %vm68, %v2156
  %2173 = vst.msk [vmem:[%s1128 + $0x61] sm:$0xff] %vm68, %v2157
  %2174 = vst.msk [vmem:[%s1128 + $0x71] sm:$0xff] %vm68, %v2158
  %2175 = vst.msk [vmem:[%s1128 + $0xa1] sm:$0xff] %vm68, %v2159
  %2176 = vst.msk [vmem:[%s1128 + $0xb1] sm:$0xff] %vm68, %v2160
  %2177 = vst.msk [vmem:[%s1128 + $0xc1] sm:$0xff] %vm68, %v2161
  %2178 = vst.msk [vmem:[%s1128 + $0xd1] sm:$0xff] %vm68, %v2162
  %2179 = vst.msk [vmem:[%s1128 + $0xe1] sm:$0xff] %vm68, %v2163
  %2180 = vst.msk [vmem:[%s1128 + $0xf1] sm:$0xff] %vm68, %v2164
  %2181 = vst.msk [vmem:[%s1128 + $0x101] sm:$0xff] %vm68, %v2165
  %2182 = vst.msk [vmem:[%s1128 + $0x111] sm:$0xff] %vm68, %v2166
  %s2183 = scalar_lea.vmem %s4, 288
  %v2184 = vld [vmem:[%s2183] sm:$0xff]
  %v2185 = vld [vmem:[%s2183 + $0x8] sm:$0xff]
  %v2186 = vld [vmem:[%s2183 + $0x10] sm:$0xff]
  %v2187 = vld [vmem:[%s2183 + $0x18] sm:$0xff]
  %v2188 = vld [vmem:[%s2183 + $0x20] sm:$0xff]
  %v2189 = vld [vmem:[%s2183 + $0x28] sm:$0xff]
  %v2190 = vld [vmem:[%s2183 + $0x30] sm:$0xff]
  %v2191 = vld [vmem:[%s2183 + $0x38] sm:$0xff]
  %v2192 = vld [vmem:[%s2183 + $0x40] sm:$0xff]
  %v2193 = vld [vmem:[%s2183 + $0x48] sm:$0xff]
  %v2194 = vld [vmem:[%s2183 + $0x50] sm:$0xff]
  %v2195 = vld [vmem:[%s2183 + $0x58] sm:$0xff]
  %v2196 = vld [vmem:[%s2183 + $0x60] sm:$0xff]
  %v2197 = vld [vmem:[%s2183 + $0x68] sm:$0xff]
  %v2198 = vld [vmem:[%s2183 + $0x70] sm:$0xff]
  %v2199 = vld [vmem:[%s2183 + $0x78] sm:$0xff]
  %v2200 = vld [vmem:[%s2183 + $0x80] sm:$0xff]
  %v2201 = vld [vmem:[%s2183 + $0x88] sm:$0xff]
  %v2202 = vld [vmem:[%s2183 + $0x90] sm:$0xff]
  %v2203 = vld [vmem:[%s2183 + $0x98] sm:$0xff]
  %v2204 = vld [vmem:[%s2183 + $0xa0] sm:$0xff]
  %v2205 = vld [vmem:[%s2183 + $0xa8] sm:$0xff]
  %v2206 = vld [vmem:[%s2183 + $0xb0] sm:$0xff]
  %v2207 = vld [vmem:[%s2183 + $0xb8] sm:$0xff]
  %v2208 = vld [vmem:[%s2183 + $0xc0] sm:$0xff]
  %v2209 = vld [vmem:[%s2183 + $0xc8] sm:$0xff]
  %v2210 = vld [vmem:[%s2183 + $0xd0] sm:$0xff]
  %v2211 = vld [vmem:[%s2183 + $0xd8] sm:$0xff]
  %v2212 = vld [vmem:[%s2183 + $0xe0] sm:$0xff]
  %v2213 = vld [vmem:[%s2183 + $0xe8] sm:$0xff]
  %v2214 = vld [vmem:[%s2183 + $0xf0] sm:$0xff]
  %v2215 = vld [vmem:[%s2183 + $0xf8] sm:$0xff]
  %v2216 = vld [vmem:[%s2183 + $0x100] sm:$0xff]
  %v2217 = vld [vmem:[%s2183 + $0x108] sm:$0xff]
  %v2218 = vld [vmem:[%s2183 + $0x110] sm:$0xff]
  %v2219 = vld [vmem:[%s2183 + $0x118] sm:$0xff]
  %s2220 = scalar_lea.vmem %s5, 1
  %v2221 = vld [vmem:[%s2220] sm:$0x1]
  %s2222 = scalar_lea.vmem %s6, 1
  %v2223 = vld [vmem:[%s2222] sm:$0x1]
  %v2224 = vld [vmem:[#allocation3] sm:$0xff]
  %v2225 = vld [vmem:[#allocation3 + $0x8] sm:$0x3]
  %v2226 = vld [vmem:[#allocation3 + $0x10] sm:$0xff]
  %v2227 = vld [vmem:[#allocation3 + $0x18] sm:$0x3]
  %v2228 = vld [vmem:[#allocation3 + $0x20] sm:$0xff]
  %v2229 = vld [vmem:[#allocation3 + $0x28] sm:$0x3]
  %v2230 = vld [vmem:[#allocation3 + $0x30] sm:$0xff]
  %v2231 = vld [vmem:[#allocation3 + $0x38] sm:$0x3]
  %v2232 = vld [vmem:[#allocation3 + $0x40] sm:$0xff]
  %v2233 = vld [vmem:[#allocation3 + $0x48] sm:$0x3]
  %v2234 = vld [vmem:[#allocation3 + $0x50] sm:$0xff]
  %v2235 = vld [vmem:[#allocation3 + $0x58] sm:$0x3]
  %v2236 = vld [vmem:[#allocation3 + $0x60] sm:$0xff]
  %v2237 = vld [vmem:[#allocation3 + $0x68] sm:$0x3]
  %v2238 = vld [vmem:[#allocation3 + $0x70] sm:$0xff]
  %v2239 = vld [vmem:[#allocation3 + $0x78] sm:$0x3]
  %v2240 = vld [vmem:[#allocation3 + $0x80] sm:$0xff]
  %v2241 = vld [vmem:[#allocation3 + $0x88] sm:$0x3]
  %v2242 = vld [vmem:[#allocation3 + $0x90] sm:$0xff]
  %v2243 = vld [vmem:[#allocation3 + $0x98] sm:$0x3]
  %v2244 = vld [vmem:[#allocation3 + $0xa0] sm:$0xff]
  %v2245 = vld [vmem:[#allocation3 + $0xa8] sm:$0x3]
  %v2246 = vld [vmem:[#allocation3 + $0xb0] sm:$0xff]
  %v2247 = vld [vmem:[#allocation3 + $0xb8] sm:$0x3]
  %v2248 = vld [vmem:[#allocation3 + $0xc0] sm:$0xff]
  %v2249 = vld [vmem:[#allocation3 + $0xc8] sm:$0x3]
  %v2250 = vld [vmem:[#allocation3 + $0xd0] sm:$0xff]
  %v2251 = vld [vmem:[#allocation3 + $0xd8] sm:$0x3]
  %v2252 = vld [vmem:[#allocation3 + $0xe0] sm:$0xff]
  %v2253 = vld [vmem:[#allocation3 + $0xe8] sm:$0x3]
  %v2254 = vld [vmem:[#allocation3 + $0xf0] sm:$0xff]
  %v2255 = vld [vmem:[#allocation3 + $0xf8] sm:$0x3]
  %v2256 = vld [vmem:[#allocation3 + $0x100] sm:$0xff]
  %v2257 = vld [vmem:[#allocation3 + $0x108] sm:$0x3]
  %v2258 = vld [vmem:[#allocation3 + $0x110] sm:$0xff]
  %v2259 = vld [vmem:[#allocation3 + $0x118] sm:$0x3]
  %v2260 = vld [vmem:[#allocation3 + $0x120] sm:$0xff]
  %v2261 = vld [vmem:[#allocation3 + $0x128] sm:$0x3]
  %v2262 = vld [vmem:[#allocation3 + $0x130] sm:$0xff]
  %v2263 = vld [vmem:[#allocation3 + $0x138] sm:$0x3]
  %v2296 = vrot.slane %v2224, 1
  %v2297 = vrot.slane %v2225, 1
  %v2298 = vsel %vm222, %v2296, %v2297
  %v2299 = vrot.slane %v2226, 1
  %v2300 = vrot.slane %v2227, 1
  %v2301 = vsel %vm222, %v2299, %v2300
  %v2302 = vrot.slane %v2228, 1
  %v2303 = vrot.slane %v2229, 1
  %v2304 = vsel %vm222, %v2302, %v2303
  %v2305 = vrot.slane %v2230, 1
  %v2306 = vrot.slane %v2231, 1
  %v2307 = vsel %vm222, %v2305, %v2306
  %v2308 = vrot.slane %v2232, 1
  %v2309 = vrot.slane %v2233, 1
  %v2310 = vsel %vm222, %v2308, %v2309
  %v2311 = vrot.slane %v2234, 1
  %v2312 = vrot.slane %v2235, 1
  %v2313 = vsel %vm222, %v2311, %v2312
  %v2314 = vrot.slane %v2236, 1
  %v2315 = vrot.slane %v2237, 1
  %v2316 = vsel %vm222, %v2314, %v2315
  %v2317 = vrot.slane %v2238, 1
  %v2318 = vrot.slane %v2239, 1
  %v2319 = vsel %vm222, %v2317, %v2318
  %v2320 = vrot.slane %v2244, 1
  %v2321 = vrot.slane %v2245, 1
  %v2322 = vsel %vm222, %v2320, %v2321
  %v2323 = vrot.slane %v2246, 1
  %v2324 = vrot.slane %v2247, 1
  %v2325 = vsel %vm222, %v2323, %v2324
  %v2326 = vrot.slane %v2248, 1
  %v2327 = vrot.slane %v2249, 1
  %v2328 = vsel %vm222, %v2326, %v2327
  %v2329 = vrot.slane %v2250, 1
  %v2330 = vrot.slane %v2251, 1
  %v2331 = vsel %vm222, %v2329, %v2330
  %v2332 = vrot.slane %v2252, 1
  %v2333 = vrot.slane %v2253, 1
  %v2334 = vsel %vm222, %v2332, %v2333
  %v2335 = vrot.slane %v2254, 1
  %v2336 = vrot.slane %v2255, 1
  %v2337 = vsel %vm222, %v2335, %v2336
  %v2338 = vrot.slane %v2256, 1
  %v2339 = vrot.slane %v2257, 1
  %v2340 = vsel %vm222, %v2338, %v2339
  %v2341 = vrot.slane %v2258, 1
  %v2342 = vrot.slane %v2259, 1
  %v2343 = vsel %vm222, %v2341, %v2342
  %v2344 = vrot.slane %v2224, 2
  %v2345 = vrot.slane %v2225, 2
  %v2346 = vsel %vm271, %v2344, %v2345
  %v2347 = vrot.slane %v2226, 2
  %v2348 = vrot.slane %v2227, 2
  %v2349 = vsel %vm271, %v2347, %v2348
  %v2350 = vrot.slane %v2228, 2
  %v2351 = vrot.slane %v2229, 2
  %v2352 = vsel %vm271, %v2350, %v2351
  %v2353 = vrot.slane %v2230, 2
  %v2354 = vrot.slane %v2231, 2
  %v2355 = vsel %vm271, %v2353, %v2354
  %v2356 = vrot.slane %v2232, 2
  %v2357 = vrot.slane %v2233, 2
  %v2358 = vsel %vm271, %v2356, %v2357
  %v2359 = vrot.slane %v2234, 2
  %v2360 = vrot.slane %v2235, 2
  %v2361 = vsel %vm271, %v2359, %v2360
  %v2362 = vrot.slane %v2236, 2
  %v2363 = vrot.slane %v2237, 2
  %v2364 = vsel %vm271, %v2362, %v2363
  %v2365 = vrot.slane %v2238, 2
  %v2366 = vrot.slane %v2239, 2
  %v2367 = vsel %vm271, %v2365, %v2366
  %v2368 = vrot.slane %v2244, 2
  %v2369 = vrot.slane %v2245, 2
  %v2370 = vsel %vm271, %v2368, %v2369
  %v2371 = vrot.slane %v2246, 2
  %v2372 = vrot.slane %v2247, 2
  %v2373 = vsel %vm271, %v2371, %v2372
  %v2374 = vrot.slane %v2248, 2
  %v2375 = vrot.slane %v2249, 2
  %v2376 = vsel %vm271, %v2374, %v2375
  %v2377 = vrot.slane %v2250, 2
  %v2378 = vrot.slane %v2251, 2
  %v2379 = vsel %vm271, %v2377, %v2378
  %v2380 = vrot.slane %v2252, 2
  %v2381 = vrot.slane %v2253, 2
  %v2382 = vsel %vm271, %v2380, %v2381
  %v2383 = vrot.slane %v2254, 2
  %v2384 = vrot.slane %v2255, 2
  %v2385 = vsel %vm271, %v2383, %v2384
  %v2386 = vrot.slane %v2256, 2
  %v2387 = vrot.slane %v2257, 2
  %v2388 = vsel %vm271, %v2386, %v2387
  %v2389 = vrot.slane %v2258, 2
  %v2390 = vrot.slane %v2259, 2
  %v2391 = vsel %vm271, %v2389, %v2390
  %v2396 = vrot.slane %v2240, 1
  %v2397 = vrot.slane %v2241, 1
  %v2398 = vsel %vm222, %v2396, %v2397
  %v2399 = vrot.slane %v2260, 1
  %v2400 = vrot.slane %v2261, 1
  %v2401 = vsel %vm222, %v2399, %v2400
  %v2418 = vrot.slane %v2240, 2
  %v2419 = vrot.slane %v2241, 2
  %v2420 = vsel %vm271, %v2418, %v2419
  %v2421 = vrot.slane %v2260, 2
  %v2422 = vrot.slane %v2261, 2
  %v2423 = vsel %vm271, %v2421, %v2422
  %v2428 = vrot.slane %v2242, 1
  %v2429 = vrot.slane %v2243, 1
  %v2430 = vsel %vm222, %v2428, %v2429
  %v2431 = vrot.slane %v2262, 1
  %v2432 = vrot.slane %v2263, 1
  %v2433 = vsel %vm222, %v2431, %v2432
  %v2434 = vrot.slane %v2242, 2
  %v2435 = vrot.slane %v2243, 2
  %v2436 = vsel %vm271, %v2434, %v2435
  %v2437 = vrot.slane %v2262, 2
  %v2438 = vrot.slane %v2263, 2
  %v2439 = vsel %vm271, %v2437, %v2438
  %2440 = vrot.lane.b32.xlu0 %v2298, 32
  %v2441 = vpop.permute.xlu0 %2440
  %2442 = vrot.lane.b32.xlu0 %v2301, 32
  %v2443 = vpop.permute.xlu0 %2442
  %2444 = vrot.lane.b32.xlu0 %v2304, 32
  %v2445 = vpop.permute.xlu0 %2444
  %2446 = vrot.lane.b32.xlu0 %v2307, 32
  %v2447 = vpop.permute.xlu0 %2446
  %2448 = vrot.lane.b32.xlu0 %v2310, 32
  %v2449 = vpop.permute.xlu0 %2448
  %2450 = vrot.lane.b32.xlu0 %v2313, 32
  %v2451 = vpop.permute.xlu0 %2450
  %2452 = vrot.lane.b32.xlu0 %v2316, 32
  %v2453 = vpop.permute.xlu0 %2452
  %2454 = vrot.lane.b32.xlu0 %v2319, 32
  %v2455 = vpop.permute.xlu0 %2454
  %2456 = vrot.lane.b32.xlu0 %v2322, 32
  %v2457 = vpop.permute.xlu0 %2456
  %2458 = vrot.lane.b32.xlu0 %v2325, 32
  %v2459 = vpop.permute.xlu0 %2458
  %2460 = vrot.lane.b32.xlu0 %v2328, 32
  %v2461 = vpop.permute.xlu0 %2460
  %2462 = vrot.lane.b32.xlu0 %v2331, 32
  %v2463 = vpop.permute.xlu0 %2462
  %2464 = vrot.lane.b32.xlu0 %v2334, 32
  %v2465 = vpop.permute.xlu0 %2464
  %2466 = vrot.lane.b32.xlu0 %v2337, 32
  %v2467 = vpop.permute.xlu0 %2466
  %2468 = vrot.lane.b32.xlu0 %v2340, 32
  %v2469 = vpop.permute.xlu0 %2468
  %2470 = vrot.lane.b32.xlu0 %v2343, 32
  %v2471 = vpop.permute.xlu0 %2470
  %2488 = vrot.lane.b32.xlu0 %v2346, 64
  %v2489 = vpop.permute.xlu0 %2488
  %2490 = vrot.lane.b32.xlu0 %v2349, 64
  %v2491 = vpop.permute.xlu0 %2490
  %2492 = vrot.lane.b32.xlu0 %v2352, 64
  %v2493 = vpop.permute.xlu0 %2492
  %2494 = vrot.lane.b32.xlu0 %v2355, 64
  %v2495 = vpop.permute.xlu0 %2494
  %2496 = vrot.lane.b32.xlu0 %v2358, 64
  %v2497 = vpop.permute.xlu0 %2496
  %2498 = vrot.lane.b32.xlu0 %v2361, 64
  %v2499 = vpop.permute.xlu0 %2498
  %2500 = vrot.lane.b32.xlu0 %v2364, 64
  %v2501 = vpop.permute.xlu0 %2500
  %2502 = vrot.lane.b32.xlu0 %v2367, 64
  %v2503 = vpop.permute.xlu0 %2502
  %2504 = vrot.lane.b32.xlu0 %v2370, 64
  %v2505 = vpop.permute.xlu0 %2504
  %2506 = vrot.lane.b32.xlu0 %v2373, 64
  %v2507 = vpop.permute.xlu0 %2506
  %2508 = vrot.lane.b32.xlu0 %v2376, 64
  %v2509 = vpop.permute.xlu0 %2508
  %2510 = vrot.lane.b32.xlu0 %v2379, 64
  %v2511 = vpop.permute.xlu0 %2510
  %2512 = vrot.lane.b32.xlu0 %v2382, 64
  %v2513 = vpop.permute.xlu0 %2512
  %2514 = vrot.lane.b32.xlu0 %v2385, 64
  %v2515 = vpop.permute.xlu0 %2514
  %2516 = vrot.lane.b32.xlu0 %v2388, 64
  %v2517 = vpop.permute.xlu0 %2516
  %2518 = vrot.lane.b32.xlu0 %v2391, 64
  %v2519 = vpop.permute.xlu0 %2518
  %2536 = vrot.lane.b32.xlu0 %v2226, 96
  %v2537 = vpop.permute.xlu0 %2536
  %2538 = vrot.lane.b32.xlu0 %v2228, 96
  %v2539 = vpop.permute.xlu0 %2538
  %2540 = vrot.lane.b32.xlu0 %v2230, 96
  %v2541 = vpop.permute.xlu0 %2540
  %2542 = vrot.lane.b32.xlu0 %v2232, 96
  %v2543 = vpop.permute.xlu0 %2542
  %2544 = vrot.lane.b32.xlu0 %v2234, 96
  %v2545 = vpop.permute.xlu0 %2544
  %2546 = vrot.lane.b32.xlu0 %v2236, 96
  %v2547 = vpop.permute.xlu0 %2546
  %2548 = vrot.lane.b32.xlu0 %v2238, 96
  %v2549 = vpop.permute.xlu0 %2548
  %2550 = vrot.lane.b32.xlu0 %v2240, 96
  %v2551 = vpop.permute.xlu0 %2550
  %2552 = vrot.lane.b32.xlu0 %v2246, 96
  %v2553 = vpop.permute.xlu0 %2552
  %2554 = vrot.lane.b32.xlu0 %v2248, 96
  %v2555 = vpop.permute.xlu0 %2554
  %2556 = vrot.lane.b32.xlu0 %v2250, 96
  %v2557 = vpop.permute.xlu0 %2556
  %2558 = vrot.lane.b32.xlu0 %v2252, 96
  %v2559 = vpop.permute.xlu0 %2558
  %2560 = vrot.lane.b32.xlu0 %v2254, 96
  %v2561 = vpop.permute.xlu0 %2560
  %2562 = vrot.lane.b32.xlu0 %v2256, 96
  %v2563 = vpop.permute.xlu0 %2562
  %2564 = vrot.lane.b32.xlu0 %v2258, 96
  %v2565 = vpop.permute.xlu0 %2564
  %2566 = vrot.lane.b32.xlu0 %v2260, 96
  %v2567 = vpop.permute.xlu0 %2566
  %2584 = vrot.lane.b32.xlu0 %v2349, 32
  %v2585 = vpop.permute.xlu0 %2584
  %2586 = vrot.lane.b32.xlu0 %v2352, 32
  %v2587 = vpop.permute.xlu0 %2586
  %2588 = vrot.lane.b32.xlu0 %v2355, 32
  %v2589 = vpop.permute.xlu0 %2588
  %2590 = vrot.lane.b32.xlu0 %v2358, 32
  %v2591 = vpop.permute.xlu0 %2590
  %2592 = vrot.lane.b32.xlu0 %v2361, 32
  %v2593 = vpop.permute.xlu0 %2592
  %2594 = vrot.lane.b32.xlu0 %v2364, 32
  %v2595 = vpop.permute.xlu0 %2594
  %2596 = vrot.lane.b32.xlu0 %v2367, 32
  %v2597 = vpop.permute.xlu0 %2596
  %2598 = vrot.lane.b32.xlu0 %v2420, 32
  %v2599 = vpop.permute.xlu0 %2598
  %2600 = vrot.lane.b32.xlu0 %v2373, 32
  %v2601 = vpop.permute.xlu0 %2600
  %2602 = vrot.lane.b32.xlu0 %v2376, 32
  %v2603 = vpop.permute.xlu0 %2602
  %2604 = vrot.lane.b32.xlu0 %v2379, 32
  %v2605 = vpop.permute.xlu0 %2604
  %2606 = vrot.lane.b32.xlu0 %v2382, 32
  %v2607 = vpop.permute.xlu0 %2606
  %2608 = vrot.lane.b32.xlu0 %v2385, 32
  %v2609 = vpop.permute.xlu0 %2608
  %2610 = vrot.lane.b32.xlu0 %v2388, 32
  %v2611 = vpop.permute.xlu0 %2610
  %2612 = vrot.lane.b32.xlu0 %v2391, 32
  %v2613 = vpop.permute.xlu0 %2612
  %2614 = vrot.lane.b32.xlu0 %v2423, 32
  %v2615 = vpop.permute.xlu0 %2614
  %2632 = vrot.lane.b32.xlu0 %v2228, 64
  %v2633 = vpop.permute.xlu0 %2632
  %2634 = vrot.lane.b32.xlu0 %v2230, 64
  %v2635 = vpop.permute.xlu0 %2634
  %2636 = vrot.lane.b32.xlu0 %v2232, 64
  %v2637 = vpop.permute.xlu0 %2636
  %2638 = vrot.lane.b32.xlu0 %v2234, 64
  %v2639 = vpop.permute.xlu0 %2638
  %2640 = vrot.lane.b32.xlu0 %v2236, 64
  %v2641 = vpop.permute.xlu0 %2640
  %2642 = vrot.lane.b32.xlu0 %v2238, 64
  %v2643 = vpop.permute.xlu0 %2642
  %2644 = vrot.lane.b32.xlu0 %v2240, 64
  %v2645 = vpop.permute.xlu0 %2644
  %2646 = vrot.lane.b32.xlu0 %v2242, 64
  %v2647 = vpop.permute.xlu0 %2646
  %2648 = vrot.lane.b32.xlu0 %v2248, 64
  %v2649 = vpop.permute.xlu0 %2648
  %2650 = vrot.lane.b32.xlu0 %v2250, 64
  %v2651 = vpop.permute.xlu0 %2650
  %2652 = vrot.lane.b32.xlu0 %v2252, 64
  %v2653 = vpop.permute.xlu0 %2652
  %2654 = vrot.lane.b32.xlu0 %v2254, 64
  %v2655 = vpop.permute.xlu0 %2654
  %2656 = vrot.lane.b32.xlu0 %v2256, 64
  %v2657 = vpop.permute.xlu0 %2656
  %2658 = vrot.lane.b32.xlu0 %v2258, 64
  %v2659 = vpop.permute.xlu0 %2658
  %2660 = vrot.lane.b32.xlu0 %v2260, 64
  %v2661 = vpop.permute.xlu0 %2660
  %2662 = vrot.lane.b32.xlu0 %v2262, 64
  %v2663 = vpop.permute.xlu0 %2662
  %2680 = vrot.lane.b32.xlu0 %v2304, 96
  %v2681 = vpop.permute.xlu0 %2680
  %2682 = vrot.lane.b32.xlu0 %v2307, 96
  %v2683 = vpop.permute.xlu0 %2682
  %2684 = vrot.lane.b32.xlu0 %v2310, 96
  %v2685 = vpop.permute.xlu0 %2684
  %2686 = vrot.lane.b32.xlu0 %v2313, 96
  %v2687 = vpop.permute.xlu0 %2686
  %2688 = vrot.lane.b32.xlu0 %v2316, 96
  %v2689 = vpop.permute.xlu0 %2688
  %2690 = vrot.lane.b32.xlu0 %v2319, 96
  %v2691 = vpop.permute.xlu0 %2690
  %2692 = vrot.lane.b32.xlu0 %v2398, 96
  %v2693 = vpop.permute.xlu0 %2692
  %2694 = vrot.lane.b32.xlu0 %v2430, 96
  %v2695 = vpop.permute.xlu0 %2694
  %2696 = vrot.lane.b32.xlu0 %v2328, 96
  %v2697 = vpop.permute.xlu0 %2696
  %2698 = vrot.lane.b32.xlu0 %v2331, 96
  %v2699 = vpop.permute.xlu0 %2698
  %2700 = vrot.lane.b32.xlu0 %v2334, 96
  %v2701 = vpop.permute.xlu0 %2700
  %2702 = vrot.lane.b32.xlu0 %v2337, 96
  %v2703 = vpop.permute.xlu0 %2702
  %2704 = vrot.lane.b32.xlu0 %v2340, 96
  %v2705 = vpop.permute.xlu0 %2704
  %2706 = vrot.lane.b32.xlu0 %v2343, 96
  %v2707 = vpop.permute.xlu0 %2706
  %2708 = vrot.lane.b32.xlu0 %v2401, 96
  %v2709 = vpop.permute.xlu0 %2708
  %2710 = vrot.lane.b32.xlu0 %v2433, 96
  %v2711 = vpop.permute.xlu0 %2710
  %v2728 = vsel %vm68, %v2224, %v2441
  %v2729 = vsel %vm68, %v2226, %v2443
  %v2730 = vsel %vm68, %v2228, %v2445
  %v2731 = vsel %vm68, %v2230, %v2447
  %v2732 = vsel %vm68, %v2232, %v2449
  %v2733 = vsel %vm68, %v2234, %v2451
  %v2734 = vsel %vm68, %v2236, %v2453
  %v2735 = vsel %vm68, %v2238, %v2455
  %v2736 = vsel %vm68, %v2244, %v2457
  %v2737 = vsel %vm68, %v2246, %v2459
  %v2738 = vsel %vm68, %v2248, %v2461
  %v2739 = vsel %vm68, %v2250, %v2463
  %v2740 = vsel %vm68, %v2252, %v2465
  %v2741 = vsel %vm68, %v2254, %v2467
  %v2742 = vsel %vm68, %v2256, %v2469
  %v2743 = vsel %vm68, %v2258, %v2471
  %v2744 = vsel %vm1703, %v2728, %v2489
  %v2745 = vsel %vm1703, %v2729, %v2491
  %v2746 = vsel %vm1703, %v2730, %v2493
  %v2747 = vsel %vm1703, %v2731, %v2495
  %v2748 = vsel %vm1703, %v2732, %v2497
  %v2749 = vsel %vm1703, %v2733, %v2499
  %v2750 = vsel %vm1703, %v2734, %v2501
  %v2751 = vsel %vm1703, %v2735, %v2503
  %v2752 = vsel %vm1703, %v2736, %v2505
  %v2753 = vsel %vm1703, %v2737, %v2507
  %v2754 = vsel %vm1703, %v2738, %v2509
  %v2755 = vsel %vm1703, %v2739, %v2511
  %v2756 = vsel %vm1703, %v2740, %v2513
  %v2757 = vsel %vm1703, %v2741, %v2515
  %v2758 = vsel %vm1703, %v2742, %v2517
  %v2759 = vsel %vm1703, %v2743, %v2519
  %v2760 = vsel %vm1720, %v2744, %v2537
  %v2761 = vsel %vm1720, %v2745, %v2539
  %v2762 = vsel %vm1720, %v2746, %v2541
  %v2763 = vsel %vm1720, %v2747, %v2543
  %v2764 = vsel %vm1720, %v2748, %v2545
  %v2765 = vsel %vm1720, %v2749, %v2547
  %v2766 = vsel %vm1720, %v2750, %v2549
  %v2767 = vsel %vm1720, %v2751, %v2551
  %v2768 = vsel %vm1720, %v2752, %v2553
  %v2769 = vsel %vm1720, %v2753, %v2555
  %v2770 = vsel %vm1720, %v2754, %v2557
  %v2771 = vsel %vm1720, %v2755, %v2559
  %v2772 = vsel %vm1720, %v2756, %v2561
  %v2773 = vsel %vm1720, %v2757, %v2563
  %v2774 = vsel %vm1720, %v2758, %v2565
  %v2775 = vsel %vm1720, %v2759, %v2567
  %v2776 = vsel %vm68, %v2301, %v2585
  %v2777 = vsel %vm68, %v2304, %v2587
  %v2778 = vsel %vm68, %v2307, %v2589
  %v2779 = vsel %vm68, %v2310, %v2591
  %v2780 = vsel %vm68, %v2313, %v2593
  %v2781 = vsel %vm68, %v2316, %v2595
  %v2782 = vsel %vm68, %v2319, %v2597
  %v2783 = vsel %vm68, %v2398, %v2599
  %v2784 = vsel %vm68, %v2325, %v2601
  %v2785 = vsel %vm68, %v2328, %v2603
  %v2786 = vsel %vm68, %v2331, %v2605
  %v2787 = vsel %vm68, %v2334, %v2607
  %v2788 = vsel %vm68, %v2337, %v2609
  %v2789 = vsel %vm68, %v2340, %v2611
  %v2790 = vsel %vm68, %v2343, %v2613
  %v2791 = vsel %vm68, %v2401, %v2615
  %v2792 = vsel %vm1703, %v2776, %v2633
  %v2793 = vsel %vm1703, %v2777, %v2635
  %v2794 = vsel %vm1703, %v2778, %v2637
  %v2795 = vsel %vm1703, %v2779, %v2639
  %v2796 = vsel %vm1703, %v2780, %v2641
  %v2797 = vsel %vm1703, %v2781, %v2643
  %v2798 = vsel %vm1703, %v2782, %v2645
  %v2799 = vsel %vm1703, %v2783, %v2647
  %v2800 = vsel %vm1703, %v2784, %v2649
  %v2801 = vsel %vm1703, %v2785, %v2651
  %v2802 = vsel %vm1703, %v2786, %v2653
  %v2803 = vsel %vm1703, %v2787, %v2655
  %v2804 = vsel %vm1703, %v2788, %v2657
  %v2805 = vsel %vm1703, %v2789, %v2659
  %v2806 = vsel %vm1703, %v2790, %v2661
  %v2807 = vsel %vm1703, %v2791, %v2663
  %v2808 = vsel %vm1720, %v2792, %v2681
  %v2809 = vsel %vm1720, %v2793, %v2683
  %v2810 = vsel %vm1720, %v2794, %v2685
  %v2811 = vsel %vm1720, %v2795, %v2687
  %v2812 = vsel %vm1720, %v2796, %v2689
  %v2813 = vsel %vm1720, %v2797, %v2691
  %v2814 = vsel %vm1720, %v2798, %v2693
  %v2815 = vsel %vm1720, %v2799, %v2695
  %v2816 = vsel %vm1720, %v2800, %v2697
  %v2817 = vsel %vm1720, %v2801, %v2699
  %v2818 = vsel %vm1720, %v2802, %v2701
  %v2819 = vsel %vm1720, %v2803, %v2703
  %v2820 = vsel %vm1720, %v2804, %v2705
  %v2821 = vsel %vm1720, %v2805, %v2707
  %v2822 = vsel %vm1720, %v2806, %v2709
  %v2823 = vsel %vm1720, %v2807, %v2711
  %v2824 = vsel %vm68, %v2352, 0
  %v2826 = vsel %vm68, %v2355, 0
  %v2828 = vsel %vm68, %v2358, 0
  %v2830 = vsel %vm68, %v2361, 0
  %v2832 = vsel %vm68, %v2364, 0
  %v2834 = vsel %vm68, %v2367, 0
  %v2836 = vsel %vm68, %v2420, 0
  %v2838 = vsel %vm68, %v2436, 0
  %v2840 = vsel %vm68, %v2376, 0
  %v2842 = vsel %vm68, %v2379, 0
  %v2844 = vsel %vm68, %v2382, 0
  %v2846 = vsel %vm68, %v2385, 0
  %v2848 = vsel %vm68, %v2388, 0
  %v2850 = vsel %vm68, %v2391, 0
  %v2852 = vsel %vm68, %v2423, 0
  %v2854 = vsel %vm68, %v2439, 0
  %2856 = vmatprep.subr.mxu0 0.0
  %2857 = vmatpush1.msra.mxu0 %v2199
  %2858 = vmatprep.subr.mxu0 0.0
  %2859 = vmatpush1.msra.mxu0 %v2198
  %2860 = vmatprep.subr.mxu0 0.0
  %2861 = vmatpush1.msra.mxu0 %v2197
  %2862 = vmatprep.subr.mxu0 0.0
  %2863 = vmatpush1.msra.mxu0 %v2196
  %2864 = vmatprep.subr.mxu0 0.0
  %2865 = vmatpush1.msra.mxu0 %v2195
  %2866 = vmatprep.subr.mxu0 0.0
  %2867 = vmatpush1.msra.mxu0 %v2194
  %2868 = vmatprep.subr.mxu0 0.0
  %2869 = vmatpush1.msra.mxu0 %v2193
  %2870 = vmatprep.subr.mxu0 0.0
  %2871 = vmatpush1.msra.mxu0 %v2192
  %2872 = vmatprep.subr.mxu0 0.0
  %2873 = vmatpush1.msra.mxu0 %v2191
  %2874 = vmatprep.subr.mxu0 0.0
  %2875 = vmatpush1.msra.mxu0 %v2190
  %2876 = vmatprep.subr.mxu0 0.0
  %2877 = vmatpush1.msra.mxu0 %v2189
  %2878 = vmatprep.subr.mxu0 0.0
  %2879 = vmatpush1.msra.mxu0 %v2188
  %2880 = vmatprep.subr.mxu0 0.0
  %2881 = vmatpush1.msra.mxu0 %v2187
  %2882 = vmatprep.subr.mxu0 0.0
  %2883 = vmatpush1.msra.mxu0 %v2186
  %2884 = vmatprep.subr.mxu0 0.0
  %2885 = vmatpush1.msra.mxu0 %v2185
  %2886 = vmatprep.subr.mxu0 0.0
  %2887 = vmatpush1.msra.mxu0 %v2184
  %2888 = vmatprep.subr.mxu0 0.0
  %2889 = vmatpush2.msra.mxu0 %v2215
  %2890 = vmatprep.subr.mxu0 0.0
  %2891 = vmatpush2.msra.mxu0 %v2214
  %2892 = vmatprep.subr.mxu0 0.0
  %2893 = vmatpush2.msra.mxu0 %v2213
  %2894 = vmatprep.subr.mxu0 0.0
  %2895 = vmatpush2.msra.mxu0 %v2212
  %2896 = vmatprep.subr.mxu0 0.0
  %2897 = vmatpush2.msra.mxu0 %v2211
  %2898 = vmatprep.subr.mxu0 0.0
  %2899 = vmatpush2.msra.mxu0 %v2210
  %2900 = vmatprep.subr.mxu0 0.0
  %2901 = vmatpush2.msra.mxu0 %v2209
  %2902 = vmatprep.subr.mxu0 0.0
  %2903 = vmatpush2.msra.mxu0 %v2208
  %2904 = vmatprep.subr.mxu0 0.0
  %2905 = vmatpush2.msra.mxu0 %v2207
  %2906 = vmatprep.subr.mxu0 0.0
  %2907 = vmatpush2.msra.mxu0 %v2206
  %2908 = vmatprep.subr.mxu0 0.0
  %2909 = vmatpush2.msra.mxu0 %v2205
  %2910 = vmatprep.subr.mxu0 0.0
  %2911 = vmatpush2.msra.mxu0 %v2204
  %2912 = vmatprep.subr.mxu0 0.0
  %2913 = vmatpush2.msra.mxu0 %v2203
  %2914 = vmatprep.subr.mxu0 0.0
  %2915 = vmatpush2.msra.mxu0 %v2202
  %2916 = vmatprep.subr.mxu0 0.0
  %2917 = vmatpush2.msra.mxu0 %v2201
  %2918 = vmatprep.subr.mxu0 0.0
  %2919 = vmatpush2.msra.mxu0 %v2200
  %2920 = vmatprep.mubr.f32.mxu0 %v2808
  %2921 = vmatmul.mubr.f32.gmra.mxu0 %v2760
  %v2922 = vpop.f32.mrf.mxu0
  %v2923 = vadd.f32 0.0, %v2922
  %v2924 = vpop.f32.mrf.mxu0
  %2925 = vmatprep.mubr.f32.mxu0 %v2809
  %2926 = vmatmul.mubr.f32.gmra.mxu0 %v2761
  %v2927 = vpop.f32.mrf.mxu0
  %v2928 = vadd.f32 0.0, %v2927
  %v2929 = vpop.f32.mrf.mxu0
  %2930 = vmatprep.mubr.f32.mxu0 %v2810
  %2931 = vmatmul.mubr.f32.gmra.mxu0 %v2762
  %v2932 = vpop.f32.mrf.mxu0
  %v2933 = vadd.f32 0.0, %v2932
  %v2934 = vpop.f32.mrf.mxu0
  %2935 = vmatprep.mubr.f32.mxu0 %v2811
  %2936 = vmatmul.mubr.f32.gmra.mxu0 %v2763
  %v2937 = vpop.f32.mrf.mxu0
  %v2938 = vadd.f32 0.0, %v2937
  %v2939 = vpop.f32.mrf.mxu0
  %2940 = vmatprep.mubr.f32.mxu0 %v2812
  %2941 = vmatmul.mubr.f32.gmra.mxu0 %v2764
  %v2942 = vpop.f32.mrf.mxu0
  %v2943 = vadd.f32 0.0, %v2942
  %v2944 = vpop.f32.mrf.mxu0
  %2945 = vmatprep.mubr.f32.mxu0 %v2813
  %2946 = vmatmul.mubr.f32.gmra.mxu0 %v2765
  %v2947 = vpop.f32.mrf.mxu0
  %v2948 = vadd.f32 0.0, %v2947
  %v2949 = vpop.f32.mrf.mxu0
  %2950 = vmatprep.mubr.f32.mxu0 %v2814
  %2951 = vmatmul.mubr.f32.gmra.mxu0 %v2766
  %v2952 = vpop.f32.mrf.mxu0
  %v2953 = vadd.f32 0.0, %v2952
  %v2954 = vpop.f32.mrf.mxu0
  %2955 = vmatprep.mubr.f32.mxu0 %v2815
  %2956 = vmatmul.mubr.f32.gmra.mxu0 %v2767
  %v2957 = vpop.f32.mrf.mxu0
  %v2958 = vadd.f32 0.0, %v2957
  %v2959 = vpop.f32.mrf.mxu0
  %2960 = vmatprep.mubr.f32.mxu0 %v2816
  %2961 = vmatmul.mubr.f32.gmra.mxu0 %v2768
  %v2962 = vpop.f32.mrf.mxu0
  %v2963 = vadd.f32 0.0, %v2962
  %v2964 = vpop.f32.mrf.mxu0
  %2965 = vmatprep.mubr.f32.mxu0 %v2817
  %2966 = vmatmul.mubr.f32.gmra.mxu0 %v2769
  %v2967 = vpop.f32.mrf.mxu0
  %v2968 = vadd.f32 0.0, %v2967
  %v2969 = vpop.f32.mrf.mxu0
  %2970 = vmatprep.mubr.f32.mxu0 %v2818
  %2971 = vmatmul.mubr.f32.gmra.mxu0 %v2770
  %v2972 = vpop.f32.mrf.mxu0
  %v2973 = vadd.f32 0.0, %v2972
  %v2974 = vpop.f32.mrf.mxu0
  %2975 = vmatprep.mubr.f32.mxu0 %v2819
  %2976 = vmatmul.mubr.f32.gmra.mxu0 %v2771
  %v2977 = vpop.f32.mrf.mxu0
  %v2978 = vadd.f32 0.0, %v2977
  %v2979 = vpop.f32.mrf.mxu0
  %2980 = vmatprep.mubr.f32.mxu0 %v2820
  %2981 = vmatmul.mubr.f32.gmra.mxu0 %v2772
  %v2982 = vpop.f32.mrf.mxu0
  %v2983 = vadd.f32 0.0, %v2982
  %v2984 = vpop.f32.mrf.mxu0
  %2985 = vmatprep.mubr.f32.mxu0 %v2821
  %2986 = vmatmul.mubr.f32.gmra.mxu0 %v2773
  %v2987 = vpop.f32.mrf.mxu0
  %v2988 = vadd.f32 0.0, %v2987
  %v2989 = vpop.f32.mrf.mxu0
  %2990 = vmatprep.mubr.f32.mxu0 %v2822
  %2991 = vmatmul.mubr.f32.gmra.mxu0 %v2774
  %v2992 = vpop.f32.mrf.mxu0
  %v2993 = vadd.f32 0.0, %v2992
  %v2994 = vpop.f32.mrf.mxu0
  %2995 = vmatprep.mubr.f32.mxu0 %v2823
  %2996 = vmatmul.mubr.f32.gmra.mxu0 %v2775
  %v2997 = vpop.f32.mrf.mxu0
  %v2998 = vadd.f32 0.0, %v2997
  %v2999 = vpop.f32.mrf.mxu0
  %3000 = vdwg.mxu0
  %3001 = vmatprep.subr.mxu0 0.0
  %3002 = vmatpush1.msra.mxu0 0.0
  %3003 = vmatprep.subr.mxu0 0.0
  %3004 = vmatpush1.msra.mxu0 0.0
  %3005 = vmatprep.subr.mxu0 0.0
  %3006 = vmatpush1.msra.mxu0 0.0
  %3007 = vmatprep.subr.mxu0 0.0
  %3008 = vmatpush1.msra.mxu0 0.0
  %3009 = vmatprep.subr.mxu0 0.0
  %3010 = vmatpush1.msra.mxu0 0.0
  %3011 = vmatprep.subr.mxu0 0.0
  %3012 = vmatpush1.msra.mxu0 0.0
  %3013 = vmatprep.subr.mxu0 0.0
  %3014 = vmatpush1.msra.mxu0 0.0
  %3015 = vmatprep.subr.mxu0 0.0
  %3016 = vmatpush1.msra.mxu0 0.0
  %3017 = vmatprep.subr.mxu0 0.0
  %3018 = vmatpush1.msra.mxu0 0.0
  %3019 = vmatprep.subr.mxu0 0.0
  %3020 = vmatpush1.msra.mxu0 0.0
  %3021 = vmatprep.subr.mxu0 0.0
  %3022 = vmatpush1.msra.mxu0 0.0
  %3023 = vmatprep.subr.mxu0 0.0
  %3024 = vmatpush1.msra.mxu0 0.0
  %3025 = vmatprep.subr.mxu0 0.0
  %3026 = vmatpush1.msra.mxu0 %v2219
  %3027 = vmatprep.subr.mxu0 0.0
  %3028 = vmatpush1.msra.mxu0 %v2218
  %3029 = vmatprep.subr.mxu0 0.0
  %3030 = vmatpush1.msra.mxu0 %v2217
  %3031 = vmatprep.subr.mxu0 0.0
  %3032 = vmatpush1.msra.mxu0 %v2216
  %3033 = vmatprep.subr.mxu0 0.0
  %3034 = vmatpush2.msra.mxu0 0.0
  %3035 = vmatprep.subr.mxu0 0.0
  %3036 = vmatpush2.msra.mxu0 0.0
  %3037 = vmatprep.subr.mxu0 0.0
  %3038 = vmatpush2.msra.mxu0 0.0
  %3039 = vmatprep.subr.mxu0 0.0
  %3040 = vmatpush2.msra.mxu0 0.0
  %3041 = vmatprep.subr.mxu0 0.0
  %3042 = vmatpush2.msra.mxu0 0.0
  %3043 = vmatprep.subr.mxu0 0.0
  %3044 = vmatpush2.msra.mxu0 0.0
  %3045 = vmatprep.subr.mxu0 0.0
  %3046 = vmatpush2.msra.mxu0 0.0
  %3047 = vmatprep.subr.mxu0 0.0
  %3048 = vmatpush2.msra.mxu0 0.0
  %3049 = vmatprep.subr.mxu0 0.0
  %3050 = vmatpush2.msra.mxu0 0.0
  %3051 = vmatprep.subr.mxu0 0.0
  %3052 = vmatpush2.msra.mxu0 0.0
  %3053 = vmatprep.subr.mxu0 0.0
  %3054 = vmatpush2.msra.mxu0 0.0
  %3055 = vmatprep.subr.mxu0 0.0
  %3056 = vmatpush2.msra.mxu0 0.0
  %3057 = vmatprep.subr.mxu0 0.0
  %3058 = vmatpush2.msra.mxu0 0.0
  %3059 = vmatprep.subr.mxu0 0.0
  %3060 = vmatpush2.msra.mxu0 0.0
  %3061 = vmatprep.subr.mxu0 0.0
  %3062 = vmatpush2.msra.mxu0 0.0
  %3063 = vmatprep.subr.mxu0 0.0
  %3064 = vmatpush2.msra.mxu0 0.0
  %3065 = vmatprep.mubr.f32.mxu0 0.0
  %3066 = vmatmul.mubr.f32.gmra.mxu0 %v2824
  %v3067 = vpop.f32.mrf.mxu0
  %v3068 = vadd.f32 %v2923, %v3067
  %v3069 = vpop.f32.mrf.mxu0
  %3070 = vmatprep.mubr.f32.mxu0 0.0
  %3071 = vmatmul.mubr.f32.gmra.mxu0 %v2826
  %v3072 = vpop.f32.mrf.mxu0
  %v3073 = vadd.f32 %v2928, %v3072
  %v3074 = vpop.f32.mrf.mxu0
  %3075 = vmatprep.mubr.f32.mxu0 0.0
  %3076 = vmatmul.mubr.f32.gmra.mxu0 %v2828
  %v3077 = vpop.f32.mrf.mxu0
  %v3078 = vadd.f32 %v2933, %v3077
  %v3079 = vpop.f32.mrf.mxu0
  %3080 = vmatprep.mubr.f32.mxu0 0.0
  %3081 = vmatmul.mubr.f32.gmra.mxu0 %v2830
  %v3082 = vpop.f32.mrf.mxu0
  %v3083 = vadd.f32 %v2938, %v3082
  %v3084 = vpop.f32.mrf.mxu0
  %3085 = vmatprep.mubr.f32.mxu0 0.0
  %3086 = vmatmul.mubr.f32.gmra.mxu0 %v2832
  %v3087 = vpop.f32.mrf.mxu0
  %v3088 = vadd.f32 %v2943, %v3087
  %v3089 = vpop.f32.mrf.mxu0
  %3090 = vmatprep.mubr.f32.mxu0 0.0
  %3091 = vmatmul.mubr.f32.gmra.mxu0 %v2834
  %v3092 = vpop.f32.mrf.mxu0
  %v3093 = vadd.f32 %v2948, %v3092
  %v3094 = vpop.f32.mrf.mxu0
  %3095 = vmatprep.mubr.f32.mxu0 0.0
  %3096 = vmatmul.mubr.f32.gmra.mxu0 %v2836
  %v3097 = vpop.f32.mrf.mxu0
  %v3098 = vadd.f32 %v2953, %v3097
  %v3099 = vpop.f32.mrf.mxu0
  %3100 = vmatprep.mubr.f32.mxu0 0.0
  %3101 = vmatmul.mubr.f32.gmra.mxu0 %v2838
  %v3102 = vpop.f32.mrf.mxu0
  %v3103 = vadd.f32 %v2958, %v3102
  %v3104 = vpop.f32.mrf.mxu0
  %3105 = vmatprep.mubr.f32.mxu0 0.0
  %3106 = vmatmul.mubr.f32.gmra.mxu0 %v2840
  %v3107 = vpop.f32.mrf.mxu0
  %v3108 = vadd.f32 %v2963, %v3107
  %v3109 = vpop.f32.mrf.mxu0
  %3110 = vmatprep.mubr.f32.mxu0 0.0
  %3111 = vmatmul.mubr.f32.gmra.mxu0 %v2842
  %v3112 = vpop.f32.mrf.mxu0
  %v3113 = vadd.f32 %v2968, %v3112
  %v3114 = vpop.f32.mrf.mxu0
  %3115 = vmatprep.mubr.f32.mxu0 0.0
  %3116 = vmatmul.mubr.f32.gmra.mxu0 %v2844
  %v3117 = vpop.f32.mrf.mxu0
  %v3118 = vadd.f32 %v2973, %v3117
  %v3119 = vpop.f32.mrf.mxu0
  %3120 = vmatprep.mubr.f32.mxu0 0.0
  %3121 = vmatmul.mubr.f32.gmra.mxu0 %v2846
  %v3122 = vpop.f32.mrf.mxu0
  %v3123 = vadd.f32 %v2978, %v3122
  %v3124 = vpop.f32.mrf.mxu0
  %3125 = vmatprep.mubr.f32.mxu0 0.0
  %3126 = vmatmul.mubr.f32.gmra.mxu0 %v2848
  %v3127 = vpop.f32.mrf.mxu0
  %v3128 = vadd.f32 %v2983, %v3127
  %v3129 = vpop.f32.mrf.mxu0
  %3130 = vmatprep.mubr.f32.mxu0 0.0
  %3131 = vmatmul.mubr.f32.gmra.mxu0 %v2850
  %v3132 = vpop.f32.mrf.mxu0
  %v3133 = vadd.f32 %v2988, %v3132
  %v3134 = vpop.f32.mrf.mxu0
  %3135 = vmatprep.mubr.f32.mxu0 0.0
  %3136 = vmatmul.mubr.f32.gmra.mxu0 %v2852
  %v3137 = vpop.f32.mrf.mxu0
  %v3138 = vadd.f32 %v2993, %v3137
  %v3139 = vpop.f32.mrf.mxu0
  %3140 = vmatprep.mubr.f32.mxu0 0.0
  %3141 = vmatmul.mubr.f32.gmra.mxu0 %v2854
  %v3142 = vpop.f32.mrf.mxu0
  %v3143 = vadd.f32 %v2998, %v3142
  %v3144 = vpop.f32.mrf.mxu0
  %3145 = vdwg.mxu0
  %v3147 = vlaneseq
  %v3148 = vshrl.u32 %v3147, 7
  %v3149 = vsub.s32 0, %v3148
  %v3150 = vrot.slane %v2221, %v3149
  %v3152 = vmul.f32 %v3068, %v3150
  %v3153 = vmul.f32 %v3073, %v3150
  %v3154 = vmul.f32 %v3078, %v3150
  %v3155 = vmul.f32 %v3083, %v3150
  %v3156 = vmul.f32 %v3088, %v3150
  %v3157 = vmul.f32 %v3093, %v3150
  %v3158 = vmul.f32 %v3098, %v3150
  %v3159 = vmul.f32 %v3103, %v3150
  %v3160 = vmul.f32 %v3108, %v3150
  %v3161 = vmul.f32 %v3113, %v3150
  %v3162 = vmul.f32 %v3118, %v3150
  %v3163 = vmul.f32 %v3123, %v3150
  %v3164 = vmul.f32 %v3128, %v3150
  %v3165 = vmul.f32 %v3133, %v3150
  %v3166 = vmul.f32 %v3138, %v3150
  %v3167 = vmul.f32 %v3143, %v3150
  %v3169 = vlaneseq
  %v3170 = vshrl.u32 %v3169, 7
  %v3171 = vsub.s32 0, %v3170
  %v3172 = vrot.slane %v2223, %v3171
  %v3174 = vadd.f32 %v3152, %v3172
  %v3175 = vadd.f32 %v3153, %v3172
  %v3176 = vadd.f32 %v3154, %v3172
  %v3177 = vadd.f32 %v3155, %v3172
  %v3178 = vadd.f32 %v3156, %v3172
  %v3179 = vadd.f32 %v3157, %v3172
  %v3180 = vadd.f32 %v3158, %v3172
  %v3181 = vadd.f32 %v3159, %v3172
  %v3182 = vadd.f32 %v3160, %v3172
  %v3183 = vadd.f32 %v3161, %v3172
  %v3184 = vadd.f32 %v3162, %v3172
  %v3185 = vadd.f32 %v3163, %v3172
  %v3186 = vadd.f32 %v3164, %v3172
  %v3187 = vadd.f32 %v3165, %v3172
  %v3188 = vadd.f32 %v3166, %v3172
  %v3189 = vadd.f32 %v3167, %v3172
  %v3190 = vadd.f32 %v3174, %v1112
  %v3191 = vadd.f32 %v3175, %v1113
  %v3192 = vadd.f32 %v3176, %v1114
  %v3193 = vadd.f32 %v3177, %v1115
  %v3194 = vadd.f32 %v3178, %v1116
  %v3195 = vadd.f32 %v3179, %v1117
  %v3196 = vadd.f32 %v3180, %v1118
  %v3197 = vadd.f32 %v3181, %v1119
  %v3198 = vadd.f32 %v3182, %v1120
  %v3199 = vadd.f32 %v3183, %v1121
  %v3200 = vadd.f32 %v3184, %v1122
  %v3201 = vadd.f32 %v3185, %v1123
  %v3202 = vadd.f32 %v3186, %v1124
  %v3203 = vadd.f32 %v3187, %v1125
  %v3204 = vadd.f32 %v3188, %v1126
  %v3205 = vadd.f32 %v3189, %v1127
  %v3206 = vmax.f32 %v3190, 0.0
  %v3207 = vmax.f32 %v3191, 0.0
  %v3208 = vmax.f32 %v3192, 0.0
  %v3209 = vmax.f32 %v3193, 0.0
  %v3210 = vmax.f32 %v3194, 0.0
  %v3211 = vmax.f32 %v3195, 0.0
  %v3212 = vmax.f32 %v3196, 0.0
  %v3213 = vmax.f32 %v3197, 0.0
  %v3214 = vmax.f32 %v3198, 0.0
  %v3215 = vmax.f32 %v3199, 0.0
  %v3216 = vmax.f32 %v3200, 0.0
  %v3217 = vmax.f32 %v3201, 0.0
  %v3218 = vmax.f32 %v3202, 0.0
  %v3219 = vmax.f32 %v3203, 0.0
  %v3220 = vmax.f32 %v3204, 0.0
  %v3221 = vmax.f32 %v3205, 0.0
  %3222 = vst.msk [vmem:[%s1128 + $0x1] sm:$0xff] %vm68, %v3206
  %3223 = vst.msk [vmem:[%s1128 + $0x11] sm:$0xff] %vm68, %v3207
  %3224 = vst.msk [vmem:[%s1128 + $0x21] sm:$0xff] %vm68, %v3208
  %3225 = vst.msk [vmem:[%s1128 + $0x31] sm:$0xff] %vm68, %v3209
  %3226 = vst.msk [vmem:[%s1128 + $0x41] sm:$0xff] %vm68, %v3210
  %3227 = vst.msk [vmem:[%s1128 + $0x51] sm:$0xff] %vm68, %v3211
  %3228 = vst.msk [vmem:[%s1128 + $0x61] sm:$0xff] %vm68, %v3212
  %3229 = vst.msk [vmem:[%s1128 + $0x71] sm:$0xff] %vm68, %v3213
  %3230 = vst.msk [vmem:[%s1128 + $0xa1] sm:$0xff] %vm68, %v3214
  %3231 = vst.msk [vmem:[%s1128 + $0xb1] sm:$0xff] %vm68, %v3215
  %3232 = vst.msk [vmem:[%s1128 + $0xc1] sm:$0xff] %vm68, %v3216
  %3233 = vst.msk [vmem:[%s1128 + $0xd1] sm:$0xff] %vm68, %v3217
  %3234 = vst.msk [vmem:[%s1128 + $0xe1] sm:$0xff] %vm68, %v3218
  %3235 = vst.msk [vmem:[%s1128 + $0xf1] sm:$0xff] %vm68, %v3219
  %3236 = vst.msk [vmem:[%s1128 + $0x101] sm:$0xff] %vm68, %v3220
  %3237 = vst.msk [vmem:[%s1128 + $0x111] sm:$0xff] %vm68, %v3221
  %s3238 = scalar_lea.vmem %s4, 576
  %v3239 = vld [vmem:[%s3238] sm:$0xff]
  %v3240 = vld [vmem:[%s3238 + $0x8] sm:$0xff]
  %v3241 = vld [vmem:[%s3238 + $0x10] sm:$0xff]
  %v3242 = vld [vmem:[%s3238 + $0x18] sm:$0xff]
  %v3243 = vld [vmem:[%s3238 + $0x20] sm:$0xff]
  %v3244 = vld [vmem:[%s3238 + $0x28] sm:$0xff]
  %v3245 = vld [vmem:[%s3238 + $0x30] sm:$0xff]
  %v3246 = vld [vmem:[%s3238 + $0x38] sm:$0xff]
  %v3247 = vld [vmem:[%s3238 + $0x40] sm:$0xff]
  %v3248 = vld [vmem:[%s3238 + $0x48] sm:$0xff]
  %v3249 = vld [vmem:[%s3238 + $0x50] sm:$0xff]
  %v3250 = vld [vmem:[%s3238 + $0x58] sm:$0xff]
  %v3251 = vld [vmem:[%s3238 + $0x60] sm:$0xff]
  %v3252 = vld [vmem:[%s3238 + $0x68] sm:$0xff]
  %v3253 = vld [vmem:[%s3238 + $0x70] sm:$0xff]
  %v3254 = vld [vmem:[%s3238 + $0x78] sm:$0xff]
  %v3255 = vld [vmem:[%s3238 + $0x80] sm:$0xff]
  %v3256 = vld [vmem:[%s3238 + $0x88] sm:$0xff]
  %v3257 = vld [vmem:[%s3238 + $0x90] sm:$0xff]
  %v3258 = vld [vmem:[%s3238 + $0x98] sm:$0xff]
  %v3259 = vld [vmem:[%s3238 + $0xa0] sm:$0xff]
  %v3260 = vld [vmem:[%s3238 + $0xa8] sm:$0xff]
  %v3261 = vld [vmem:[%s3238 + $0xb0] sm:$0xff]
  %v3262 = vld [vmem:[%s3238 + $0xb8] sm:$0xff]
  %v3263 = vld [vmem:[%s3238 + $0xc0] sm:$0xff]
  %v3264 = vld [vmem:[%s3238 + $0xc8] sm:$0xff]
  %v3265 = vld [vmem:[%s3238 + $0xd0] sm:$0xff]
  %v3266 = vld [vmem:[%s3238 + $0xd8] sm:$0xff]
  %v3267 = vld [vmem:[%s3238 + $0xe0] sm:$0xff]
  %v3268 = vld [vmem:[%s3238 + $0xe8] sm:$0xff]
  %v3269 = vld [vmem:[%s3238 + $0xf0] sm:$0xff]
  %v3270 = vld [vmem:[%s3238 + $0xf8] sm:$0xff]
  %v3271 = vld [vmem:[%s3238 + $0x100] sm:$0xff]
  %v3272 = vld [vmem:[%s3238 + $0x108] sm:$0xff]
  %v3273 = vld [vmem:[%s3238 + $0x110] sm:$0xff]
  %v3274 = vld [vmem:[%s3238 + $0x118] sm:$0xff]
  %s3275 = scalar_lea.vmem %s5, 2
  %v3276 = vld [vmem:[%s3275] sm:$0x1]
  %s3277 = scalar_lea.vmem %s6, 2
  %v3278 = vld [vmem:[%s3277] sm:$0x1]
  %v3279 = vld [vmem:[#allocation3] sm:$0xff]
  %v3280 = vld [vmem:[#allocation3 + $0x8] sm:$0x3]
  %v3281 = vld [vmem:[#allocation3 + $0x10] sm:$0xff]
  %v3282 = vld [vmem:[#allocation3 + $0x18] sm:$0x3]
  %v3283 = vld [vmem:[#allocation3 + $0x20] sm:$0xff]
  %v3284 = vld [vmem:[#allocation3 + $0x28] sm:$0x3]
  %v3285 = vld [vmem:[#allocation3 + $0x30] sm:$0xff]
  %v3286 = vld [vmem:[#allocation3 + $0x38] sm:$0x3]
  %v3287 = vld [vmem:[#allocation3 + $0x40] sm:$0xff]
  %v3288 = vld [vmem:[#allocation3 + $0x48] sm:$0x3]
  %v3289 = vld [vmem:[#allocation3 + $0x50] sm:$0xff]
  %v3290 = vld [vmem:[#allocation3 + $0x58] sm:$0x3]
  %v3291 = vld [vmem:[#allocation3 + $0x60] sm:$0xff]
  %v3292 = vld [vmem:[#allocation3 + $0x68] sm:$0x3]
  %v3293 = vld [vmem:[#allocation3 + $0x70] sm:$0xff]
  %v3294 = vld [vmem:[#allocation3 + $0x78] sm:$0x3]
  %v3295 = vld [vmem:[#allocation3 + $0x80] sm:$0xff]
  %v3296 = vld [vmem:[#allocation3 + $0x88] sm:$0x3]
  %v3297 = vld [vmem:[#allocation3 + $0x90] sm:$0xff]
  %v3298 = vld [vmem:[#allocation3 + $0x98] sm:$0x3]
  %v3299 = vld [vmem:[#allocation3 + $0xa0] sm:$0xff]
  %v3300 = vld [vmem:[#allocation3 + $0xa8] sm:$0x3]
  %v3301 = vld [vmem:[#allocation3 + $0xb0] sm:$0xff]
  %v3302 = vld [vmem:[#allocation3 + $0xb8] sm:$0x3]
  %v3303 = vld [vmem:[#allocation3 + $0xc0] sm:$0xff]
  %v3304 = vld [vmem:[#allocation3 + $0xc8] sm:$0x3]
  %v3305 = vld [vmem:[#allocation3 + $0xd0] sm:$0xff]
  %v3306 = vld [vmem:[#allocation3 + $0xd8] sm:$0x3]
  %v3307 = vld [vmem:[#allocation3 + $0xe0] sm:$0xff]
  %v3308 = vld [vmem:[#allocation3 + $0xe8] sm:$0x3]
  %v3309 = vld [vmem:[#allocation3 + $0xf0] sm:$0xff]
  %v3310 = vld [vmem:[#allocation3 + $0xf8] sm:$0x3]
  %v3311 = vld [vmem:[#allocation3 + $0x100] sm:$0xff]
  %v3312 = vld [vmem:[#allocation3 + $0x108] sm:$0x3]
  %v3313 = vld [vmem:[#allocation3 + $0x110] sm:$0xff]
  %v3314 = vld [vmem:[#allocation3 + $0x118] sm:$0x3]
  %v3315 = vld [vmem:[#allocation3 + $0x120] sm:$0xff]
  %v3316 = vld [vmem:[#allocation3 + $0x128] sm:$0x3]
  %v3317 = vld [vmem:[#allocation3 + $0x130] sm:$0xff]
  %v3318 = vld [vmem:[#allocation3 + $0x138] sm:$0x3]
  %v3351 = vrot.slane %v3279, 1
  %v3352 = vrot.slane %v3280, 1
  %v3353 = vsel %vm222, %v3351, %v3352
  %v3354 = vrot.slane %v3281, 1
  %v3355 = vrot.slane %v3282, 1
  %v3356 = vsel %vm222, %v3354, %v3355
  %v3357 = vrot.slane %v3283, 1
  %v3358 = vrot.slane %v3284, 1
  %v3359 = vsel %vm222, %v3357, %v3358
  %v3360 = vrot.slane %v3285, 1
  %v3361 = vrot.slane %v3286, 1
  %v3362 = vsel %vm222, %v3360, %v3361
  %v3363 = vrot.slane %v3287, 1
  %v3364 = vrot.slane %v3288, 1
  %v3365 = vsel %vm222, %v3363, %v3364
  %v3366 = vrot.slane %v3289, 1
  %v3367 = vrot.slane %v3290, 1
  %v3368 = vsel %vm222, %v3366, %v3367
  %v3369 = vrot.slane %v3291, 1
  %v3370 = vrot.slane %v3292, 1
  %v3371 = vsel %vm222, %v3369, %v3370
  %v3372 = vrot.slane %v3293, 1
  %v3373 = vrot.slane %v3294, 1
  %v3374 = vsel %vm222, %v3372, %v3373
  %v3375 = vrot.slane %v3299, 1
  %v3376 = vrot.slane %v3300, 1
  %v3377 = vsel %vm222, %v3375, %v3376
  %v3378 = vrot.slane %v3301, 1
  %v3379 = vrot.slane %v3302, 1
  %v3380 = vsel %vm222, %v3378, %v3379
  %v3381 = vrot.slane %v3303, 1
  %v3382 = vrot.slane %v3304, 1
  %v3383 = vsel %vm222, %v3381, %v3382
  %v3384 = vrot.slane %v3305, 1
  %v3385 = vrot.slane %v3306, 1
  %v3386 = vsel %vm222, %v3384, %v3385
  %v3387 = vrot.slane %v3307, 1
  %v3388 = vrot.slane %v3308, 1
  %v3389 = vsel %vm222, %v3387, %v3388
  %v3390 = vrot.slane %v3309, 1
  %v3391 = vrot.slane %v3310, 1
  %v3392 = vsel %vm222, %v3390, %v3391
  %v3393 = vrot.slane %v3311, 1
  %v3394 = vrot.slane %v3312, 1
  %v3395 = vsel %vm222, %v3393, %v3394
  %v3396 = vrot.slane %v3313, 1
  %v3397 = vrot.slane %v3314, 1
  %v3398 = vsel %vm222, %v3396, %v3397
  %v3399 = vrot.slane %v3279, 2
  %v3400 = vrot.slane %v3280, 2
  %v3401 = vsel %vm271, %v3399, %v3400
  %v3402 = vrot.slane %v3281, 2
  %v3403 = vrot.slane %v3282, 2
  %v3404 = vsel %vm271, %v3402, %v3403
  %v3405 = vrot.slane %v3283, 2
  %v3406 = vrot.slane %v3284, 2
  %v3407 = vsel %vm271, %v3405, %v3406
  %v3408 = vrot.slane %v3285, 2
  %v3409 = vrot.slane %v3286, 2
  %v3410 = vsel %vm271, %v3408, %v3409
  %v3411 = vrot.slane %v3287, 2
  %v3412 = vrot.slane %v3288, 2
  %v3413 = vsel %vm271, %v3411, %v3412
  %v3414 = vrot.slane %v3289, 2
  %v3415 = vrot.slane %v3290, 2
  %v3416 = vsel %vm271, %v3414, %v3415
  %v3417 = vrot.slane %v3291, 2
  %v3418 = vrot.slane %v3292, 2
  %v3419 = vsel %vm271, %v3417, %v3418
  %v3420 = vrot.slane %v3293, 2
  %v3421 = vrot.slane %v3294, 2
  %v3422 = vsel %vm271, %v3420, %v3421
  %v3423 = vrot.slane %v3299, 2
  %v3424 = vrot.slane %v3300, 2
  %v3425 = vsel %vm271, %v3423, %v3424
  %v3426 = vrot.slane %v3301, 2
  %v3427 = vrot.slane %v3302, 2
  %v3428 = vsel %vm271, %v3426, %v3427
  %v3429 = vrot.slane %v3303, 2
  %v3430 = vrot.slane %v3304, 2
  %v3431 = vsel %vm271, %v3429, %v3430
  %v3432 = vrot.slane %v3305, 2
  %v3433 = vrot.slane %v3306, 2
  %v3434 = vsel %vm271, %v3432, %v3433
  %v3435 = vrot.slane %v3307, 2
  %v3436 = vrot.slane %v3308, 2
  %v3437 = vsel %vm271, %v3435, %v3436
  %v3438 = vrot.slane %v3309, 2
  %v3439 = vrot.slane %v3310, 2
  %v3440 = vsel %vm271, %v3438, %v3439
  %v3441 = vrot.slane %v3311, 2
  %v3442 = vrot.slane %v3312, 2
  %v3443 = vsel %vm271, %v3441, %v3442
  %v3444 = vrot.slane %v3313, 2
  %v3445 = vrot.slane %v3314, 2
  %v3446 = vsel %vm271, %v3444, %v3445
  %v3451 = vrot.slane %v3295, 1
  %v3452 = vrot.slane %v3296, 1
  %v3453 = vsel %vm222, %v3451, %v3452
  %v3454 = vrot.slane %v3315, 1
  %v3455 = vrot.slane %v3316, 1
  %v3456 = vsel %vm222, %v3454, %v3455
  %v3473 = vrot.slane %v3295, 2
  %v3474 = vrot.slane %v3296, 2
  %v3475 = vsel %vm271, %v3473, %v3474
  %v3476 = vrot.slane %v3315, 2
  %v3477 = vrot.slane %v3316, 2
  %v3478 = vsel %vm271, %v3476, %v3477
  %v3483 = vrot.slane %v3297, 1
  %v3484 = vrot.slane %v3298, 1
  %v3485 = vsel %vm222, %v3483, %v3484
  %v3486 = vrot.slane %v3317, 1
  %v3487 = vrot.slane %v3318, 1
  %v3488 = vsel %vm222, %v3486, %v3487
  %v3489 = vrot.slane %v3297, 2
  %v3490 = vrot.slane %v3298, 2
  %v3491 = vsel %vm271, %v3489, %v3490
  %v3492 = vrot.slane %v3317, 2
  %v3493 = vrot.slane %v3318, 2
  %v3494 = vsel %vm271, %v3492, %v3493
  %3495 = vrot.lane.b32.xlu0 %v3353, 32
  %v3496 = vpop.permute.xlu0 %3495
  %3497 = vrot.lane.b32.xlu0 %v3356, 32
  %v3498 = vpop.permute.xlu0 %3497
  %3499 = vrot.lane.b32.xlu0 %v3359, 32
  %v3500 = vpop.permute.xlu0 %3499
  %3501 = vrot.lane.b32.xlu0 %v3362, 32
  %v3502 = vpop.permute.xlu0 %3501
  %3503 = vrot.lane.b32.xlu0 %v3365, 32
  %v3504 = vpop.permute.xlu0 %3503
  %3505 = vrot.lane.b32.xlu0 %v3368, 32
  %v3506 = vpop.permute.xlu0 %3505
  %3507 = vrot.lane.b32.xlu0 %v3371, 32
  %v3508 = vpop.permute.xlu0 %3507
  %3509 = vrot.lane.b32.xlu0 %v3374, 32
  %v3510 = vpop.permute.xlu0 %3509
  %3511 = vrot.lane.b32.xlu0 %v3377, 32
  %v3512 = vpop.permute.xlu0 %3511
  %3513 = vrot.lane.b32.xlu0 %v3380, 32
  %v3514 = vpop.permute.xlu0 %3513
  %3515 = vrot.lane.b32.xlu0 %v3383, 32
  %v3516 = vpop.permute.xlu0 %3515
  %3517 = vrot.lane.b32.xlu0 %v3386, 32
  %v3518 = vpop.permute.xlu0 %3517
  %3519 = vrot.lane.b32.xlu0 %v3389, 32
  %v3520 = vpop.permute.xlu0 %3519
  %3521 = vrot.lane.b32.xlu0 %v3392, 32
  %v3522 = vpop.permute.xlu0 %3521
  %3523 = vrot.lane.b32.xlu0 %v3395, 32
  %v3524 = vpop.permute.xlu0 %3523
  %3525 = vrot.lane.b32.xlu0 %v3398, 32
  %v3526 = vpop.permute.xlu0 %3525
  %3543 = vrot.lane.b32.xlu0 %v3401, 64
  %v3544 = vpop.permute.xlu0 %3543
  %3545 = vrot.lane.b32.xlu0 %v3404, 64
  %v3546 = vpop.permute.xlu0 %3545
  %3547 = vrot.lane.b32.xlu0 %v3407, 64
  %v3548 = vpop.permute.xlu0 %3547
  %3549 = vrot.lane.b32.xlu0 %v3410, 64
  %v3550 = vpop.permute.xlu0 %3549
  %3551 = vrot.lane.b32.xlu0 %v3413, 64
  %v3552 = vpop.permute.xlu0 %3551
  %3553 = vrot.lane.b32.xlu0 %v3416, 64
  %v3554 = vpop.permute.xlu0 %3553
  %3555 = vrot.lane.b32.xlu0 %v3419, 64
  %v3556 = vpop.permute.xlu0 %3555
  %3557 = vrot.lane.b32.xlu0 %v3422, 64
  %v3558 = vpop.permute.xlu0 %3557
  %3559 = vrot.lane.b32.xlu0 %v3425, 64
  %v3560 = vpop.permute.xlu0 %3559
  %3561 = vrot.lane.b32.xlu0 %v3428, 64
  %v3562 = vpop.permute.xlu0 %3561
  %3563 = vrot.lane.b32.xlu0 %v3431, 64
  %v3564 = vpop.permute.xlu0 %3563
  %3565 = vrot.lane.b32.xlu0 %v3434, 64
  %v3566 = vpop.permute.xlu0 %3565
  %3567 = vrot.lane.b32.xlu0 %v3437, 64
  %v3568 = vpop.permute.xlu0 %3567
  %3569 = vrot.lane.b32.xlu0 %v3440, 64
  %v3570 = vpop.permute.xlu0 %3569
  %3571 = vrot.lane.b32.xlu0 %v3443, 64
  %v3572 = vpop.permute.xlu0 %3571
  %3573 = vrot.lane.b32.xlu0 %v3446, 64
  %v3574 = vpop.permute.xlu0 %3573
  %3591 = vrot.lane.b32.xlu0 %v3281, 96
  %v3592 = vpop.permute.xlu0 %3591
  %3593 = vrot.lane.b32.xlu0 %v3283, 96
  %v3594 = vpop.permute.xlu0 %3593
  %3595 = vrot.lane.b32.xlu0 %v3285, 96
  %v3596 = vpop.permute.xlu0 %3595
  %3597 = vrot.lane.b32.xlu0 %v3287, 96
  %v3598 = vpop.permute.xlu0 %3597
  %3599 = vrot.lane.b32.xlu0 %v3289, 96
  %v3600 = vpop.permute.xlu0 %3599
  %3601 = vrot.lane.b32.xlu0 %v3291, 96
  %v3602 = vpop.permute.xlu0 %3601
  %3603 = vrot.lane.b32.xlu0 %v3293, 96
  %v3604 = vpop.permute.xlu0 %3603
  %3605 = vrot.lane.b32.xlu0 %v3295, 96
  %v3606 = vpop.permute.xlu0 %3605
  %3607 = vrot.lane.b32.xlu0 %v3301, 96
  %v3608 = vpop.permute.xlu0 %3607
  %3609 = vrot.lane.b32.xlu0 %v3303, 96
  %v3610 = vpop.permute.xlu0 %3609
  %3611 = vrot.lane.b32.xlu0 %v3305, 96
  %v3612 = vpop.permute.xlu0 %3611
  %3613 = vrot.lane.b32.xlu0 %v3307, 96
  %v3614 = vpop.permute.xlu0 %3613
  %3615 = vrot.lane.b32.xlu0 %v3309, 96
  %v3616 = vpop.permute.xlu0 %3615
  %3617 = vrot.lane.b32.xlu0 %v3311, 96
  %v3618 = vpop.permute.xlu0 %3617
  %3619 = vrot.lane.b32.xlu0 %v3313, 96
  %v3620 = vpop.permute.xlu0 %3619
  %3621 = vrot.lane.b32.xlu0 %v3315, 96
  %v3622 = vpop.permute.xlu0 %3621
  %3639 = vrot.lane.b32.xlu0 %v3404, 32
  %v3640 = vpop.permute.xlu0 %3639
  %3641 = vrot.lane.b32.xlu0 %v3407, 32
  %v3642 = vpop.permute.xlu0 %3641
  %3643 = vrot.lane.b32.xlu0 %v3410, 32
  %v3644 = vpop.permute.xlu0 %3643
  %3645 = vrot.lane.b32.xlu0 %v3413, 32
  %v3646 = vpop.permute.xlu0 %3645
  %3647 = vrot.lane.b32.xlu0 %v3416, 32
  %v3648 = vpop.permute.xlu0 %3647
  %3649 = vrot.lane.b32.xlu0 %v3419, 32
  %v3650 = vpop.permute.xlu0 %3649
  %3651 = vrot.lane.b32.xlu0 %v3422, 32
  %v3652 = vpop.permute.xlu0 %3651
  %3653 = vrot.lane.b32.xlu0 %v3475, 32
  %v3654 = vpop.permute.xlu0 %3653
  %3655 = vrot.lane.b32.xlu0 %v3428, 32
  %v3656 = vpop.permute.xlu0 %3655
  %3657 = vrot.lane.b32.xlu0 %v3431, 32
  %v3658 = vpop.permute.xlu0 %3657
  %3659 = vrot.lane.b32.xlu0 %v3434, 32
  %v3660 = vpop.permute.xlu0 %3659
  %3661 = vrot.lane.b32.xlu0 %v3437, 32
  %v3662 = vpop.permute.xlu0 %3661
  %3663 = vrot.lane.b32.xlu0 %v3440, 32
  %v3664 = vpop.permute.xlu0 %3663
  %3665 = vrot.lane.b32.xlu0 %v3443, 32
  %v3666 = vpop.permute.xlu0 %3665
  %3667 = vrot.lane.b32.xlu0 %v3446, 32
  %v3668 = vpop.permute.xlu0 %3667
  %3669 = vrot.lane.b32.xlu0 %v3478, 32
  %v3670 = vpop.permute.xlu0 %3669
  %3687 = vrot.lane.b32.xlu0 %v3283, 64
  %v3688 = vpop.permute.xlu0 %3687
  %3689 = vrot.lane.b32.xlu0 %v3285, 64
  %v3690 = vpop.permute.xlu0 %3689
  %3691 = vrot.lane.b32.xlu0 %v3287, 64
  %v3692 = vpop.permute.xlu0 %3691
  %3693 = vrot.lane.b32.xlu0 %v3289, 64
  %v3694 = vpop.permute.xlu0 %3693
  %3695 = vrot.lane.b32.xlu0 %v3291, 64
  %v3696 = vpop.permute.xlu0 %3695
  %3697 = vrot.lane.b32.xlu0 %v3293, 64
  %v3698 = vpop.permute.xlu0 %3697
  %3699 = vrot.lane.b32.xlu0 %v3295, 64
  %v3700 = vpop.permute.xlu0 %3699
  %3701 = vrot.lane.b32.xlu0 %v3297, 64
  %v3702 = vpop.permute.xlu0 %3701
  %3703 = vrot.lane.b32.xlu0 %v3303, 64
  %v3704 = vpop.permute.xlu0 %3703
  %3705 = vrot.lane.b32.xlu0 %v3305, 64
  %v3706 = vpop.permute.xlu0 %3705
  %3707 = vrot.lane.b32.xlu0 %v3307, 64
  %v3708 = vpop.permute.xlu0 %3707
  %3709 = vrot.lane.b32.xlu0 %v3309, 64
  %v3710 = vpop.permute.xlu0 %3709
  %3711 = vrot.lane.b32.xlu0 %v3311, 64
  %v3712 = vpop.permute.xlu0 %3711
  %3713 = vrot.lane.b32.xlu0 %v3313, 64
  %v3714 = vpop.permute.xlu0 %3713
  %3715 = vrot.lane.b32.xlu0 %v3315, 64
  %v3716 = vpop.permute.xlu0 %3715
  %3717 = vrot.lane.b32.xlu0 %v3317, 64
  %v3718 = vpop.permute.xlu0 %3717
  %3735 = vrot.lane.b32.xlu0 %v3359, 96
  %v3736 = vpop.permute.xlu0 %3735
  %3737 = vrot.lane.b32.xlu0 %v3362, 96
  %v3738 = vpop.permute.xlu0 %3737
  %3739 = vrot.lane.b32.xlu0 %v3365, 96
  %v3740 = vpop.permute.xlu0 %3739
  %3741 = vrot.lane.b32.xlu0 %v3368, 96
  %v3742 = vpop.permute.xlu0 %3741
  %3743 = vrot.lane.b32.xlu0 %v3371, 96
  %v3744 = vpop.permute.xlu0 %3743
  %3745 = vrot.lane.b32.xlu0 %v3374, 96
  %v3746 = vpop.permute.xlu0 %3745
  %3747 = vrot.lane.b32.xlu0 %v3453, 96
  %v3748 = vpop.permute.xlu0 %3747
  %3749 = vrot.lane.b32.xlu0 %v3485, 96
  %v3750 = vpop.permute.xlu0 %3749
  %3751 = vrot.lane.b32.xlu0 %v3383, 96
  %v3752 = vpop.permute.xlu0 %3751
  %3753 = vrot.lane.b32.xlu0 %v3386, 96
  %v3754 = vpop.permute.xlu0 %3753
  %3755 = vrot.lane.b32.xlu0 %v3389, 96
  %v3756 = vpop.permute.xlu0 %3755
  %3757 = vrot.lane.b32.xlu0 %v3392, 96
  %v3758 = vpop.permute.xlu0 %3757
  %3759 = vrot.lane.b32.xlu0 %v3395, 96
  %v3760 = vpop.permute.xlu0 %3759
  %3761 = vrot.lane.b32.xlu0 %v3398, 96
  %v3762 = vpop.permute.xlu0 %3761
  %3763 = vrot.lane.b32.xlu0 %v3456, 96
  %v3764 = vpop.permute.xlu0 %3763
  %3765 = vrot.lane.b32.xlu0 %v3488, 96
  %v3766 = vpop.permute.xlu0 %3765
  %v3783 = vsel %vm68, %v3279, %v3496
  %v3784 = vsel %vm68, %v3281, %v3498
  %v3785 = vsel %vm68, %v3283, %v3500
  %v3786 = vsel %vm68, %v3285, %v3502
  %v3787 = vsel %vm68, %v3287, %v3504
  %v3788 = vsel %vm68, %v3289, %v3506
  %v3789 = vsel %vm68, %v3291, %v3508
  %v3790 = vsel %vm68, %v3293, %v3510
  %v3791 = vsel %vm68, %v3299, %v3512
  %v3792 = vsel %vm68, %v3301, %v3514
  %v3793 = vsel %vm68, %v3303, %v3516
  %v3794 = vsel %vm68, %v3305, %v3518
  %v3795 = vsel %vm68, %v3307, %v3520
  %v3796 = vsel %vm68, %v3309, %v3522
  %v3797 = vsel %vm68, %v3311, %v3524
  %v3798 = vsel %vm68, %v3313, %v3526
  %v3799 = vsel %vm1703, %v3783, %v3544
  %v3800 = vsel %vm1703, %v3784, %v3546
  %v3801 = vsel %vm1703, %v3785, %v3548
  %v3802 = vsel %vm1703, %v3786, %v3550
  %v3803 = vsel %vm1703, %v3787, %v3552
  %v3804 = vsel %vm1703, %v3788, %v3554
  %v3805 = vsel %vm1703, %v3789, %v3556
  %v3806 = vsel %vm1703, %v3790, %v3558
  %v3807 = vsel %vm1703, %v3791, %v3560
  %v3808 = vsel %vm1703, %v3792, %v3562
  %v3809 = vsel %vm1703, %v3793, %v3564
  %v3810 = vsel %vm1703, %v3794, %v3566
  %v3811 = vsel %vm1703, %v3795, %v3568
  %v3812 = vsel %vm1703, %v3796, %v3570
  %v3813 = vsel %vm1703, %v3797, %v3572
  %v3814 = vsel %vm1703, %v3798, %v3574
  %v3815 = vsel %vm1720, %v3799, %v3592
  %v3816 = vsel %vm1720, %v3800, %v3594
  %v3817 = vsel %vm1720, %v3801, %v3596
  %v3818 = vsel %vm1720, %v3802, %v3598
  %v3819 = vsel %vm1720, %v3803, %v3600
  %v3820 = vsel %vm1720, %v3804, %v3602
  %v3821 = vsel %vm1720, %v3805, %v3604
  %v3822 = vsel %vm1720, %v3806, %v3606
  %v3823 = vsel %vm1720, %v3807, %v3608
  %v3824 = vsel %vm1720, %v3808, %v3610
  %v3825 = vsel %vm1720, %v3809, %v3612
  %v3826 = vsel %vm1720, %v3810, %v3614
  %v3827 = vsel %vm1720, %v3811, %v3616
  %v3828 = vsel %vm1720, %v3812, %v3618
  %v3829 = vsel %vm1720, %v3813, %v3620
  %v3830 = vsel %vm1720, %v3814, %v3622
  %v3831 = vsel %vm68, %v3356, %v3640
  %v3832 = vsel %vm68, %v3359, %v3642
  %v3833 = vsel %vm68, %v3362, %v3644
  %v3834 = vsel %vm68, %v3365, %v3646
  %v3835 = vsel %vm68, %v3368, %v3648
  %v3836 = vsel %vm68, %v3371, %v3650
  %v3837 = vsel %vm68, %v3374, %v3652
  %v3838 = vsel %vm68, %v3453, %v3654
  %v3839 = vsel %vm68, %v3380, %v3656
  %v3840 = vsel %vm68, %v3383, %v3658
  %v3841 = vsel %vm68, %v3386, %v3660
  %v3842 = vsel %vm68, %v3389, %v3662
  %v3843 = vsel %vm68, %v3392, %v3664
  %v3844 = vsel %vm68, %v3395, %v3666
  %v3845 = vsel %vm68, %v3398, %v3668
  %v3846 = vsel %vm68, %v3456, %v3670
  %v3847 = vsel %vm1703, %v3831, %v3688
  %v3848 = vsel %vm1703, %v3832, %v3690
  %v3849 = vsel %vm1703, %v3833, %v3692
  %v3850 = vsel %vm1703, %v3834, %v3694
  %v3851 = vsel %vm1703, %v3835, %v3696
  %v3852 = vsel %vm1703, %v3836, %v3698
  %v3853 = vsel %vm1703, %v3837, %v3700
  %v3854 = vsel %vm1703, %v3838, %v3702
  %v3855 = vsel %vm1703, %v3839, %v3704
  %v3856 = vsel %vm1703, %v3840, %v3706
  %v3857 = vsel %vm1703, %v3841, %v3708
  %v3858 = vsel %vm1703, %v3842, %v3710
  %v3859 = vsel %vm1703, %v3843, %v3712
  %v3860 = vsel %vm1703, %v3844, %v3714
  %v3861 = vsel %vm1703, %v3845, %v3716
  %v3862 = vsel %vm1703, %v3846, %v3718
  %v3863 = vsel %vm1720, %v3847, %v3736
  %v3864 = vsel %vm1720, %v3848, %v3738
  %v3865 = vsel %vm1720, %v3849, %v3740
  %v3866 = vsel %vm1720, %v3850, %v3742
  %v3867 = vsel %vm1720, %v3851, %v3744
  %v3868 = vsel %vm1720, %v3852, %v3746
  %v3869 = vsel %vm1720, %v3853, %v3748
  %v3870 = vsel %vm1720, %v3854, %v3750
  %v3871 = vsel %vm1720, %v3855, %v3752
  %v3872 = vsel %vm1720, %v3856, %v3754
  %v3873 = vsel %vm1720, %v3857, %v3756
  %v3874 = vsel %vm1720, %v3858, %v3758
  %v3875 = vsel %vm1720, %v3859, %v3760
  %v3876 = vsel %vm1720, %v3860, %v3762
  %v3877 = vsel %vm1720, %v3861, %v3764
  %v3878 = vsel %vm1720, %v3862, %v3766
  %v3879 = vsel %vm68, %v3407, 0
  %v3881 = vsel %vm68, %v3410, 0
  %v3883 = vsel %vm68, %v3413, 0
  %v3885 = vsel %vm68, %v3416, 0
  %v3887 = vsel %vm68, %v3419, 0
  %v3889 = vsel %vm68, %v3422, 0
  %v3891 = vsel %vm68, %v3475, 0
  %v3893 = vsel %vm68, %v3491, 0
  %v3895 = vsel %vm68, %v3431, 0
  %v3897 = vsel %vm68, %v3434, 0
  %v3899 = vsel %vm68, %v3437, 0
  %v3901 = vsel %vm68, %v3440, 0
  %v3903 = vsel %vm68, %v3443, 0
  %v3905 = vsel %vm68, %v3446, 0
  %v3907 = vsel %vm68, %v3478, 0
  %v3909 = vsel %vm68, %v3494, 0
  %3911 = vmatprep.subr.mxu0 0.0
  %3912 = vmatpush1.msra.mxu0 %v3254
  %3913 = vmatprep.subr.mxu0 0.0
  %3914 = vmatpush1.msra.mxu0 %v3253
  %3915 = vmatprep.subr.mxu0 0.0
  %3916 = vmatpush1.msra.mxu0 %v3252
  %3917 = vmatprep.subr.mxu0 0.0
  %3918 = vmatpush1.msra.mxu0 %v3251
  %3919 = vmatprep.subr.mxu0 0.0
  %3920 = vmatpush1.msra.mxu0 %v3250
  %3921 = vmatprep.subr.mxu0 0.0
  %3922 = vmatpush1.msra.mxu0 %v3249
  %3923 = vmatprep.subr.mxu0 0.0
  %3924 = vmatpush1.msra.mxu0 %v3248
  %3925 = vmatprep.subr.mxu0 0.0
  %3926 = vmatpush1.msra.mxu0 %v3247
  %3927 = vmatprep.subr.mxu0 0.0
  %3928 = vmatpush1.msra.mxu0 %v3246
  %3929 = vmatprep.subr.mxu0 0.0
  %3930 = vmatpush1.msra.mxu0 %v3245
  %3931 = vmatprep.subr.mxu0 0.0
  %3932 = vmatpush1.msra.mxu0 %v3244
  %3933 = vmatprep.subr.mxu0 0.0
  %3934 = vmatpush1.msra.mxu0 %v3243
  %3935 = vmatprep.subr.mxu0 0.0
  %3936 = vmatpush1.msra.mxu0 %v3242
  %3937 = vmatprep.subr.mxu0 0.0
  %3938 = vmatpush1.msra.mxu0 %v3241
  %3939 = vmatprep.subr.mxu0 0.0
  %3940 = vmatpush1.msra.mxu0 %v3240
  %3941 = vmatprep.subr.mxu0 0.0
  %3942 = vmatpush1.msra.mxu0 %v3239
  %3943 = vmatprep.subr.mxu0 0.0
  %3944 = vmatpush2.msra.mxu0 %v3270
  %3945 = vmatprep.subr.mxu0 0.0
  %3946 = vmatpush2.msra.mxu0 %v3269
  %3947 = vmatprep.subr.mxu0 0.0
  %3948 = vmatpush2.msra.mxu0 %v3268
  %3949 = vmatprep.subr.mxu0 0.0
  %3950 = vmatpush2.msra.mxu0 %v3267
  %3951 = vmatprep.subr.mxu0 0.0
  %3952 = vmatpush2.msra.mxu0 %v3266
  %3953 = vmatprep.subr.mxu0 0.0
  %3954 = vmatpush2.msra.mxu0 %v3265
  %3955 = vmatprep.subr.mxu0 0.0
  %3956 = vmatpush2.msra.mxu0 %v3264
  %3957 = vmatprep.subr.mxu0 0.0
  %3958 = vmatpush2.msra.mxu0 %v3263
  %3959 = vmatprep.subr.mxu0 0.0
  %3960 = vmatpush2.msra.mxu0 %v3262
  %3961 = vmatprep.subr.mxu0 0.0
  %3962 = vmatpush2.msra.mxu0 %v3261
  %3963 = vmatprep.subr.mxu0 0.0
  %3964 = vmatpush2.msra.mxu0 %v3260
  %3965 = vmatprep.subr.mxu0 0.0
  %3966 = vmatpush2.msra.mxu0 %v3259
  %3967 = vmatprep.subr.mxu0 0.0
  %3968 = vmatpush2.msra.mxu0 %v3258
  %3969 = vmatprep.subr.mxu0 0.0
  %3970 = vmatpush2.msra.mxu0 %v3257
  %3971 = vmatprep.subr.mxu0 0.0
  %3972 = vmatpush2.msra.mxu0 %v3256
  %3973 = vmatprep.subr.mxu0 0.0
  %3974 = vmatpush2.msra.mxu0 %v3255
  %3975 = vmatprep.mubr.f32.mxu0 %v3863
  %3976 = vmatmul.mubr.f32.gmra.mxu0 %v3815
  %v3977 = vpop.f32.mrf.mxu0
  %v3978 = vadd.f32 0.0, %v3977
  %v3979 = vpop.f32.mrf.mxu0
  %3980 = vmatprep.mubr.f32.mxu0 %v3864
  %3981 = vmatmul.mubr.f32.gmra.mxu0 %v3816
  %v3982 = vpop.f32.mrf.mxu0
  %v3983 = vadd.f32 0.0, %v3982
  %v3984 = vpop.f32.mrf.mxu0
  %3985 = vmatprep.mubr.f32.mxu0 %v3865
  %3986 = vmatmul.mubr.f32.gmra.mxu0 %v3817
  %v3987 = vpop.f32.mrf.mxu0
  %v3988 = vadd.f32 0.0, %v3987
  %v3989 = vpop.f32.mrf.mxu0
  %3990 = vmatprep.mubr.f32.mxu0 %v3866
  %3991 = vmatmul.mubr.f32.gmra.mxu0 %v3818
  %v3992 = vpop.f32.mrf.mxu0
  %v3993 = vadd.f32 0.0, %v3992
  %v3994 = vpop.f32.mrf.mxu0
  %3995 = vmatprep.mubr.f32.mxu0 %v3867
  %3996 = vmatmul.mubr.f32.gmra.mxu0 %v3819
  %v3997 = vpop.f32.mrf.mxu0
  %v3998 = vadd.f32 0.0, %v3997
  %v3999 = vpop.f32.mrf.mxu0
  %4000 = vmatprep.mubr.f32.mxu0 %v3868
  %4001 = vmatmul.mubr.f32.gmra.mxu0 %v3820
  %v4002 = vpop.f32.mrf.mxu0
  %v4003 = vadd.f32 0.0, %v4002
  %v4004 = vpop.f32.mrf.mxu0
  %4005 = vmatprep.mubr.f32.mxu0 %v3869
  %4006 = vmatmul.mubr.f32.gmra.mxu0 %v3821
  %v4007 = vpop.f32.mrf.mxu0
  %v4008 = vadd.f32 0.0, %v4007
  %v4009 = vpop.f32.mrf.mxu0
  %4010 = vmatprep.mubr.f32.mxu0 %v3870
  %4011 = vmatmul.mubr.f32.gmra.mxu0 %v3822
  %v4012 = vpop.f32.mrf.mxu0
  %v4013 = vadd.f32 0.0, %v4012
  %v4014 = vpop.f32.mrf.mxu0
  %4015 = vmatprep.mubr.f32.mxu0 %v3871
  %4016 = vmatmul.mubr.f32.gmra.mxu0 %v3823
  %v4017 = vpop.f32.mrf.mxu0
  %v4018 = vadd.f32 0.0, %v4017
  %v4019 = vpop.f32.mrf.mxu0
  %4020 = vmatprep.mubr.f32.mxu0 %v3872
  %4021 = vmatmul.mubr.f32.gmra.mxu0 %v3824
  %v4022 = vpop.f32.mrf.mxu0
  %v4023 = vadd.f32 0.0, %v4022
  %v4024 = vpop.f32.mrf.mxu0
  %4025 = vmatprep.mubr.f32.mxu0 %v3873
  %4026 = vmatmul.mubr.f32.gmra.mxu0 %v3825
  %v4027 = vpop.f32.mrf.mxu0
  %v4028 = vadd.f32 0.0, %v4027
  %v4029 = vpop.f32.mrf.mxu0
  %4030 = vmatprep.mubr.f32.mxu0 %v3874
  %4031 = vmatmul.mubr.f32.gmra.mxu0 %v3826
  %v4032 = vpop.f32.mrf.mxu0
  %v4033 = vadd.f32 0.0, %v4032
  %v4034 = vpop.f32.mrf.mxu0
  %4035 = vmatprep.mubr.f32.mxu0 %v3875
  %4036 = vmatmul.mubr.f32.gmra.mxu0 %v3827
  %v4037 = vpop.f32.mrf.mxu0
  %v4038 = vadd.f32 0.0, %v4037
  %v4039 = vpop.f32.mrf.mxu0
  %4040 = vmatprep.mubr.f32.mxu0 %v3876
  %4041 = vmatmul.mubr.f32.gmra.mxu0 %v3828
  %v4042 = vpop.f32.mrf.mxu0
  %v4043 = vadd.f32 0.0, %v4042
  %v4044 = vpop.f32.mrf.mxu0
  %4045 = vmatprep.mubr.f32.mxu0 %v3877
  %4046 = vmatmul.mubr.f32.gmra.mxu0 %v3829
  %v4047 = vpop.f32.mrf.mxu0
  %v4048 = vadd.f32 0.0, %v4047
  %v4049 = vpop.f32.mrf.mxu0
  %4050 = vmatprep.mubr.f32.mxu0 %v3878
  %4051 = vmatmul.mubr.f32.gmra.mxu0 %v3830
  %v4052 = vpop.f32.mrf.mxu0
  %v4053 = vadd.f32 0.0, %v4052
  %v4054 = vpop.f32.mrf.mxu0
  %4055 = vdwg.mxu0
  %4056 = vmatprep.subr.mxu0 0.0
  %4057 = vmatpush1.msra.mxu0 0.0
  %4058 = vmatprep.subr.mxu0 0.0
  %4059 = vmatpush1.msra.mxu0 0.0
  %4060 = vmatprep.subr.mxu0 0.0
  %4061 = vmatpush1.msra.mxu0 0.0
  %4062 = vmatprep.subr.mxu0 0.0
  %4063 = vmatpush1.msra.mxu0 0.0
  %4064 = vmatprep.subr.mxu0 0.0
  %4065 = vmatpush1.msra.mxu0 0.0
  %4066 = vmatprep.subr.mxu0 0.0
  %4067 = vmatpush1.msra.mxu0 0.0
  %4068 = vmatprep.subr.mxu0 0.0
  %4069 = vmatpush1.msra.mxu0 0.0
  %4070 = vmatprep.subr.mxu0 0.0
  %4071 = vmatpush1.msra.mxu0 0.0
  %4072 = vmatprep.subr.mxu0 0.0
  %4073 = vmatpush1.msra.mxu0 0.0
  %4074 = vmatprep.subr.mxu0 0.0
  %4075 = vmatpush1.msra.mxu0 0.0
  %4076 = vmatprep.subr.mxu0 0.0
  %4077 = vmatpush1.msra.mxu0 0.0
  %4078 = vmatprep.subr.mxu0 0.0
  %4079 = vmatpush1.msra.mxu0 0.0
  %4080 = vmatprep.subr.mxu0 0.0
  %4081 = vmatpush1.msra.mxu0 %v3274
  %4082 = vmatprep.subr.mxu0 0.0
  %4083 = vmatpush1.msra.mxu0 %v3273
  %4084 = vmatprep.subr.mxu0 0.0
  %4085 = vmatpush1.msra.mxu0 %v3272
  %4086 = vmatprep.subr.mxu0 0.0
  %4087 = vmatpush1.msra.mxu0 %v3271
  %4088 = vmatprep.subr.mxu0 0.0
  %4089 = vmatpush2.msra.mxu0 0.0
  %4090 = vmatprep.subr.mxu0 0.0
  %4091 = vmatpush2.msra.mxu0 0.0
  %4092 = vmatprep.subr.mxu0 0.0
  %4093 = vmatpush2.msra.mxu0 0.0
  %4094 = vmatprep.subr.mxu0 0.0
  %4095 = vmatpush2.msra.mxu0 0.0
  %4096 = vmatprep.subr.mxu0 0.0
  %4097 = vmatpush2.msra.mxu0 0.0
  %4098 = vmatprep.subr.mxu0 0.0
  %4099 = vmatpush2.msra.mxu0 0.0
  %4100 = vmatprep.subr.mxu0 0.0
  %4101 = vmatpush2.msra.mxu0 0.0
  %4102 = vmatprep.subr.mxu0 0.0
  %4103 = vmatpush2.msra.mxu0 0.0
  %4104 = vmatprep.subr.mxu0 0.0
  %4105 = vmatpush2.msra.mxu0 0.0
  %4106 = vmatprep.subr.mxu0 0.0
  %4107 = vmatpush2.msra.mxu0 0.0
  %4108 = vmatprep.subr.mxu0 0.0
  %4109 = vmatpush2.msra.mxu0 0.0
  %4110 = vmatprep.subr.mxu0 0.0
  %4111 = vmatpush2.msra.mxu0 0.0
  %4112 = vmatprep.subr.mxu0 0.0
  %4113 = vmatpush2.msra.mxu0 0.0
  %4114 = vmatprep.subr.mxu0 0.0
  %4115 = vmatpush2.msra.mxu0 0.0
  %4116 = vmatprep.subr.mxu0 0.0
  %4117 = vmatpush2.msra.mxu0 0.0
  %4118 = vmatprep.subr.mxu0 0.0
  %4119 = vmatpush2.msra.mxu0 0.0
  %4120 = vmatprep.mubr.f32.mxu0 0.0
  %4121 = vmatmul.mubr.f32.gmra.mxu0 %v3879
  %v4122 = vpop.f32.mrf.mxu0
  %v4123 = vadd.f32 %v3978, %v4122
  %v4124 = vpop.f32.mrf.mxu0
  %4125 = vmatprep.mubr.f32.mxu0 0.0
  %4126 = vmatmul.mubr.f32.gmra.mxu0 %v3881
  %v4127 = vpop.f32.mrf.mxu0
  %v4128 = vadd.f32 %v3983, %v4127
  %v4129 = vpop.f32.mrf.mxu0
  %4130 = vmatprep.mubr.f32.mxu0 0.0
  %4131 = vmatmul.mubr.f32.gmra.mxu0 %v3883
  %v4132 = vpop.f32.mrf.mxu0
  %v4133 = vadd.f32 %v3988, %v4132
  %v4134 = vpop.f32.mrf.mxu0
  %4135 = vmatprep.mubr.f32.mxu0 0.0
  %4136 = vmatmul.mubr.f32.gmra.mxu0 %v3885
  %v4137 = vpop.f32.mrf.mxu0
  %v4138 = vadd.f32 %v3993, %v4137
  %v4139 = vpop.f32.mrf.mxu0
  %4140 = vmatprep.mubr.f32.mxu0 0.0
  %4141 = vmatmul.mubr.f32.gmra.mxu0 %v3887
  %v4142 = vpop.f32.mrf.mxu0
  %v4143 = vadd.f32 %v3998, %v4142
  %v4144 = vpop.f32.mrf.mxu0
  %4145 = vmatprep.mubr.f32.mxu0 0.0
  %4146 = vmatmul.mubr.f32.gmra.mxu0 %v3889
  %v4147 = vpop.f32.mrf.mxu0
  %v4148 = vadd.f32 %v4003, %v4147
  %v4149 = vpop.f32.mrf.mxu0
  %4150 = vmatprep.mubr.f32.mxu0 0.0
  %4151 = vmatmul.mubr.f32.gmra.mxu0 %v3891
  %v4152 = vpop.f32.mrf.mxu0
  %v4153 = vadd.f32 %v4008, %v4152
  %v4154 = vpop.f32.mrf.mxu0
  %4155 = vmatprep.mubr.f32.mxu0 0.0
  %4156 = vmatmul.mubr.f32.gmra.mxu0 %v3893
  %v4157 = vpop.f32.mrf.mxu0
  %v4158 = vadd.f32 %v4013, %v4157
  %v4159 = vpop.f32.mrf.mxu0
  %4160 = vmatprep.mubr.f32.mxu0 0.0
  %4161 = vmatmul.mubr.f32.gmra.mxu0 %v3895
  %v4162 = vpop.f32.mrf.mxu0
  %v4163 = vadd.f32 %v4018, %v4162
  %v4164 = vpop.f32.mrf.mxu0
  %4165 = vmatprep.mubr.f32.mxu0 0.0
  %4166 = vmatmul.mubr.f32.gmra.mxu0 %v3897
  %v4167 = vpop.f32.mrf.mxu0
  %v4168 = vadd.f32 %v4023, %v4167
  %v4169 = vpop.f32.mrf.mxu0
  %4170 = vmatprep.mubr.f32.mxu0 0.0
  %4171 = vmatmul.mubr.f32.gmra.mxu0 %v3899
  %v4172 = vpop.f32.mrf.mxu0
  %v4173 = vadd.f32 %v4028, %v4172
  %v4174 = vpop.f32.mrf.mxu0
  %4175 = vmatprep.mubr.f32.mxu0 0.0
  %4176 = vmatmul.mubr.f32.gmra.mxu0 %v3901
  %v4177 = vpop.f32.mrf.mxu0
  %v4178 = vadd.f32 %v4033, %v4177
  %v4179 = vpop.f32.mrf.mxu0
  %4180 = vmatprep.mubr.f32.mxu0 0.0
  %4181 = vmatmul.mubr.f32.gmra.mxu0 %v3903
  %v4182 = vpop.f32.mrf.mxu0
  %v4183 = vadd.f32 %v4038, %v4182
  %v4184 = vpop.f32.mrf.mxu0
  %4185 = vmatprep.mubr.f32.mxu0 0.0
  %4186 = vmatmul.mubr.f32.gmra.mxu0 %v3905
  %v4187 = vpop.f32.mrf.mxu0
  %v4188 = vadd.f32 %v4043, %v4187
  %v4189 = vpop.f32.mrf.mxu0
  %4190 = vmatprep.mubr.f32.mxu0 0.0
  %4191 = vmatmul.mubr.f32.gmra.mxu0 %v3907
  %v4192 = vpop.f32.mrf.mxu0
  %v4193 = vadd.f32 %v4048, %v4192
  %v4194 = vpop.f32.mrf.mxu0
  %4195 = vmatprep.mubr.f32.mxu0 0.0
  %4196 = vmatmul.mubr.f32.gmra.mxu0 %v3909
  %v4197 = vpop.f32.mrf.mxu0
  %v4198 = vadd.f32 %v4053, %v4197
  %v4199 = vpop.f32.mrf.mxu0
  %4200 = vdwg.mxu0
  %v4202 = vlaneseq
  %v4203 = vshrl.u32 %v4202, 7
  %v4204 = vsub.s32 0, %v4203
  %v4205 = vrot.slane %v3276, %v4204
  %v4207 = vmul.f32 %v4123, %v4205
  %v4208 = vmul.f32 %v4128, %v4205
  %v4209 = vmul.f32 %v4133, %v4205
  %v4210 = vmul.f32 %v4138, %v4205
  %v4211 = vmul.f32 %v4143, %v4205
  %v4212 = vmul.f32 %v4148, %v4205
  %v4213 = vmul.f32 %v4153, %v4205
  %v4214 = vmul.f32 %v4158, %v4205
  %v4215 = vmul.f32 %v4163, %v4205
  %v4216 = vmul.f32 %v4168, %v4205
  %v4217 = vmul.f32 %v4173, %v4205
  %v4218 = vmul.f32 %v4178, %v4205
  %v4219 = vmul.f32 %v4183, %v4205
  %v4220 = vmul.f32 %v4188, %v4205
  %v4221 = vmul.f32 %v4193, %v4205
  %v4222 = vmul.f32 %v4198, %v4205
  %v4224 = vlaneseq
  %v4225 = vshrl.u32 %v4224, 7
  %v4226 = vsub.s32 0, %v4225
  %v4227 = vrot.slane %v3278, %v4226
  %v4229 = vadd.f32 %v4207, %v4227
  %v4230 = vadd.f32 %v4208, %v4227
  %v4231 = vadd.f32 %v4209, %v4227
  %v4232 = vadd.f32 %v4210, %v4227
  %v4233 = vadd.f32 %v4211, %v4227
  %v4234 = vadd.f32 %v4212, %v4227
  %v4235 = vadd.f32 %v4213, %v4227
  %v4236 = vadd.f32 %v4214, %v4227
  %v4237 = vadd.f32 %v4215, %v4227
  %v4238 = vadd.f32 %v4216, %v4227
  %v4239 = vadd.f32 %v4217, %v4227
  %v4240 = vadd.f32 %v4218, %v4227
  %v4241 = vadd.f32 %v4219, %v4227
  %v4242 = vadd.f32 %v4220, %v4227
  %v4243 = vadd.f32 %v4221, %v4227
  %v4244 = vadd.f32 %v4222, %v4227
  %v4245 = vmax.f32 %v4229, 0.0
  %v4246 = vmax.f32 %v4230, 0.0
  %v4247 = vmax.f32 %v4231, 0.0
  %v4248 = vmax.f32 %v4232, 0.0
  %v4249 = vmax.f32 %v4233, 0.0
  %v4250 = vmax.f32 %v4234, 0.0
  %v4251 = vmax.f32 %v4235, 0.0
  %v4252 = vmax.f32 %v4236, 0.0
  %v4253 = vmax.f32 %v4237, 0.0
  %v4254 = vmax.f32 %v4238, 0.0
  %v4255 = vmax.f32 %v4239, 0.0
  %v4256 = vmax.f32 %v4240, 0.0
  %v4257 = vmax.f32 %v4241, 0.0
  %v4258 = vmax.f32 %v4242, 0.0
  %v4259 = vmax.f32 %v4243, 0.0
  %v4260 = vmax.f32 %v4244, 0.0
  %4261 = vst.msk [vmem:[%s1128 + $0x1] sm:$0xff] %vm68, %v4245
  %4262 = vst.msk [vmem:[%s1128 + $0x11] sm:$0xff] %vm68, %v4246
  %4263 = vst.msk [vmem:[%s1128 + $0x21] sm:$0xff] %vm68, %v4247
  %4264 = vst.msk [vmem:[%s1128 + $0x31] sm:$0xff] %vm68, %v4248
  %4265 = vst.msk [vmem:[%s1128 + $0x41] sm:$0xff] %vm68, %v4249
  %4266 = vst.msk [vmem:[%s1128 + $0x51] sm:$0xff] %vm68, %v4250
  %4267 = vst.msk [vmem:[%s1128 + $0x61] sm:$0xff] %vm68, %v4251
  %4268 = vst.msk [vmem:[%s1128 + $0x71] sm:$0xff] %vm68, %v4252
  %4269 = vst.msk [vmem:[%s1128 + $0xa1] sm:$0xff] %vm68, %v4253
  %4270 = vst.msk [vmem:[%s1128 + $0xb1] sm:$0xff] %vm68, %v4254
  %4271 = vst.msk [vmem:[%s1128 + $0xc1] sm:$0xff] %vm68, %v4255
  %4272 = vst.msk [vmem:[%s1128 + $0xd1] sm:$0xff] %vm68, %v4256
  %4273 = vst.msk [vmem:[%s1128 + $0xe1] sm:$0xff] %vm68, %v4257
  %4274 = vst.msk [vmem:[%s1128 + $0xf1] sm:$0xff] %vm68, %v4258
  %4275 = vst.msk [vmem:[%s1128 + $0x101] sm:$0xff] %vm68, %v4259
  %4276 = vst.msk [vmem:[%s1128 + $0x111] sm:$0xff] %vm68, %v4260
  %s4277 = scalar_lea.vmem %s4, 864
  %v4278 = vld [vmem:[%s4277] sm:$0xff]
  %v4279 = vld [vmem:[%s4277 + $0x8] sm:$0xff]
  %v4280 = vld [vmem:[%s4277 + $0x10] sm:$0xff]
  %v4281 = vld [vmem:[%s4277 + $0x18] sm:$0xff]
  %v4282 = vld [vmem:[%s4277 + $0x20] sm:$0xff]
  %v4283 = vld [vmem:[%s4277 + $0x28] sm:$0xff]
  %v4284 = vld [vmem:[%s4277 + $0x30] sm:$0xff]
  %v4285 = vld [vmem:[%s4277 + $0x38] sm:$0xff]
  %v4286 = vld [vmem:[%s4277 + $0x40] sm:$0xff]
  %v4287 = vld [vmem:[%s4277 + $0x48] sm:$0xff]
  %v4288 = vld [vmem:[%s4277 + $0x50] sm:$0xff]
  %v4289 = vld [vmem:[%s4277 + $0x58] sm:$0xff]
  %v4290 = vld [vmem:[%s4277 + $0x60] sm:$0xff]
  %v4291 = vld [vmem:[%s4277 + $0x68] sm:$0xff]
  %v4292 = vld [vmem:[%s4277 + $0x70] sm:$0xff]
  %v4293 = vld [vmem:[%s4277 + $0x78] sm:$0xff]
  %v4294 = vld [vmem:[%s4277 + $0x80] sm:$0xff]
  %v4295 = vld [vmem:[%s4277 + $0x88] sm:$0xff]
  %v4296 = vld [vmem:[%s4277 + $0x90] sm:$0xff]
  %v4297 = vld [vmem:[%s4277 + $0x98] sm:$0xff]
  %v4298 = vld [vmem:[%s4277 + $0xa0] sm:$0xff]
  %v4299 = vld [vmem:[%s4277 + $0xa8] sm:$0xff]
  %v4300 = vld [vmem:[%s4277 + $0xb0] sm:$0xff]
  %v4301 = vld [vmem:[%s4277 + $0xb8] sm:$0xff]
  %v4302 = vld [vmem:[%s4277 + $0xc0] sm:$0xff]
  %v4303 = vld [vmem:[%s4277 + $0xc8] sm:$0xff]
  %v4304 = vld [vmem:[%s4277 + $0xd0] sm:$0xff]
  %v4305 = vld [vmem:[%s4277 + $0xd8] sm:$0xff]
  %v4306 = vld [vmem:[%s4277 + $0xe0] sm:$0xff]
  %v4307 = vld [vmem:[%s4277 + $0xe8] sm:$0xff]
  %v4308 = vld [vmem:[%s4277 + $0xf0] sm:$0xff]
  %v4309 = vld [vmem:[%s4277 + $0xf8] sm:$0xff]
  %v4310 = vld [vmem:[%s4277 + $0x100] sm:$0xff]
  %v4311 = vld [vmem:[%s4277 + $0x108] sm:$0xff]
  %v4312 = vld [vmem:[%s4277 + $0x110] sm:$0xff]
  %v4313 = vld [vmem:[%s4277 + $0x118] sm:$0xff]
  %s4314 = scalar_lea.vmem %s5, 3
  %v4315 = vld [vmem:[%s4314] sm:$0x1]
  %s4316 = scalar_lea.vmem %s6, 3
  %v4317 = vld [vmem:[%s4316] sm:$0x1]
  %v4318 = vld [vmem:[#allocation3] sm:$0xff]
  %v4319 = vld [vmem:[#allocation3 + $0x8] sm:$0x3]
  %v4320 = vld [vmem:[#allocation3 + $0x10] sm:$0xff]
  %v4321 = vld [vmem:[#allocation3 + $0x18] sm:$0x3]
  %v4322 = vld [vmem:[#allocation3 + $0x20] sm:$0xff]
  %v4323 = vld [vmem:[#allocation3 + $0x28] sm:$0x3]
  %v4324 = vld [vmem:[#allocation3 + $0x30] sm:$0xff]
  %v4325 = vld [vmem:[#allocation3 + $0x38] sm:$0x3]
  %v4326 = vld [vmem:[#allocation3 + $0x40] sm:$0xff]
  %v4327 = vld [vmem:[#allocation3 + $0x48] sm:$0x3]
  %v4328 = vld [vmem:[#allocation3 + $0x50] sm:$0xff]
  %v4329 = vld [vmem:[#allocation3 + $0x58] sm:$0x3]
  %v4330 = vld [vmem:[#allocation3 + $0x60] sm:$0xff]
  %v4331 = vld [vmem:[#allocation3 + $0x68] sm:$0x3]
  %v4332 = vld [vmem:[#allocation3 + $0x70] sm:$0xff]
  %v4333 = vld [vmem:[#allocation3 + $0x78] sm:$0x3]
  %v4334 = vld [vmem:[#allocation3 + $0x80] sm:$0xff]
  %v4335 = vld [vmem:[#allocation3 + $0x88] sm:$0x3]
  %v4336 = vld [vmem:[#allocation3 + $0x90] sm:$0xff]
  %v4337 = vld [vmem:[#allocation3 + $0x98] sm:$0x3]
  %v4338 = vld [vmem:[#allocation3 + $0xa0] sm:$0xff]
  %v4339 = vld [vmem:[#allocation3 + $0xa8] sm:$0x3]
  %v4340 = vld [vmem:[#allocation3 + $0xb0] sm:$0xff]
  %v4341 = vld [vmem:[#allocation3 + $0xb8] sm:$0x3]
  %v4342 = vld [vmem:[#allocation3 + $0xc0] sm:$0xff]
  %v4343 = vld [vmem:[#allocation3 + $0xc8] sm:$0x3]
  %v4344 = vld [vmem:[#allocation3 + $0xd0] sm:$0xff]
  %v4345 = vld [vmem:[#allocation3 + $0xd8] sm:$0x3]
  %v4346 = vld [vmem:[#allocation3 + $0xe0] sm:$0xff]
  %v4347 = vld [vmem:[#allocation3 + $0xe8] sm:$0x3]
  %v4348 = vld [vmem:[#allocation3 + $0xf0] sm:$0xff]
  %v4349 = vld [vmem:[#allocation3 + $0xf8] sm:$0x3]
  %v4350 = vld [vmem:[#allocation3 + $0x100] sm:$0xff]
  %v4351 = vld [vmem:[#allocation3 + $0x108] sm:$0x3]
  %v4352 = vld [vmem:[#allocation3 + $0x110] sm:$0xff]
  %v4353 = vld [vmem:[#allocation3 + $0x118] sm:$0x3]
  %v4354 = vld [vmem:[#allocation3 + $0x120] sm:$0xff]
  %v4355 = vld [vmem:[#allocation3 + $0x128] sm:$0x3]
  %v4356 = vld [vmem:[#allocation3 + $0x130] sm:$0xff]
  %v4357 = vld [vmem:[#allocation3 + $0x138] sm:$0x3]
  %v4390 = vrot.slane %v4318, 1
  %v4391 = vrot.slane %v4319, 1
  %v4392 = vsel %vm222, %v4390, %v4391
  %v4393 = vrot.slane %v4320, 1
  %v4394 = vrot.slane %v4321, 1
  %v4395 = vsel %vm222, %v4393, %v4394
  %v4396 = vrot.slane %v4322, 1
  %v4397 = vrot.slane %v4323, 1
  %v4398 = vsel %vm222, %v4396, %v4397
  %v4399 = vrot.slane %v4324, 1
  %v4400 = vrot.slane %v4325, 1
  %v4401 = vsel %vm222, %v4399, %v4400
  %v4402 = vrot.slane %v4326, 1
  %v4403 = vrot.slane %v4327, 1
  %v4404 = vsel %vm222, %v4402, %v4403
  %v4405 = vrot.slane %v4328, 1
  %v4406 = vrot.slane %v4329, 1
  %v4407 = vsel %vm222, %v4405, %v4406
  %v4408 = vrot.slane %v4330, 1
  %v4409 = vrot.slane %v4331, 1
  %v4410 = vsel %vm222, %v4408, %v4409
  %v4411 = vrot.slane %v4332, 1
  %v4412 = vrot.slane %v4333, 1
  %v4413 = vsel %vm222, %v4411, %v4412
  %v4414 = vrot.slane %v4338, 1
  %v4415 = vrot.slane %v4339, 1
  %v4416 = vsel %vm222, %v4414, %v4415
  %v4417 = vrot.slane %v4340, 1
  %v4418 = vrot.slane %v4341, 1
  %v4419 = vsel %vm222, %v4417, %v4418
  %v4420 = vrot.slane %v4342, 1
  %v4421 = vrot.slane %v4343, 1
  %v4422 = vsel %vm222, %v4420, %v4421
  %v4423 = vrot.slane %v4344, 1
  %v4424 = vrot.slane %v4345, 1
  %v4425 = vsel %vm222, %v4423, %v4424
  %v4426 = vrot.slane %v4346, 1
  %v4427 = vrot.slane %v4347, 1
  %v4428 = vsel %vm222, %v4426, %v4427
  %v4429 = vrot.slane %v4348, 1
  %v4430 = vrot.slane %v4349, 1
  %v4431 = vsel %vm222, %v4429, %v4430
  %v4432 = vrot.slane %v4350, 1
  %v4433 = vrot.slane %v4351, 1
  %v4434 = vsel %vm222, %v4432, %v4433
  %v4435 = vrot.slane %v4352, 1
  %v4436 = vrot.slane %v4353, 1
  %v4437 = vsel %vm222, %v4435, %v4436
  %v4438 = vrot.slane %v4318, 2
  %v4439 = vrot.slane %v4319, 2
  %v4440 = vsel %vm271, %v4438, %v4439
  %v4441 = vrot.slane %v4320, 2
  %v4442 = vrot.slane %v4321, 2
  %v4443 = vsel %vm271, %v4441, %v4442
  %v4444 = vrot.slane %v4322, 2
  %v4445 = vrot.slane %v4323, 2
  %v4446 = vsel %vm271, %v4444, %v4445
  %v4447 = vrot.slane %v4324, 2
  %v4448 = vrot.slane %v4325, 2
  %v4449 = vsel %vm271, %v4447, %v4448
  %v4450 = vrot.slane %v4326, 2
  %v4451 = vrot.slane %v4327, 2
  %v4452 = vsel %vm271, %v4450, %v4451
  %v4453 = vrot.slane %v4328, 2
  %v4454 = vrot.slane %v4329, 2
  %v4455 = vsel %vm271, %v4453, %v4454
  %v4456 = vrot.slane %v4330, 2
  %v4457 = vrot.slane %v4331, 2
  %v4458 = vsel %vm271, %v4456, %v4457
  %v4459 = vrot.slane %v4332, 2
  %v4460 = vrot.slane %v4333, 2
  %v4461 = vsel %vm271, %v4459, %v4460
  %v4462 = vrot.slane %v4338, 2
  %v4463 = vrot.slane %v4339, 2
  %v4464 = vsel %vm271, %v4462, %v4463
  %v4465 = vrot.slane %v4340, 2
  %v4466 = vrot.slane %v4341, 2
  %v4467 = vsel %vm271, %v4465, %v4466
  %v4468 = vrot.slane %v4342, 2
  %v4469 = vrot.slane %v4343, 2
  %v4470 = vsel %vm271, %v4468, %v4469
  %v4471 = vrot.slane %v4344, 2
  %v4472 = vrot.slane %v4345, 2
  %v4473 = vsel %vm271, %v4471, %v4472
  %v4474 = vrot.slane %v4346, 2
  %v4475 = vrot.slane %v4347, 2
  %v4476 = vsel %vm271, %v4474, %v4475
  %v4477 = vrot.slane %v4348, 2
  %v4478 = vrot.slane %v4349, 2
  %v4479 = vsel %vm271, %v4477, %v4478
  %v4480 = vrot.slane %v4350, 2
  %v4481 = vrot.slane %v4351, 2
  %v4482 = vsel %vm271, %v4480, %v4481
  %v4483 = vrot.slane %v4352, 2
  %v4484 = vrot.slane %v4353, 2
  %v4485 = vsel %vm271, %v4483, %v4484
  %v4490 = vrot.slane %v4334, 1
  %v4491 = vrot.slane %v4335, 1
  %v4492 = vsel %vm222, %v4490, %v4491
  %v4493 = vrot.slane %v4354, 1
  %v4494 = vrot.slane %v4355, 1
  %v4495 = vsel %vm222, %v4493, %v4494
  %v4512 = vrot.slane %v4334, 2
  %v4513 = vrot.slane %v4335, 2
  %v4514 = vsel %vm271, %v4512, %v4513
  %v4515 = vrot.slane %v4354, 2
  %v4516 = vrot.slane %v4355, 2
  %v4517 = vsel %vm271, %v4515, %v4516
  %v4522 = vrot.slane %v4336, 1
  %v4523 = vrot.slane %v4337, 1
  %v4524 = vsel %vm222, %v4522, %v4523
  %v4525 = vrot.slane %v4356, 1
  %v4526 = vrot.slane %v4357, 1
  %v4527 = vsel %vm222, %v4525, %v4526
  %v4528 = vrot.slane %v4336, 2
  %v4529 = vrot.slane %v4337, 2
  %v4530 = vsel %vm271, %v4528, %v4529
  %v4531 = vrot.slane %v4356, 2
  %v4532 = vrot.slane %v4357, 2
  %v4533 = vsel %vm271, %v4531, %v4532
  %4534 = vrot.lane.b32.xlu0 %v4392, 32
  %v4535 = vpop.permute.xlu0 %4534
  %4536 = vrot.lane.b32.xlu0 %v4395, 32
  %v4537 = vpop.permute.xlu0 %4536
  %4538 = vrot.lane.b32.xlu0 %v4398, 32
  %v4539 = vpop.permute.xlu0 %4538
  %4540 = vrot.lane.b32.xlu0 %v4401, 32
  %v4541 = vpop.permute.xlu0 %4540
  %4542 = vrot.lane.b32.xlu0 %v4404, 32
  %v4543 = vpop.permute.xlu0 %4542
  %4544 = vrot.lane.b32.xlu0 %v4407, 32
  %v4545 = vpop.permute.xlu0 %4544
  %4546 = vrot.lane.b32.xlu0 %v4410, 32
  %v4547 = vpop.permute.xlu0 %4546
  %4548 = vrot.lane.b32.xlu0 %v4413, 32
  %v4549 = vpop.permute.xlu0 %4548
  %4550 = vrot.lane.b32.xlu0 %v4416, 32
  %v4551 = vpop.permute.xlu0 %4550
  %4552 = vrot.lane.b32.xlu0 %v4419, 32
  %v4553 = vpop.permute.xlu0 %4552
  %4554 = vrot.lane.b32.xlu0 %v4422, 32
  %v4555 = vpop.permute.xlu0 %4554
  %4556 = vrot.lane.b32.xlu0 %v4425, 32
  %v4557 = vpop.permute.xlu0 %4556
  %4558 = vrot.lane.b32.xlu0 %v4428, 32
  %v4559 = vpop.permute.xlu0 %4558
  %4560 = vrot.lane.b32.xlu0 %v4431, 32
  %v4561 = vpop.permute.xlu0 %4560
  %4562 = vrot.lane.b32.xlu0 %v4434, 32
  %v4563 = vpop.permute.xlu0 %4562
  %4564 = vrot.lane.b32.xlu0 %v4437, 32
  %v4565 = vpop.permute.xlu0 %4564
  %4582 = vrot.lane.b32.xlu0 %v4440, 64
  %v4583 = vpop.permute.xlu0 %4582
  %4584 = vrot.lane.b32.xlu0 %v4443, 64
  %v4585 = vpop.permute.xlu0 %4584
  %4586 = vrot.lane.b32.xlu0 %v4446, 64
  %v4587 = vpop.permute.xlu0 %4586
  %4588 = vrot.lane.b32.xlu0 %v4449, 64
  %v4589 = vpop.permute.xlu0 %4588
  %4590 = vrot.lane.b32.xlu0 %v4452, 64
  %v4591 = vpop.permute.xlu0 %4590
  %4592 = vrot.lane.b32.xlu0 %v4455, 64
  %v4593 = vpop.permute.xlu0 %4592
  %4594 = vrot.lane.b32.xlu0 %v4458, 64
  %v4595 = vpop.permute.xlu0 %4594
  %4596 = vrot.lane.b32.xlu0 %v4461, 64
  %v4597 = vpop.permute.xlu0 %4596
  %4598 = vrot.lane.b32.xlu0 %v4464, 64
  %v4599 = vpop.permute.xlu0 %4598
  %4600 = vrot.lane.b32.xlu0 %v4467, 64
  %v4601 = vpop.permute.xlu0 %4600
  %4602 = vrot.lane.b32.xlu0 %v4470, 64
  %v4603 = vpop.permute.xlu0 %4602
  %4604 = vrot.lane.b32.xlu0 %v4473, 64
  %v4605 = vpop.permute.xlu0 %4604
  %4606 = vrot.lane.b32.xlu0 %v4476, 64
  %v4607 = vpop.permute.xlu0 %4606
  %4608 = vrot.lane.b32.xlu0 %v4479, 64
  %v4609 = vpop.permute.xlu0 %4608
  %4610 = vrot.lane.b32.xlu0 %v4482, 64
  %v4611 = vpop.permute.xlu0 %4610
  %4612 = vrot.lane.b32.xlu0 %v4485, 64
  %v4613 = vpop.permute.xlu0 %4612
  %4630 = vrot.lane.b32.xlu0 %v4320, 96
  %v4631 = vpop.permute.xlu0 %4630
  %4632 = vrot.lane.b32.xlu0 %v4322, 96
  %v4633 = vpop.permute.xlu0 %4632
  %4634 = vrot.lane.b32.xlu0 %v4324, 96
  %v4635 = vpop.permute.xlu0 %4634
  %4636 = vrot.lane.b32.xlu0 %v4326, 96
  %v4637 = vpop.permute.xlu0 %4636
  %4638 = vrot.lane.b32.xlu0 %v4328, 96
  %v4639 = vpop.permute.xlu0 %4638
  %4640 = vrot.lane.b32.xlu0 %v4330, 96
  %v4641 = vpop.permute.xlu0 %4640
  %4642 = vrot.lane.b32.xlu0 %v4332, 96
  %v4643 = vpop.permute.xlu0 %4642
  %4644 = vrot.lane.b32.xlu0 %v4334, 96
  %v4645 = vpop.permute.xlu0 %4644
  %4646 = vrot.lane.b32.xlu0 %v4340, 96
  %v4647 = vpop.permute.xlu0 %4646
  %4648 = vrot.lane.b32.xlu0 %v4342, 96
  %v4649 = vpop.permute.xlu0 %4648
  %4650 = vrot.lane.b32.xlu0 %v4344, 96
  %v4651 = vpop.permute.xlu0 %4650
  %4652 = vrot.lane.b32.xlu0 %v4346, 96
  %v4653 = vpop.permute.xlu0 %4652
  %4654 = vrot.lane.b32.xlu0 %v4348, 96
  %v4655 = vpop.permute.xlu0 %4654
  %4656 = vrot.lane.b32.xlu0 %v4350, 96
  %v4657 = vpop.permute.xlu0 %4656
  %4658 = vrot.lane.b32.xlu0 %v4352, 96
  %v4659 = vpop.permute.xlu0 %4658
  %4660 = vrot.lane.b32.xlu0 %v4354, 96
  %v4661 = vpop.permute.xlu0 %4660
  %4678 = vrot.lane.b32.xlu0 %v4443, 32
  %v4679 = vpop.permute.xlu0 %4678
  %4680 = vrot.lane.b32.xlu0 %v4446, 32
  %v4681 = vpop.permute.xlu0 %4680
  %4682 = vrot.lane.b32.xlu0 %v4449, 32
  %v4683 = vpop.permute.xlu0 %4682
  %4684 = vrot.lane.b32.xlu0 %v4452, 32
  %v4685 = vpop.permute.xlu0 %4684
  %4686 = vrot.lane.b32.xlu0 %v4455, 32
  %v4687 = vpop.permute.xlu0 %4686
  %4688 = vrot.lane.b32.xlu0 %v4458, 32
  %v4689 = vpop.permute.xlu0 %4688
  %4690 = vrot.lane.b32.xlu0 %v4461, 32
  %v4691 = vpop.permute.xlu0 %4690
  %4692 = vrot.lane.b32.xlu0 %v4514, 32
  %v4693 = vpop.permute.xlu0 %4692
  %4694 = vrot.lane.b32.xlu0 %v4467, 32
  %v4695 = vpop.permute.xlu0 %4694
  %4696 = vrot.lane.b32.xlu0 %v4470, 32
  %v4697 = vpop.permute.xlu0 %4696
  %4698 = vrot.lane.b32.xlu0 %v4473, 32
  %v4699 = vpop.permute.xlu0 %4698
  %4700 = vrot.lane.b32.xlu0 %v4476, 32
  %v4701 = vpop.permute.xlu0 %4700
  %4702 = vrot.lane.b32.xlu0 %v4479, 32
  %v4703 = vpop.permute.xlu0 %4702
  %4704 = vrot.lane.b32.xlu0 %v4482, 32
  %v4705 = vpop.permute.xlu0 %4704
  %4706 = vrot.lane.b32.xlu0 %v4485, 32
  %v4707 = vpop.permute.xlu0 %4706
  %4708 = vrot.lane.b32.xlu0 %v4517, 32
  %v4709 = vpop.permute.xlu0 %4708
  %4726 = vrot.lane.b32.xlu0 %v4322, 64
  %v4727 = vpop.permute.xlu0 %4726
  %4728 = vrot.lane.b32.xlu0 %v4324, 64
  %v4729 = vpop.permute.xlu0 %4728
  %4730 = vrot.lane.b32.xlu0 %v4326, 64
  %v4731 = vpop.permute.xlu0 %4730
  %4732 = vrot.lane.b32.xlu0 %v4328, 64
  %v4733 = vpop.permute.xlu0 %4732
  %4734 = vrot.lane.b32.xlu0 %v4330, 64
  %v4735 = vpop.permute.xlu0 %4734
  %4736 = vrot.lane.b32.xlu0 %v4332, 64
  %v4737 = vpop.permute.xlu0 %4736
  %4738 = vrot.lane.b32.xlu0 %v4334, 64
  %v4739 = vpop.permute.xlu0 %4738
  %4740 = vrot.lane.b32.xlu0 %v4336, 64
  %v4741 = vpop.permute.xlu0 %4740
  %4742 = vrot.lane.b32.xlu0 %v4342, 64
  %v4743 = vpop.permute.xlu0 %4742
  %4744 = vrot.lane.b32.xlu0 %v4344, 64
  %v4745 = vpop.permute.xlu0 %4744
  %4746 = vrot.lane.b32.xlu0 %v4346, 64
  %v4747 = vpop.permute.xlu0 %4746
  %4748 = vrot.lane.b32.xlu0 %v4348, 64
  %v4749 = vpop.permute.xlu0 %4748
  %4750 = vrot.lane.b32.xlu0 %v4350, 64
  %v4751 = vpop.permute.xlu0 %4750
  %4752 = vrot.lane.b32.xlu0 %v4352, 64
  %v4753 = vpop.permute.xlu0 %4752
  %4754 = vrot.lane.b32.xlu0 %v4354, 64
  %v4755 = vpop.permute.xlu0 %4754
  %4756 = vrot.lane.b32.xlu0 %v4356, 64
  %v4757 = vpop.permute.xlu0 %4756
  %4774 = vrot.lane.b32.xlu0 %v4398, 96
  %v4775 = vpop.permute.xlu0 %4774
  %4776 = vrot.lane.b32.xlu0 %v4401, 96
  %v4777 = vpop.permute.xlu0 %4776
  %4778 = vrot.lane.b32.xlu0 %v4404, 96
  %v4779 = vpop.permute.xlu0 %4778
  %4780 = vrot.lane.b32.xlu0 %v4407, 96
  %v4781 = vpop.permute.xlu0 %4780
  %4782 = vrot.lane.b32.xlu0 %v4410, 96
  %v4783 = vpop.permute.xlu0 %4782
  %4784 = vrot.lane.b32.xlu0 %v4413, 96
  %v4785 = vpop.permute.xlu0 %4784
  %4786 = vrot.lane.b32.xlu0 %v4492, 96
  %v4787 = vpop.permute.xlu0 %4786
  %4788 = vrot.lane.b32.xlu0 %v4524, 96
  %v4789 = vpop.permute.xlu0 %4788
  %4790 = vrot.lane.b32.xlu0 %v4422, 96
  %v4791 = vpop.permute.xlu0 %4790
  %4792 = vrot.lane.b32.xlu0 %v4425, 96
  %v4793 = vpop.permute.xlu0 %4792
  %4794 = vrot.lane.b32.xlu0 %v4428, 96
  %v4795 = vpop.permute.xlu0 %4794
  %4796 = vrot.lane.b32.xlu0 %v4431, 96
  %v4797 = vpop.permute.xlu0 %4796
  %4798 = vrot.lane.b32.xlu0 %v4434, 96
  %v4799 = vpop.permute.xlu0 %4798
  %4800 = vrot.lane.b32.xlu0 %v4437, 96
  %v4801 = vpop.permute.xlu0 %4800
  %4802 = vrot.lane.b32.xlu0 %v4495, 96
  %v4803 = vpop.permute.xlu0 %4802
  %4804 = vrot.lane.b32.xlu0 %v4527, 96
  %v4805 = vpop.permute.xlu0 %4804
  %v4822 = vsel %vm68, %v4318, %v4535
  %v4823 = vsel %vm68, %v4320, %v4537
  %v4824 = vsel %vm68, %v4322, %v4539
  %v4825 = vsel %vm68, %v4324, %v4541
  %v4826 = vsel %vm68, %v4326, %v4543
  %v4827 = vsel %vm68, %v4328, %v4545
  %v4828 = vsel %vm68, %v4330, %v4547
  %v4829 = vsel %vm68, %v4332, %v4549
  %v4830 = vsel %vm68, %v4338, %v4551
  %v4831 = vsel %vm68, %v4340, %v4553
  %v4832 = vsel %vm68, %v4342, %v4555
  %v4833 = vsel %vm68, %v4344, %v4557
  %v4834 = vsel %vm68, %v4346, %v4559
  %v4835 = vsel %vm68, %v4348, %v4561
  %v4836 = vsel %vm68, %v4350, %v4563
  %v4837 = vsel %vm68, %v4352, %v4565
  %v4838 = vsel %vm1703, %v4822, %v4583
  %v4839 = vsel %vm1703, %v4823, %v4585
  %v4840 = vsel %vm1703, %v4824, %v4587
  %v4841 = vsel %vm1703, %v4825, %v4589
  %v4842 = vsel %vm1703, %v4826, %v4591
  %v4843 = vsel %vm1703, %v4827, %v4593
  %v4844 = vsel %vm1703, %v4828, %v4595
  %v4845 = vsel %vm1703, %v4829, %v4597
  %v4846 = vsel %vm1703, %v4830, %v4599
  %v4847 = vsel %vm1703, %v4831, %v4601
  %v4848 = vsel %vm1703, %v4832, %v4603
  %v4849 = vsel %vm1703, %v4833, %v4605
  %v4850 = vsel %vm1703, %v4834, %v4607
  %v4851 = vsel %vm1703, %v4835, %v4609
  %v4852 = vsel %vm1703, %v4836, %v4611
  %v4853 = vsel %vm1703, %v4837, %v4613
  %v4854 = vsel %vm1720, %v4838, %v4631
  %v4855 = vsel %vm1720, %v4839, %v4633
  %v4856 = vsel %vm1720, %v4840, %v4635
  %v4857 = vsel %vm1720, %v4841, %v4637
  %v4858 = vsel %vm1720, %v4842, %v4639
  %v4859 = vsel %vm1720, %v4843, %v4641
  %v4860 = vsel %vm1720, %v4844, %v4643
  %v4861 = vsel %vm1720, %v4845, %v4645
  %v4862 = vsel %vm1720, %v4846, %v4647
  %v4863 = vsel %vm1720, %v4847, %v4649
  %v4864 = vsel %vm1720, %v4848, %v4651
  %v4865 = vsel %vm1720, %v4849, %v4653
  %v4866 = vsel %vm1720, %v4850, %v4655
  %v4867 = vsel %vm1720, %v4851, %v4657
  %v4868 = vsel %vm1720, %v4852, %v4659
  %v4869 = vsel %vm1720, %v4853, %v4661
  %v4870 = vsel %vm68, %v4395, %v4679
  %v4871 = vsel %vm68, %v4398, %v4681
  %v4872 = vsel %vm68, %v4401, %v4683
  %v4873 = vsel %vm68, %v4404, %v4685
  %v4874 = vsel %vm68, %v4407, %v4687
  %v4875 = vsel %vm68, %v4410, %v4689
  %v4876 = vsel %vm68, %v4413, %v4691
  %v4877 = vsel %vm68, %v4492, %v4693
  %v4878 = vsel %vm68, %v4419, %v4695
  %v4879 = vsel %vm68, %v4422, %v4697
  %v4880 = vsel %vm68, %v4425, %v4699
  %v4881 = vsel %vm68, %v4428, %v4701
  %v4882 = vsel %vm68, %v4431, %v4703
  %v4883 = vsel %vm68, %v4434, %v4705
  %v4884 = vsel %vm68, %v4437, %v4707
  %v4885 = vsel %vm68, %v4495, %v4709
  %v4886 = vsel %vm1703, %v4870, %v4727
  %v4887 = vsel %vm1703, %v4871, %v4729
  %v4888 = vsel %vm1703, %v4872, %v4731
  %v4889 = vsel %vm1703, %v4873, %v4733
  %v4890 = vsel %vm1703, %v4874, %v4735
  %v4891 = vsel %vm1703, %v4875, %v4737
  %v4892 = vsel %vm1703, %v4876, %v4739
  %v4893 = vsel %vm1703, %v4877, %v4741
  %v4894 = vsel %vm1703, %v4878, %v4743
  %v4895 = vsel %vm1703, %v4879, %v4745
  %v4896 = vsel %vm1703, %v4880, %v4747
  %v4897 = vsel %vm1703, %v4881, %v4749
  %v4898 = vsel %vm1703, %v4882, %v4751
  %v4899 = vsel %vm1703, %v4883, %v4753
  %v4900 = vsel %vm1703, %v4884, %v4755
  %v4901 = vsel %vm1703, %v4885, %v4757
  %v4902 = vsel %vm1720, %v4886, %v4775
  %v4903 = vsel %vm1720, %v4887, %v4777
  %v4904 = vsel %vm1720, %v4888, %v4779
  %v4905 = vsel %vm1720, %v4889, %v4781
  %v4906 = vsel %vm1720, %v4890, %v4783
  %v4907 = vsel %vm1720, %v4891, %v4785
  %v4908 = vsel %vm1720, %v4892, %v4787
  %v4909 = vsel %vm1720, %v4893, %v4789
  %v4910 = vsel %vm1720, %v4894, %v4791
  %v4911 = vsel %vm1720, %v4895, %v4793
  %v4912 = vsel %vm1720, %v4896, %v4795
  %v4913 = vsel %vm1720, %v4897, %v4797
  %v4914 = vsel %vm1720, %v4898, %v4799
  %v4915 = vsel %vm1720, %v4899, %v4801
  %v4916 = vsel %vm1720, %v4900, %v4803
  %v4917 = vsel %vm1720, %v4901, %v4805
  %v4918 = vsel %vm68, %v4446, 0
  %v4920 = vsel %vm68, %v4449, 0
  %v4922 = vsel %vm68, %v4452, 0
  %v4924 = vsel %vm68, %v4455, 0
  %v4926 = vsel %vm68, %v4458, 0
  %v4928 = vsel %vm68, %v4461, 0
  %v4930 = vsel %vm68, %v4514, 0
  %v4932 = vsel %vm68, %v4530, 0
  %v4934 = vsel %vm68, %v4470, 0
  %v4936 = vsel %vm68, %v4473, 0
  %v4938 = vsel %vm68, %v4476, 0
  %v4940 = vsel %vm68, %v4479, 0
  %v4942 = vsel %vm68, %v4482, 0
  %v4944 = vsel %vm68, %v4485, 0
  %v4946 = vsel %vm68, %v4517, 0
  %v4948 = vsel %vm68, %v4533, 0
  %4950 = vmatprep.subr.mxu0 0.0
  %4951 = vmatpush1.msra.mxu0 %v4293
  %4952 = vmatprep.subr.mxu0 0.0
  %4953 = vmatpush1.msra.mxu0 %v4292
  %4954 = vmatprep.subr.mxu0 0.0
  %4955 = vmatpush1.msra.mxu0 %v4291
  %4956 = vmatprep.subr.mxu0 0.0
  %4957 = vmatpush1.msra.mxu0 %v4290
  %4958 = vmatprep.subr.mxu0 0.0
  %4959 = vmatpush1.msra.mxu0 %v4289
  %4960 = vmatprep.subr.mxu0 0.0
  %4961 = vmatpush1.msra.mxu0 %v4288
  %4962 = vmatprep.subr.mxu0 0.0
  %4963 = vmatpush1.msra.mxu0 %v4287
  %4964 = vmatprep.subr.mxu0 0.0
  %4965 = vmatpush1.msra.mxu0 %v4286
  %4966 = vmatprep.subr.mxu0 0.0
  %4967 = vmatpush1.msra.mxu0 %v4285
  %4968 = vmatprep.subr.mxu0 0.0
  %4969 = vmatpush1.msra.mxu0 %v4284
  %4970 = vmatprep.subr.mxu0 0.0
  %4971 = vmatpush1.msra.mxu0 %v4283
  %4972 = vmatprep.subr.mxu0 0.0
  %4973 = vmatpush1.msra.mxu0 %v4282
  %4974 = vmatprep.subr.mxu0 0.0
  %4975 = vmatpush1.msra.mxu0 %v4281
  %4976 = vmatprep.subr.mxu0 0.0
  %4977 = vmatpush1.msra.mxu0 %v4280
  %4978 = vmatprep.subr.mxu0 0.0
  %4979 = vmatpush1.msra.mxu0 %v4279
  %4980 = vmatprep.subr.mxu0 0.0
  %4981 = vmatpush1.msra.mxu0 %v4278
  %4982 = vmatprep.subr.mxu0 0.0
  %4983 = vmatpush2.msra.mxu0 %v4309
  %4984 = vmatprep.subr.mxu0 0.0
  %4985 = vmatpush2.msra.mxu0 %v4308
  %4986 = vmatprep.subr.mxu0 0.0
  %4987 = vmatpush2.msra.mxu0 %v4307
  %4988 = vmatprep.subr.mxu0 0.0
  %4989 = vmatpush2.msra.mxu0 %v4306
  %4990 = vmatprep.subr.mxu0 0.0
  %4991 = vmatpush2.msra.mxu0 %v4305
  %4992 = vmatprep.subr.mxu0 0.0
  %4993 = vmatpush2.msra.mxu0 %v4304
  %4994 = vmatprep.subr.mxu0 0.0
  %4995 = vmatpush2.msra.mxu0 %v4303
  %4996 = vmatprep.subr.mxu0 0.0
  %4997 = vmatpush2.msra.mxu0 %v4302
  %4998 = vmatprep.subr.mxu0 0.0
  %4999 = vmatpush2.msra.mxu0 %v4301
  %5000 = vmatprep.subr.mxu0 0.0
  %5001 = vmatpush2.msra.mxu0 %v4300
  %5002 = vmatprep.subr.mxu0 0.0
  %5003 = vmatpush2.msra.mxu0 %v4299
  %5004 = vmatprep.subr.mxu0 0.0
  %5005 = vmatpush2.msra.mxu0 %v4298
  %5006 = vmatprep.subr.mxu0 0.0
  %5007 = vmatpush2.msra.mxu0 %v4297
  %5008 = vmatprep.subr.mxu0 0.0
  %5009 = vmatpush2.msra.mxu0 %v4296
  %5010 = vmatprep.subr.mxu0 0.0
  %5011 = vmatpush2.msra.mxu0 %v4295
  %5012 = vmatprep.subr.mxu0 0.0
  %5013 = vmatpush2.msra.mxu0 %v4294
  %5014 = vmatprep.mubr.f32.mxu0 %v4902
  %5015 = vmatmul.mubr.f32.gmra.mxu0 %v4854
  %v5016 = vpop.f32.mrf.mxu0
  %v5017 = vadd.f32 0.0, %v5016
  %v5018 = vpop.f32.mrf.mxu0
  %5019 = vmatprep.mubr.f32.mxu0 %v4903
  %5020 = vmatmul.mubr.f32.gmra.mxu0 %v4855
  %v5021 = vpop.f32.mrf.mxu0
  %v5022 = vadd.f32 0.0, %v5021
  %v5023 = vpop.f32.mrf.mxu0
  %5024 = vmatprep.mubr.f32.mxu0 %v4904
  %5025 = vmatmul.mubr.f32.gmra.mxu0 %v4856
  %v5026 = vpop.f32.mrf.mxu0
  %v5027 = vadd.f32 0.0, %v5026
  %v5028 = vpop.f32.mrf.mxu0
  %5029 = vmatprep.mubr.f32.mxu0 %v4905
  %5030 = vmatmul.mubr.f32.gmra.mxu0 %v4857
  %v5031 = vpop.f32.mrf.mxu0
  %v5032 = vadd.f32 0.0, %v5031
  %v5033 = vpop.f32.mrf.mxu0
  %5034 = vmatprep.mubr.f32.mxu0 %v4906
  %5035 = vmatmul.mubr.f32.gmra.mxu0 %v4858
  %v5036 = vpop.f32.mrf.mxu0
  %v5037 = vadd.f32 0.0, %v5036
  %v5038 = vpop.f32.mrf.mxu0
  %5039 = vmatprep.mubr.f32.mxu0 %v4907
  %5040 = vmatmul.mubr.f32.gmra.mxu0 %v4859
  %v5041 = vpop.f32.mrf.mxu0
  %v5042 = vadd.f32 0.0, %v5041
  %v5043 = vpop.f32.mrf.mxu0
  %5044 = vmatprep.mubr.f32.mxu0 %v4908
  %5045 = vmatmul.mubr.f32.gmra.mxu0 %v4860
  %v5046 = vpop.f32.mrf.mxu0
  %v5047 = vadd.f32 0.0, %v5046
  %v5048 = vpop.f32.mrf.mxu0
  %5049 = vmatprep.mubr.f32.mxu0 %v4909
  %5050 = vmatmul.mubr.f32.gmra.mxu0 %v4861
  %v5051 = vpop.f32.mrf.mxu0
  %v5052 = vadd.f32 0.0, %v5051
  %v5053 = vpop.f32.mrf.mxu0
  %5054 = vmatprep.mubr.f32.mxu0 %v4910
  %5055 = vmatmul.mubr.f32.gmra.mxu0 %v4862
  %v5056 = vpop.f32.mrf.mxu0
  %v5057 = vadd.f32 0.0, %v5056
  %v5058 = vpop.f32.mrf.mxu0
  %5059 = vmatprep.mubr.f32.mxu0 %v4911
  %5060 = vmatmul.mubr.f32.gmra.mxu0 %v4863
  %v5061 = vpop.f32.mrf.mxu0
  %v5062 = vadd.f32 0.0, %v5061
  %v5063 = vpop.f32.mrf.mxu0
  %5064 = vmatprep.mubr.f32.mxu0 %v4912
  %5065 = vmatmul.mubr.f32.gmra.mxu0 %v4864
  %v5066 = vpop.f32.mrf.mxu0
  %v5067 = vadd.f32 0.0, %v5066
  %v5068 = vpop.f32.mrf.mxu0
  %5069 = vmatprep.mubr.f32.mxu0 %v4913
  %5070 = vmatmul.mubr.f32.gmra.mxu0 %v4865
  %v5071 = vpop.f32.mrf.mxu0
  %v5072 = vadd.f32 0.0, %v5071
  %v5073 = vpop.f32.mrf.mxu0
  %5074 = vmatprep.mubr.f32.mxu0 %v4914
  %5075 = vmatmul.mubr.f32.gmra.mxu0 %v4866
  %v5076 = vpop.f32.mrf.mxu0
  %v5077 = vadd.f32 0.0, %v5076
  %v5078 = vpop.f32.mrf.mxu0
  %5079 = vmatprep.mubr.f32.mxu0 %v4915
  %5080 = vmatmul.mubr.f32.gmra.mxu0 %v4867
  %v5081 = vpop.f32.mrf.mxu0
  %v5082 = vadd.f32 0.0, %v5081
  %v5083 = vpop.f32.mrf.mxu0
  %5084 = vmatprep.mubr.f32.mxu0 %v4916
  %5085 = vmatmul.mubr.f32.gmra.mxu0 %v4868
  %v5086 = vpop.f32.mrf.mxu0
  %v5087 = vadd.f32 0.0, %v5086
  %v5088 = vpop.f32.mrf.mxu0
  %5089 = vmatprep.mubr.f32.mxu0 %v4917
  %5090 = vmatmul.mubr.f32.gmra.mxu0 %v4869
  %v5091 = vpop.f32.mrf.mxu0
  %v5092 = vadd.f32 0.0, %v5091
  %v5093 = vpop.f32.mrf.mxu0
  %5094 = vdwg.mxu0
  %5095 = vmatprep.subr.mxu0 0.0
  %5096 = vmatpush1.msra.mxu0 0.0
  %5097 = vmatprep.subr.mxu0 0.0
  %5098 = vmatpush1.msra.mxu0 0.0
  %5099 = vmatprep.subr.mxu0 0.0
  %5100 = vmatpush1.msra.mxu0 0.0
  %5101 = vmatprep.subr.mxu0 0.0
  %5102 = vmatpush1.msra.mxu0 0.0
  %5103 = vmatprep.subr.mxu0 0.0
  %5104 = vmatpush1.msra.mxu0 0.0
  %5105 = vmatprep.subr.mxu0 0.0
  %5106 = vmatpush1.msra.mxu0 0.0
  %5107 = vmatprep.subr.mxu0 0.0
  %5108 = vmatpush1.msra.mxu0 0.0
  %5109 = vmatprep.subr.mxu0 0.0
  %5110 = vmatpush1.msra.mxu0 0.0
  %5111 = vmatprep.subr.mxu0 0.0
  %5112 = vmatpush1.msra.mxu0 0.0
  %5113 = vmatprep.subr.mxu0 0.0
  %5114 = vmatpush1.msra.mxu0 0.0
  %5115 = vmatprep.subr.mxu0 0.0
  %5116 = vmatpush1.msra.mxu0 0.0
  %5117 = vmatprep.subr.mxu0 0.0
  %5118 = vmatpush1.msra.mxu0 0.0
  %5119 = vmatprep.subr.mxu0 0.0
  %5120 = vmatpush1.msra.mxu0 %v4313
  %5121 = vmatprep.subr.mxu0 0.0
  %5122 = vmatpush1.msra.mxu0 %v4312
  %5123 = vmatprep.subr.mxu0 0.0
  %5124 = vmatpush1.msra.mxu0 %v4311
  %5125 = vmatprep.subr.mxu0 0.0
  %5126 = vmatpush1.msra.mxu0 %v4310
  %5127 = vmatprep.subr.mxu0 0.0
  %5128 = vmatpush2.msra.mxu0 0.0
  %5129 = vmatprep.subr.mxu0 0.0
  %5130 = vmatpush2.msra.mxu0 0.0
  %5131 = vmatprep.subr.mxu0 0.0
  %5132 = vmatpush2.msra.mxu0 0.0
  %5133 = vmatprep.subr.mxu0 0.0
  %5134 = vmatpush2.msra.mxu0 0.0
  %5135 = vmatprep.subr.mxu0 0.0
  %5136 = vmatpush2.msra.mxu0 0.0
  %5137 = vmatprep.subr.mxu0 0.0
  %5138 = vmatpush2.msra.mxu0 0.0
  %5139 = vmatprep.subr.mxu0 0.0
  %5140 = vmatpush2.msra.mxu0 0.0
  %5141 = vmatprep.subr.mxu0 0.0
  %5142 = vmatpush2.msra.mxu0 0.0
  %5143 = vmatprep.subr.mxu0 0.0
  %5144 = vmatpush2.msra.mxu0 0.0
  %5145 = vmatprep.subr.mxu0 0.0
  %5146 = vmatpush2.msra.mxu0 0.0
  %5147 = vmatprep.subr.mxu0 0.0
  %5148 = vmatpush2.msra.mxu0 0.0
  %5149 = vmatprep.subr.mxu0 0.0
  %5150 = vmatpush2.msra.mxu0 0.0
  %5151 = vmatprep.subr.mxu0 0.0
  %5152 = vmatpush2.msra.mxu0 0.0
  %5153 = vmatprep.subr.mxu0 0.0
  %5154 = vmatpush2.msra.mxu0 0.0
  %5155 = vmatprep.subr.mxu0 0.0
  %5156 = vmatpush2.msra.mxu0 0.0
  %5157 = vmatprep.subr.mxu0 0.0
  %5158 = vmatpush2.msra.mxu0 0.0
  %5159 = vmatprep.mubr.f32.mxu0 0.0
  %5160 = vmatmul.mubr.f32.gmra.mxu0 %v4918
  %v5161 = vpop.f32.mrf.mxu0
  %v5162 = vadd.f32 %v5017, %v5161
  %v5163 = vpop.f32.mrf.mxu0
  %5164 = vmatprep.mubr.f32.mxu0 0.0
  %5165 = vmatmul.mubr.f32.gmra.mxu0 %v4920
  %v5166 = vpop.f32.mrf.mxu0
  %v5167 = vadd.f32 %v5022, %v5166
  %v5168 = vpop.f32.mrf.mxu0
  %5169 = vmatprep.mubr.f32.mxu0 0.0
  %5170 = vmatmul.mubr.f32.gmra.mxu0 %v4922
  %v5171 = vpop.f32.mrf.mxu0
  %v5172 = vadd.f32 %v5027, %v5171
  %v5173 = vpop.f32.mrf.mxu0
  %5174 = vmatprep.mubr.f32.mxu0 0.0
  %5175 = vmatmul.mubr.f32.gmra.mxu0 %v4924
  %v5176 = vpop.f32.mrf.mxu0
  %v5177 = vadd.f32 %v5032, %v5176
  %v5178 = vpop.f32.mrf.mxu0
  %5179 = vmatprep.mubr.f32.mxu0 0.0
  %5180 = vmatmul.mubr.f32.gmra.mxu0 %v4926
  %v5181 = vpop.f32.mrf.mxu0
  %v5182 = vadd.f32 %v5037, %v5181
  %v5183 = vpop.f32.mrf.mxu0
  %5184 = vmatprep.mubr.f32.mxu0 0.0
  %5185 = vmatmul.mubr.f32.gmra.mxu0 %v4928
  %v5186 = vpop.f32.mrf.mxu0
  %v5187 = vadd.f32 %v5042, %v5186
  %v5188 = vpop.f32.mrf.mxu0
  %5189 = vmatprep.mubr.f32.mxu0 0.0
  %5190 = vmatmul.mubr.f32.gmra.mxu0 %v4930
  %v5191 = vpop.f32.mrf.mxu0
  %v5192 = vadd.f32 %v5047, %v5191
  %v5193 = vpop.f32.mrf.mxu0
  %5194 = vmatprep.mubr.f32.mxu0 0.0
  %5195 = vmatmul.mubr.f32.gmra.mxu0 %v4932
  %v5196 = vpop.f32.mrf.mxu0
  %v5197 = vadd.f32 %v5052, %v5196
  %v5198 = vpop.f32.mrf.mxu0
  %5199 = vmatprep.mubr.f32.mxu0 0.0
  %5200 = vmatmul.mubr.f32.gmra.mxu0 %v4934
  %v5201 = vpop.f32.mrf.mxu0
  %v5202 = vadd.f32 %v5057, %v5201
  %v5203 = vpop.f32.mrf.mxu0
  %5204 = vmatprep.mubr.f32.mxu0 0.0
  %5205 = vmatmul.mubr.f32.gmra.mxu0 %v4936
  %v5206 = vpop.f32.mrf.mxu0
  %v5207 = vadd.f32 %v5062, %v5206
  %v5208 = vpop.f32.mrf.mxu0
  %5209 = vmatprep.mubr.f32.mxu0 0.0
  %5210 = vmatmul.mubr.f32.gmra.mxu0 %v4938
  %v5211 = vpop.f32.mrf.mxu0
  %v5212 = vadd.f32 %v5067, %v5211
  %v5213 = vpop.f32.mrf.mxu0
  %5214 = vmatprep.mubr.f32.mxu0 0.0
  %5215 = vmatmul.mubr.f32.gmra.mxu0 %v4940
  %v5216 = vpop.f32.mrf.mxu0
  %v5217 = vadd.f32 %v5072, %v5216
  %v5218 = vpop.f32.mrf.mxu0
  %5219 = vmatprep.mubr.f32.mxu0 0.0
  %5220 = vmatmul.mubr.f32.gmra.mxu0 %v4942
  %v5221 = vpop.f32.mrf.mxu0
  %v5222 = vadd.f32 %v5077, %v5221
  %v5223 = vpop.f32.mrf.mxu0
  %5224 = vmatprep.mubr.f32.mxu0 0.0
  %5225 = vmatmul.mubr.f32.gmra.mxu0 %v4944
  %v5226 = vpop.f32.mrf.mxu0
  %v5227 = vadd.f32 %v5082, %v5226
  %v5228 = vpop.f32.mrf.mxu0
  %5229 = vmatprep.mubr.f32.mxu0 0.0
  %5230 = vmatmul.mubr.f32.gmra.mxu0 %v4946
  %v5231 = vpop.f32.mrf.mxu0
  %v5232 = vadd.f32 %v5087, %v5231
  %v5233 = vpop.f32.mrf.mxu0
  %5234 = vmatprep.mubr.f32.mxu0 0.0
  %5235 = vmatmul.mubr.f32.gmra.mxu0 %v4948
  %v5236 = vpop.f32.mrf.mxu0
  %v5237 = vadd.f32 %v5092, %v5236
  %v5238 = vpop.f32.mrf.mxu0
  %5239 = vdwg.mxu0
  %v5241 = vlaneseq
  %v5242 = vshrl.u32 %v5241, 7
  %v5243 = vsub.s32 0, %v5242
  %v5244 = vrot.slane %v4315, %v5243
  %v5246 = vmul.f32 %v5162, %v5244
  %v5247 = vmul.f32 %v5167, %v5244
  %v5248 = vmul.f32 %v5172, %v5244
  %v5249 = vmul.f32 %v5177, %v5244
  %v5250 = vmul.f32 %v5182, %v5244
  %v5251 = vmul.f32 %v5187, %v5244
  %v5252 = vmul.f32 %v5192, %v5244
  %v5253 = vmul.f32 %v5197, %v5244
  %v5254 = vmul.f32 %v5202, %v5244
  %v5255 = vmul.f32 %v5207, %v5244
  %v5256 = vmul.f32 %v5212, %v5244
  %v5257 = vmul.f32 %v5217, %v5244
  %v5258 = vmul.f32 %v5222, %v5244
  %v5259 = vmul.f32 %v5227, %v5244
  %v5260 = vmul.f32 %v5232, %v5244
  %v5261 = vmul.f32 %v5237, %v5244
  %v5263 = vlaneseq
  %v5264 = vshrl.u32 %v5263, 7
  %v5265 = vsub.s32 0, %v5264
  %v5266 = vrot.slane %v4317, %v5265
  %v5268 = vadd.f32 %v5246, %v5266
  %v5269 = vadd.f32 %v5247, %v5266
  %v5270 = vadd.f32 %v5248, %v5266
  %v5271 = vadd.f32 %v5249, %v5266
  %v5272 = vadd.f32 %v5250, %v5266
  %v5273 = vadd.f32 %v5251, %v5266
  %v5274 = vadd.f32 %v5252, %v5266
  %v5275 = vadd.f32 %v5253, %v5266
  %v5276 = vadd.f32 %v5254, %v5266
  %v5277 = vadd.f32 %v5255, %v5266
  %v5278 = vadd.f32 %v5256, %v5266
  %v5279 = vadd.f32 %v5257, %v5266
  %v5280 = vadd.f32 %v5258, %v5266
  %v5281 = vadd.f32 %v5259, %v5266
  %v5282 = vadd.f32 %v5260, %v5266
  %v5283 = vadd.f32 %v5261, %v5266
  %v5284 = vadd.f32 %v5268, %v3206
  %v5285 = vadd.f32 %v5269, %v3207
  %v5286 = vadd.f32 %v5270, %v3208
  %v5287 = vadd.f32 %v5271, %v3209
  %v5288 = vadd.f32 %v5272, %v3210
  %v5289 = vadd.f32 %v5273, %v3211
  %v5290 = vadd.f32 %v5274, %v3212
  %v5291 = vadd.f32 %v5275, %v3213
  %v5292 = vadd.f32 %v5276, %v3214
  %v5293 = vadd.f32 %v5277, %v3215
  %v5294 = vadd.f32 %v5278, %v3216
  %v5295 = vadd.f32 %v5279, %v3217
  %v5296 = vadd.f32 %v5280, %v3218
  %v5297 = vadd.f32 %v5281, %v3219
  %v5298 = vadd.f32 %v5282, %v3220
  %v5299 = vadd.f32 %v5283, %v3221
  %v5300 = vmax.f32 %v5284, 0.0
  %v5301 = vmax.f32 %v5285, 0.0
  %v5302 = vmax.f32 %v5286, 0.0
  %v5303 = vmax.f32 %v5287, 0.0
  %v5304 = vmax.f32 %v5288, 0.0
  %v5305 = vmax.f32 %v5289, 0.0
  %v5306 = vmax.f32 %v5290, 0.0
  %v5307 = vmax.f32 %v5291, 0.0
  %v5308 = vmax.f32 %v5292, 0.0
  %v5309 = vmax.f32 %v5293, 0.0
  %v5310 = vmax.f32 %v5294, 0.0
  %v5311 = vmax.f32 %v5295, 0.0
  %v5312 = vmax.f32 %v5296, 0.0
  %v5313 = vmax.f32 %v5297, 0.0
  %v5314 = vmax.f32 %v5298, 0.0
  %v5315 = vmax.f32 %v5299, 0.0
  %5316 = vst.msk [vmem:[%s7] sm:$0xff] %vm68, %v5300
  %5317 = vst.msk [vmem:[%s7 + $0x8] sm:$0xff] %vm68, %v5301
  %5318 = vst.msk [vmem:[%s7 + $0x10] sm:$0xff] %vm68, %v5302
  %5319 = vst.msk [vmem:[%s7 + $0x18] sm:$0xff] %vm68, %v5303
  %5320 = vst.msk [vmem:[%s7 + $0x20] sm:$0xff] %vm68, %v5304
  %5321 = vst.msk [vmem:[%s7 + $0x28] sm:$0xff] %vm68, %v5305
  %5322 = vst.msk [vmem:[%s7 + $0x30] sm:$0xff] %vm68, %v5306
  %5323 = vst.msk [vmem:[%s7 + $0x38] sm:$0xff] %vm68, %v5307
  %5324 = vst.msk [vmem:[%s7 + $0x40] sm:$0xff] %vm68, %v5308
  %5325 = vst.msk [vmem:[%s7 + $0x48] sm:$0xff] %vm68, %v5309
  %5326 = vst.msk [vmem:[%s7 + $0x50] sm:$0xff] %vm68, %v5310
  %5327 = vst.msk [vmem:[%s7 + $0x58] sm:$0xff] %vm68, %v5311
  %5328 = vst.msk [vmem:[%s7 + $0x60] sm:$0xff] %vm68, %v5312
  %5329 = vst.msk [vmem:[%s7 + $0x68] sm:$0xff] %vm68, %v5313
  %5330 = vst.msk [vmem:[%s7 + $0x70] sm:$0xff] %vm68, %v5314
  %5331 = vst.msk [vmem:[%s7 + $0x78] sm:$0xff] %vm68, %v5315
  // Predicated region
  $region30: #{conv_encoder_forward.2} parent=0 // pred_check
    _
  $region31: #{conv_encoder_forward.2} parent=0 // pred_check_branch
    %5333 = sbr.rel (0) target = $region33
  $region32: #{conv_encoder_forward.2} parent=0 // pred_region
    _
  $region33: #{conv_encoder_forward.2} parent=0 // pred_fallthru
    _
  // Predicated region
  $region34: #{conv_encoder_forward.2} parent=0 // pred_check
    _
  $region35: #{conv_encoder_forward.2} parent=0 // pred_check_branch
    %5335 = sbr.rel (0) target = $region37
  $region36: #{conv_encoder_forward.2} parent=0 // pred_region
    _
  $region37: #{conv_encoder_forward.2} parent=0 // pred_fallthru
    _

</llo_original>
